<compile_context>
chip_gen: v7x
topology: tpu7x:2x2x1
jax: 0.10.0
libtpu: 0.0.40
codegen_flags: <defaults>
</compile_context>

<pallas_src>
import jax
import jax.numpy as jnp
from jax.experimental import pallas as pl
from jax.experimental.pallas import tpu as pltpu

HIDDEN = 600          # logical hidden width (hardcoded in the PyTorch module)
HIDDEN_PAD = 640      # 5 x 128 lanes: full-width vregs / MXU tiles


def _round_up(x, m):
    return ((x + m - 1) // m) * m


def vaecf_kernel(uvec_ref, eps_ref,
                 wq1_ref, bq1_ref,
                 wq2_ref, bq2_ref,
                 wp1_ref, bp1_ref,
                 wg_ref, bg_ref,
                 out_ref):
    # Embedding rows arrive bf16; elementwise math is f32.
    x = uvec_ref[...].astype(jnp.float32)                               # [TB, LP]

    # F.normalize(x, p=2, dim=1, eps=1e-12) == x * rsqrt(max(sum(x^2), 1e-24))
    ssq = jnp.sum(x * x, axis=1, keepdims=True)
    x = x * jax.lax.rsqrt(jnp.maximum(ssq, 1e-24))
    # TODO(synk): nn.Dropout applied as identity (inference/eval semantics).

    # q_layers: Linear(L, 600) -> Tanh -> fused Linear(600, 2L)
    # bf16 MXU operands, f32 accumulation.
    h = jnp.tanh(
        jnp.dot(x.astype(jnp.bfloat16), wq1_ref[...],
                preferred_element_type=jnp.float32) + bq1_ref[...])     # [TB, HP]
    y = jnp.dot(h.astype(jnp.bfloat16), wq2_ref[...],
                preferred_element_type=jnp.float32) + bq2_ref[...]      # [TB, 2*LP]

    LP = eps_ref.shape[1]
    mu = y[:, :LP]          # 128-lane aligned -> free view
    logvar = y[:, LP:]      # 128-lane aligned -> free view

    # reparameterization: z = eps * exp(0.5*logvar) + mu
    z = eps_ref[...] * jnp.exp(0.5 * logvar) + mu                       # [TB, LP]

    # p_layers first stage: Linear(L, 600) -> Tanh
    h2 = jnp.tanh(
        jnp.dot(z.astype(jnp.bfloat16), wp1_ref[...],
                preferred_element_type=jnp.float32) + bp1_ref[...])     # [TB, HP]

    # Decoder output, gathered column only:
    #   picked[b] = <h2[b], wp2[:, item[b]]> + bp2[item[b]]
    # bf16 multiplies (bf16 VALU on v6e/v7x) with f32 accumulation.
    prod = h2.astype(jnp.bfloat16) * wg_ref[...]                        # [TB, HP] bf16
    picked = jnp.sum(prod, axis=1, dtype=jnp.float32)                   # [TB]
    logit = picked[None, :] + bg_ref[...]                               # [1, TB] lane-dense

    # sigmoid via EUP exp + approximate EUP reciprocal (free slot, plenty accurate)
    out_ref[...] = pl.reciprocal(1.0 + jnp.exp(-logit), approx=True)


def vaecf_forward(params, user_indices, item_indices, eps, *, batch_tile=1024):
    """Glue: embedding / decoder-column row-gathers + pallas_call. Returns [B]."""
    L = params["latent"]
    LP = params["latent_pad"]
    HP = params["hidden_pad"]
    B = int(user_indices.shape[0])

    # Gathers stay in XLA glue (HBM row gathers).
    # TODO(synk): move the wp2_t row gather in-kernel (PrefetchScalarGridSpec +
    # per-row DMA into VMEM scratch) if profiles show the gather round-trip
    # through HBM dominating.
    user_vec = jnp.take(params["user_emb"], user_indices, axis=0)       # [B, LP] bf16
    w_g = jnp.take(params["wp2_t"], item_indices, axis=0)               # [B, HP] bf16
    b_g = jnp.take(params["bp2"], item_indices, axis=0)                 # [B]     f32

    # TODO(synk): eps is kept as a kernel input (drawn by the caller) so the
    # pure-JAX reference can verify the forward exactly; in production switch
    # to in-kernel pltpu.prng_seed/stateful_normal to drop this HBM stream.
    eps_p = jnp.zeros((B, LP), jnp.float32).at[:, :L].set(eps.astype(jnp.float32))

    # Batch tile: big enough to amortize the per-grid-step overhead, small
    # enough that the grid has >= ~4 steps (so both v7x TensorCores get work
    # and BlockSpec double-buffering has something to overlap).
    TB = min(_round_up(batch_tile, 128),
             max(128, _round_up(max(B // 4, 1), 128)))
    n_tiles = pl.cdiv(B, TB)
    B_pad = n_tiles * TB

    if B_pad != B:
        # Zero-pad the ragged tile: padded rows stay finite (norm of a zero row
        # is clamped, z = mu, picked = 0) and are sliced away below.
        pad = B_pad - B
        user_vec = jnp.pad(user_vec, ((0, pad), (0, 0)))
        eps_p = jnp.pad(eps_p, ((0, pad), (0, 0)))
        w_g = jnp.pad(w_g, ((0, pad), (0, 0)))
        b_g = jnp.pad(b_g, ((0, pad),))
    b_g = b_g.reshape(1, B_pad)

    def row(shape):          # batch-tiled operands
        return pl.BlockSpec(shape, lambda i: (i, 0))

    def rep(shape):          # weights: constant index_map -> DMA only at step 0
        return pl.BlockSpec(shape, lambda i: (0, 0))

    lane_spec = pl.BlockSpec((1, TB), lambda i: (0, i))   # lane-dense per-row scalars

    cp_kwargs = dict(dimension_semantics=("parallel",))   # shard batch tiles across TCs
    if TB >= 512:
        # Large tiles exceed v5e's 16 MiB default scoped VMEM; stay <= 48 MiB
        # so we also fit v7x's 64 MiB physical VMEM.
        cp_kwargs["vmem_limit_bytes"] = 48 * 1024 * 1024

    out = pl.pallas_call(
        vaecf_kernel,
        out_shape=jax.ShapeDtypeStruct((1, B_pad), jnp.float32),
        grid=(n_tiles,),
        in_specs=[
            row((TB, LP)),            # user_vec (bf16)
            row((TB, LP)),            # eps (f32, latent zero-padded to LP)
            rep((LP, HP)),            # wq1 (bf16)
            rep((1, HP)),             # bq1
            rep((HP, 2 * LP)),        # wq2 fused mu|logvar, lane-aligned (bf16)
            rep((1, 2 * LP)),         # bq2
            rep((LP, HP)),            # wp1 (bf16)
            rep((1, HP)),             # bp1
            row((TB, HP)),            # gathered wp2 rows (bf16)
            lane_spec,                # gathered bp2 entries, lane-dense
        ],
        out_specs=lane_spec,
        compiler_params=pltpu.CompilerParams(**cp_kwargs),
    )(user_vec, eps_p,
      params["wq1"], params["bq1"],
      params["wq2"], params["bq2"],
      params["wp1"], params["bp1"],
      w_g, b_g)
    return out[0, :B]


def init_params(key, num_users, num_items, latent):
    """Deterministic synthetic init mirroring the module's parameter shapes.

    Linear weights are stored [in, out] (transpose of nn.Linear), lane-padded
    (latent -> LP = round_up(latent, 128), hidden 600 -> 640) with zero pads so
    results match the unpadded math exactly. Matmul weights + embeddings are
    bf16; biases f32. Xavier-normal weights, bias ~ N(0, 0.001), emb ~ N(0, 1).
    """
    LP = _round_up(latent, 128)
    HP = HIDDEN_PAD
    ks = jax.random.split(key, 9)

    def xavier(k, fan_in, fan_out):
        std = (2.0 / (fan_in + fan_out)) ** 0.5
        return std * jax.random.normal(k, (fan_in, fan_out), jnp.float32)

    def bias(k, n):
        return 0.001 * jax.random.normal(k, (n,), jnp.float32)

    def pad2(a, rows, cols):
        out = jnp.zeros((rows, cols), a.dtype)
        return out.at[:a.shape[0], :a.shape[1]].set(a)

    wq1 = xavier(ks[0], latent, HIDDEN)              # [L, 600]
    bq1 = bias(ks[1], HIDDEN)
    wq2 = xavier(ks[2], HIDDEN, 2 * latent)          # [600, 2L]
    bq2 = bias(ks[3], 2 * latent)
    wp1 = xavier(ks[4], latent, HIDDEN)
    bp1 = bias(ks[5], HIDDEN)
    wp2 = xavier(ks[6], HIDDEN, num_items)           # [600, N]
    bp2 = bias(ks[7], num_items)
    user_emb = jax.random.normal(ks[8], (num_users, latent), jnp.float32)

    # Fused, lane-aligned mu|logvar projection: cols [0:L] = mu, [LP:LP+L] = logvar.
    wq2_f = jnp.zeros((HP, 2 * LP), jnp.float32)
    wq2_f = wq2_f.at[:HIDDEN, :latent].set(wq2[:, :latent])
    wq2_f = wq2_f.at[:HIDDEN, LP:LP + latent].set(wq2[:, latent:])
    bq2_f = jnp.zeros((1, 2 * LP), jnp.float32)
    bq2_f = bq2_f.at[0, :latent].set(bq2[:latent])
    bq2_f = bq2_f.at[0, LP:LP + latent].set(bq2[latent:])

    return {
        "latent": latent, "latent_pad": LP, "hidden_pad": HP,
        "wq1": pad2(wq1, LP, HP).astype(jnp.bfloat16),
        "bq1": pad2(bq1.reshape(1, -1), 1, HP),
        "wq2": wq2_f.astype(jnp.bfloat16),
        "bq2": bq2_f,
        "wp1": pad2(wp1, LP, HP).astype(jnp.bfloat16),
        "bp1": pad2(bp1.reshape(1, -1), 1, HP),
        "wp2_t": pad2(wp2.T, num_items, HP).astype(jnp.bfloat16),   # [N, HP]
        "bp2": bp2,
        "user_emb": pad2(user_emb, num_users, LP).astype(jnp.bfloat16),
    }


def reference_forward(params, user_indices, item_indices, eps):
    """Pure-JAX reference (full decoder scores + gather, faithful to PyTorch).

    Uses the same (zero-padded, bf16-quantized) parameters as the kernel so
    only the kernel's bf16 decoder row-dot / approx sigmoid differ numerically.
    """
    L, LP = params["latent"], params["latent_pad"]
    x = jnp.take(params["user_emb"], user_indices, axis=0).astype(jnp.float32)
    x = x * jax.lax.rsqrt(jnp.maximum(jnp.sum(x * x, axis=1, keepdims=True), 1e-24))
    h = jnp.tanh(jnp.dot(x.astype(jnp.bfloat16), params["wq1"],
                         preferred_element_type=jnp.float32) + params["bq1"])
    y = jnp.dot(h.astype(jnp.bfloat16), params["wq2"],
                preferred_element_type=jnp.float32) + params["bq2"]
    mu, logvar = y[:, :LP], y[:, LP:]
    eps_p = jnp.zeros((eps.shape[0], LP), jnp.float32).at[:, :L].set(eps)
    z = eps_p * jnp.exp(0.5 * logvar) + mu
    h2 = jnp.tanh(jnp.dot(z.astype(jnp.bfloat16), params["wp1"],
                          preferred_element_type=jnp.float32) + params["bp1"])
    scores = jnp.dot(h2, params["wp2_t"].astype(jnp.float32).T) + params["bp2"][None, :]
    picked = jnp.take_along_axis(scores, item_indices[:, None], axis=1)[:, 0]
    return jax.nn.sigmoid(picked)


if __name__ == "__main__":
    # Small but representative: latent=200 (realistic, pads to 256), B=300 so
    # the kernel runs a multi-tile grid (TB=128 -> 3 tiles) with a padded
    # ragged last tile.
    num_users, num_items, latent, batch = 64, 512, 200, 300

    key = jax.random.PRNGKey(0)
    k_params, k_users, k_items, k_eps = jax.random.split(key, 4)

    params = init_params(k_params, num_users, num_items, latent)
    user_indices = jax.random.randint(k_users, (batch,), 0, num_users, jnp.int32)
    item_indices = jax.random.randint(k_items, (batch,), 0, num_items, jnp.int32)
    eps = jax.random.normal(k_eps, (batch, latent), jnp.float32)

    pred = vaecf_forward(params, user_indices, item_indices, eps, batch_tile=1024)
    pred = jax.block_until_ready(pred)

    ref = reference_forward(params, user_indices, item_indices, eps)
    assert pred.shape == (batch,)
    max_err = float(jnp.max(jnp.abs(pred - ref)))
    assert jnp.allclose(pred, ref, atol=3e-3, rtol=3e-3), (max_err, pred[:8], ref[:8])

    print("KERNEL_OK")
</pallas_src>

<mosaic_0001>
module attributes {stable_mosaic.version = 11 : i64} {
  func.func @vaecf_kernel(%arg0: i32, %arg1: memref<128x256xbf16, #tpu.memory_space<vmem>>, %arg2: memref<128x256xf32, #tpu.memory_space<vmem>>, %arg3: memref<256x640xbf16, #tpu.memory_space<vmem>>, %arg4: memref<1x640xf32, #tpu.memory_space<vmem>>, %arg5: memref<640x512xbf16, #tpu.memory_space<vmem>>, %arg6: memref<1x512xf32, #tpu.memory_space<vmem>>, %arg7: memref<256x640xbf16, #tpu.memory_space<vmem>>, %arg8: memref<1x640xf32, #tpu.memory_space<vmem>>, %arg9: memref<128x640xbf16, #tpu.memory_space<vmem>>, %arg10: memref<1x128xf32, #tpu.memory_space<vmem>>, %arg11: memref<1x128xf32, #tpu.memory_space<vmem>>) attributes {dimension_semantics = [#tpu.dimension_semantics<parallel>], iteration_bounds = array<i64: 3>, scalar_prefetch = 0 : i64, scratch_operands = 0 : i64, tpu.core_type = #tpu.core_type<tc>, window_params = [{transform_indices = @transform_0, window_bounds = array<i64: 128, 256>}, {transform_indices = @transform_1, window_bounds = array<i64: 128, 256>}, {pipeline_mode = #tpu.pipeline_mode<synchronous>, transform_indices = @transform_2, window_bounds = array<i64: 256, 640>}, {pipeline_mode = #tpu.pipeline_mode<synchronous>, transform_indices = @transform_3, window_bounds = array<i64: 1, 640>}, {pipeline_mode = #tpu.pipeline_mode<synchronous>, transform_indices = @transform_4, window_bounds = array<i64: 640, 512>}, {pipeline_mode = #tpu.pipeline_mode<synchronous>, transform_indices = @transform_5, window_bounds = array<i64: 1, 512>}, {pipeline_mode = #tpu.pipeline_mode<synchronous>, transform_indices = @transform_6, window_bounds = array<i64: 256, 640>}, {pipeline_mode = #tpu.pipeline_mode<synchronous>, transform_indices = @transform_7, window_bounds = array<i64: 1, 640>}, {transform_indices = @transform_8, window_bounds = array<i64: 128, 640>}, {transform_indices = @transform_9, window_bounds = array<i64: 1, 128>}, {transform_indices = @transform_10, window_bounds = array<i64: 1, 128>}]} {
    %c0 = arith.constant 0 : index
    %c0_0 = arith.constant 0 : index
    %0 = vector.load %arg1[%c0, %c0_0] : memref<128x256xbf16, #tpu.memory_space<vmem>>, vector<128x256xbf16>
    %1 = arith.extf %0 : vector<128x256xbf16> to vector<128x256xf32>
    %2 = arith.mulf %1, %1 : vector<128x256xf32>
    %cst = arith.constant dense<0.000000e+00> : vector<128xf32>
    %3 = vector.multi_reduction <add>, %2, %cst [1] : vector<128x256xf32> to vector<128xf32>
    %4 = vector.shape_cast %3 : vector<128xf32> to vector<128x1xf32>
    %cst_1 = arith.constant 1.000000e-24 : f32
    %5 = vector.broadcast %cst_1 : f32 to vector<128x1xf32>
    %6 = arith.maximumf %4, %5 : vector<128x1xf32>
    %7 = math.rsqrt %6 : vector<128x1xf32>
    %8 = vector.broadcast %7 : vector<128x1xf32> to vector<128x256xf32>
    %9 = arith.mulf %1, %8 : vector<128x256xf32>
    %10 = arith.truncf %9 : vector<128x256xf32> to vector<128x256xbf16>
    %c0_2 = arith.constant 0 : index
    %c0_3 = arith.constant 0 : index
    %11 = vector.load %arg3[%c0_2, %c0_3] : memref<256x640xbf16, #tpu.memory_space<vmem>>, vector<256x640xbf16>
    %cst_4 = arith.constant dense<0.000000e+00> : vector<128x640xf32>
    %12 = tpu.matmul %10, %11, %cst_4 {dimension_numbers = #tpu.dot_dimension_numbers<[1], [0], [0], [1], [0, 0, 1, 1], [], []>} : vector<128x256xbf16>, vector<256x640xbf16>, vector<128x640xf32> -> vector<128x640xf32>
    %c0_5 = arith.constant 0 : index
    %c0_6 = arith.constant 0 : index
    %13 = vector.load %arg4[%c0_5, %c0_6] : memref<1x640xf32, #tpu.memory_space<vmem>>, vector<1x640xf32>
    %14 = vector.broadcast %13 : vector<1x640xf32> to vector<128x640xf32>
    %15 = arith.addf %12, %14 : vector<128x640xf32>
    %16 = math.tanh %15 : vector<128x640xf32>
    %17 = arith.truncf %16 : vector<128x640xf32> to vector<128x640xbf16>
    %c0_7 = arith.constant 0 : index
    %c0_8 = arith.constant 0 : index
    %18 = vector.load %arg5[%c0_7, %c0_8] : memref<640x512xbf16, #tpu.memory_space<vmem>>, vector<640x512xbf16>
    %cst_9 = arith.constant dense<0.000000e+00> : vector<128x512xf32>
    %19 = tpu.matmul %17, %18, %cst_9 {dimension_numbers = #tpu.dot_dimension_numbers<[1], [0], [0], [1], [0, 0, 1, 1], [], []>} : vector<128x640xbf16>, vector<640x512xbf16>, vector<128x512xf32> -> vector<128x512xf32>
    %c0_10 = arith.constant 0 : index
    %c0_11 = arith.constant 0 : index
    %20 = vector.load %arg6[%c0_10, %c0_11] : memref<1x512xf32, #tpu.memory_space<vmem>>, vector<1x512xf32>
    %21 = vector.broadcast %20 : vector<1x512xf32> to vector<128x512xf32>
    %22 = arith.addf %19, %21 : vector<128x512xf32>
    %23 = vector.extract_strided_slice %22 {offsets = [0, 0], sizes = [128, 256], strides = [1, 1]} : vector<128x512xf32> to vector<128x256xf32>
    %24 = vector.extract_strided_slice %22 {offsets = [0, 256], sizes = [128, 256], strides = [1, 1]} : vector<128x512xf32> to vector<128x256xf32>
    %c0_12 = arith.constant 0 : index
    %c0_13 = arith.constant 0 : index
    %25 = vector.load %arg2[%c0_12, %c0_13] : memref<128x256xf32, #tpu.memory_space<vmem>>, vector<128x256xf32>
    %cst_14 = arith.constant 5.000000e-01 : f32
    %26 = vector.broadcast %cst_14 : f32 to vector<128x256xf32>
    %27 = arith.mulf %26, %24 : vector<128x256xf32>
    %28 = math.exp %27 : vector<128x256xf32>
    %29 = arith.mulf %25, %28 : vector<128x256xf32>
    %30 = arith.addf %29, %23 : vector<128x256xf32>
    %31 = arith.truncf %30 : vector<128x256xf32> to vector<128x256xbf16>
    %c0_15 = arith.constant 0 : index
    %c0_16 = arith.constant 0 : index
    %32 = vector.load %arg7[%c0_15, %c0_16] : memref<256x640xbf16, #tpu.memory_space<vmem>>, vector<256x640xbf16>
    %cst_17 = arith.constant dense<0.000000e+00> : vector<128x640xf32>
    %33 = tpu.matmul %31, %32, %cst_17 {dimension_numbers = #tpu.dot_dimension_numbers<[1], [0], [0], [1], [0, 0, 1, 1], [], []>} : vector<128x256xbf16>, vector<256x640xbf16>, vector<128x640xf32> -> vector<128x640xf32>
    %c0_18 = arith.constant 0 : index
    %c0_19 = arith.constant 0 : index
    %34 = vector.load %arg8[%c0_18, %c0_19] : memref<1x640xf32, #tpu.memory_space<vmem>>, vector<1x640xf32>
    %35 = vector.broadcast %34 : vector<1x640xf32> to vector<128x640xf32>
    %36 = arith.addf %33, %35 : vector<128x640xf32>
    %37 = math.tanh %36 : vector<128x640xf32>
    %38 = arith.truncf %37 : vector<128x640xf32> to vector<128x640xbf16>
    %c0_20 = arith.constant 0 : index
    %c0_21 = arith.constant 0 : index
    %39 = vector.load %arg9[%c0_20, %c0_21] : memref<128x640xbf16, #tpu.memory_space<vmem>>, vector<128x640xbf16>
    %40 = arith.mulf %38, %39 : vector<128x640xbf16>
    %41 = arith.extf %40 : vector<128x640xbf16> to vector<128x640xf32>
    %cst_22 = arith.constant dense<0.000000e+00> : vector<128xf32>
    %42 = vector.multi_reduction <add>, %41, %cst_22 [1] : vector<128x640xf32> to vector<128xf32>
    %43 = vector.shape_cast %42 : vector<128xf32> to vector<1x128xf32>
    %c0_23 = arith.constant 0 : index
    %c0_24 = arith.constant 0 : index
    %44 = vector.load %arg10[%c0_23, %c0_24] : memref<1x128xf32, #tpu.memory_space<vmem>>, vector<1x128xf32>
    %45 = arith.addf %43, %44 : vector<1x128xf32>
    %cst_25 = arith.constant 0.000000e+00 : f32
    %46 = vector.broadcast %cst_25 : f32 to vector<1x128xf32>
    %47 = arith.subf %46, %45 : vector<1x128xf32>
    %48 = math.exp %47 : vector<1x128xf32>
    %cst_26 = arith.constant 1.000000e+00 : f32
    %49 = vector.broadcast %cst_26 : f32 to vector<1x128xf32>
    %50 = arith.addf %49, %48 : vector<1x128xf32>
    %51 = tpu.reciprocal %50 {approx = true} : vector<1x128xf32> -> vector<1x128xf32>
    %c0_27 = arith.constant 0 : index
    %c0_28 = arith.constant 0 : index
    %52 = vector.load %arg11[%c0_27, %c0_28] : memref<1x128xf32, #tpu.memory_space<vmem>>, vector<1x128xf32>
    tpu.vector_store %arg11[%c0_27, %c0_28], %51 {strides = array<i32>} : memref<1x128xf32, #tpu.memory_space<vmem>>, vector<1x128xf32>,
    return
  }
  func.func @transform_0(%arg0: i32) -> (i32, i32) {
    %c0_i32 = arith.constant 0 : i32
    %c0_i32_0 = arith.constant 0 : i32
    return %arg0, %c0_i32 : i32, i32
  }
  func.func @transform_1(%arg0: i32) -> (i32, i32) {
    %c0_i32 = arith.constant 0 : i32
    %c0_i32_0 = arith.constant 0 : i32
    return %arg0, %c0_i32 : i32, i32
  }
  func.func @transform_2(%arg0: i32) -> (i32, i32) {
    %c0_i32 = arith.constant 0 : i32
    %c0_i32_0 = arith.constant 0 : i32
    %c0_i32_1 = arith.constant 0 : i32
    return %c0_i32, %c0_i32_0 : i32, i32
  }
  func.func @transform_3(%arg0: i32) -> (i32, i32) {
    %c0_i32 = arith.constant 0 : i32
    %c0_i32_0 = arith.constant 0 : i32
    %c0_i32_1 = arith.constant 0 : i32
    return %c0_i32, %c0_i32_0 : i32, i32
  }
  func.func @transform_4(%arg0: i32) -> (i32, i32) {
    %c0_i32 = arith.constant 0 : i32
    %c0_i32_0 = arith.constant 0 : i32
    %c0_i32_1 = arith.constant 0 : i32
    return %c0_i32, %c0_i32_0 : i32, i32
  }
  func.func @transform_5(%arg0: i32) -> (i32, i32) {
    %c0_i32 = arith.constant 0 : i32
    %c0_i32_0 = arith.constant 0 : i32
    %c0_i32_1 = arith.constant 0 : i32
    return %c0_i32, %c0_i32_0 : i32, i32
  }
  func.func @transform_6(%arg0: i32) -> (i32, i32) {
    %c0_i32 = arith.constant 0 : i32
    %c0_i32_0 = arith.constant 0 : i32
    %c0_i32_1 = arith.constant 0 : i32
    return %c0_i32, %c0_i32_0 : i32, i32
  }
  func.func @transform_7(%arg0: i32) -> (i32, i32) {
    %c0_i32 = arith.constant 0 : i32
    %c0_i32_0 = arith.constant 0 : i32
    %c0_i32_1 = arith.constant 0 : i32
    return %c0_i32, %c0_i32_0 : i32, i32
  }
  func.func @transform_8(%arg0: i32) -> (i32, i32) {
    %c0_i32 = arith.constant 0 : i32
    %c0_i32_0 = arith.constant 0 : i32
    return %arg0, %c0_i32 : i32, i32
  }
  func.func @transform_9(%arg0: i32) -> (i32, i32) {
    %c0_i32 = arith.constant 0 : i32
    %c0_i32_0 = arith.constant 0 : i32
    return %c0_i32, %arg0 : i32, i32
  }
  func.func @transform_10(%arg0: i32) -> (i32, i32) {
    %c0_i32 = arith.constant 0 : i32
    %c0_i32_0 = arith.constant 0 : i32
    return %c0_i32, %arg0 : i32, i32
  }
}

</mosaic_0001>

<llo_original>
// kernel: tpu_custom_call.1
$region0: #{tpu_custom_call.1}
  #allocation0 [shape = 'u32[]', space=smem, size = 0x4, offset = 0x4, fixed_abs, tag = 'smem constant byte address 0x4 - core index']
  #allocation1 [shape = 'u32[144,128]{1,0:T(1,128)}', space=vmem, size = 0x12000, scoped, tag = 'internal scratch']
  %s0 = inlined_call_operand.hbm [shape: bf16[384,256], index: 0, kind: input, shape index: {}]
  %s1 = inlined_call_operand.hbm [shape: f32[384,256], index: 1, kind: input, shape index: {}]
  %s2 = inlined_call_operand.hbm [shape: bf16[256,640], index: 2, kind: input, shape index: {}]
  %s3 = inlined_call_operand.vmem [shape: f32[1,640], index: 3, kind: input, shape index: {}]
  %s4 = inlined_call_operand.hbm [shape: bf16[640,512], index: 4, kind: input, shape index: {}]
  %s5 = inlined_call_operand.vmem [shape: f32[1,512], index: 5, kind: input, shape index: {}]
  %s6 = inlined_call_operand.hbm [shape: bf16[256,640], index: 6, kind: input, shape index: {}]
  %s7 = inlined_call_operand.vmem [shape: f32[1,640], index: 7, kind: input, shape index: {}]
  %s8 = inlined_call_operand.hbm [shape: bf16[384,640], index: 8, kind: input, shape index: {}]
  %s9 = inlined_call_operand.vmem [shape: f32[1,384], index: 9, kind: input, shape index: {}]
  %s10 = inlined_call_operand.hbm [shape: f32[1,384], index: 10, kind: output, shape index: {}]
  %s11 = sld [smem:[#allocation0]]
  $region97: #{tpu_custom_call.1} parent=0
    _
  %s13 = ssub.s32 1, %s11
  %s14 = scalar_select 0, %s13, %s11
  $region1: #{tpu_custom_call.1} parent=0
    #allocation2 [shape = 'u8[131072]{0}', space=vmem, size = 0x20000, scoped, tag = 'input window, operand 0']
    #allocation3 [shape = 's32[2]{0}', space=sflag, size = 0x8, scoped, tag = 'scoped memory for tpu_custom_call.1']
    #allocation4 [shape = 's32[2]{0}', space=sflag, size = 0x8, scoped, tag = 'scoped memory for tpu_custom_call.1']
    #allocation5 [shape = 'u8[262144]{0}', space=vmem, size = 0x40000, scoped, tag = 'input window, operand 1']
    #allocation6 [shape = 's32[2]{0}', space=sflag, size = 0x8, scoped, tag = 'scoped memory for tpu_custom_call.1']
    #allocation7 [shape = 'u8[327680]{0}', space=vmem, size = 0x50000, scoped, tag = 'input window, operand 2, single buffered']
    #allocation8 [shape = 'u8[655360]{0}', space=vmem, size = 0xa0000, scoped, tag = 'input window, operand 4, single buffered']
    #allocation9 [shape = 's32[1]{0}', space=sflag, size = 0x4, scoped, tag = 'scoped memory for tpu_custom_call.1']
    #allocation10 [shape = 'u8[327680]{0}', space=vmem, size = 0x50000, scoped, tag = 'input window, operand 6, single buffered']
    #allocation11 [shape = 'u8[327680]{0}', space=vmem, size = 0x50000, scoped, tag = 'input window, operand 8']
    #allocation12 [shape = 's32[2]{0}', space=sflag, size = 0x8, scoped, tag = 'scoped memory for tpu_custom_call.1']
    #allocation13 [shape = 'u8[1024]{0}', space=vmem, size = 0x400, scoped, tag = 'output window, operand 0']
    %15 = vsyncpa [#allocation3], 0
    %s16 = scalar_lea.sflag [#allocation3], 1
    %17 = vsyncpa %s16, 0
    %18 = vsyncpa [#allocation6], 0
    %s19 = scalar_lea.sflag [#allocation6], 1
    %20 = vsyncpa %s19, 0
    %21 = vsyncpa [#allocation9], 0
    %22 = vsyncpa [#allocation12], 0
    %s23 = scalar_lea.sflag [#allocation12], 1
    %24 = vsyncpa %s23, 0
    %25 = vsyncpa [#allocation4], 0
    %s26 = scalar_lea.sflag [#allocation4], 1
    %27 = vsyncpa %s26, 0
    loop: start=0, step=1, limit=5
    $region2: #{tpu_custom_call.1} parent=1 // loop_pre_header
      _
    $region3: #{tpu_custom_call.1} parent=1 // loop_header
      %s29 = sphi 0, %s33
      %p30 = scmp.ge.s32.totalorder %s29, 5
      %s39 = sphi 0, %s41
      %s42 = sphi 0, %s39
      %s43 = sphi 0, %s42
      %s59 = sphi 0, %s43
      %s65 = sphi 0, %s67
      %s68 = sphi 0, %s65
      %s69 = sphi 0, %s68
      %s85 = sphi 0, %s69
      %s89 = sphi 0, %s89
      %s91 = sphi 0, %s89
      %s92 = sphi 0, %s91
      %s106 = sphi 0, %s92
      %s110 = sphi 0, %s110
      %s112 = sphi 0, %s110
      %s113 = sphi 0, %s112
      %s127 = sphi 0, %s113
      %s131 = sphi 0, %s131
      %s133 = sphi 0, %s131
      %s134 = sphi 0, %s133
      %s148 = sphi 0, %s134
      %s152 = sphi 0, %s152
      %s154 = sphi 0, %s152
      %s155 = sphi 0, %s154
      %s169 = sphi 0, %s155
      %s173 = sphi 0, %s173
      %s175 = sphi 0, %s173
      %s176 = sphi 0, %s175
      %s190 = sphi 0, %s176
      %s194 = sphi 0, %s194
      %s196 = sphi 0, %s194
      %s197 = sphi 0, %s196
      %s211 = sphi 0, %s197
      %s217 = sphi 0, %s219
      %s220 = sphi 0, %s217
      %s221 = sphi 0, %s220
      %s237 = sphi 0, %s221
      %s243 = sphi 0, %s245
      %s246 = sphi 0, %s243
      %s247 = sphi 0, %s246
      %s263 = sphi 0, %s247
      %s269 = sphi 0, %s271
      %s272 = sphi 0, %s269
      %s273 = sphi 0, %s272
      %s289 = sphi 0, %s273
    $region4: #{tpu_custom_call.1} parent=1 // loop_header_branch
      %32 = sbr.rel (%p30) target = $region8
    $region5: #{tpu_custom_call.1} parent=1 // loop_body
      %s34 = ssub.s32 %s29, 1
      %s35 = ssub.s32 %s29, 2
      %s36 = sadd.s32 %s29, 1
      %s37 = ssub.s32 %s29, %s36
      %p38 = scmp.eq.s32.totalorder %s37, 0
      %s40 = sadd.s32 %s39, 1
      %s41 = scalar_select %p38, %s39, %s40
      %p44 = pneg %p38
      %p45 = scmp.eq.s32.totalorder %s29, 2
      %p46 = por %p44, %p45
      %p47 = scmp.ne.s32.totalorder %s39, %s42
      %p48 = scmp.eq.s32.totalorder %s29, 0
      %p49 = por %p47, %p48
      %p50 = scmp.ne.s32.totalorder %s39, %s42
      %p51 = scmp.eq.s32.totalorder %s34, 2
      %p52 = por %p50, %p51
      %p53 = scmp.ne.s32.totalorder %s42, %s43
      %p54 = scmp.eq.s32.totalorder %s34, 0
      %p55 = por %p53, %p54
      %p56 = scmp.ne.s32.totalorder %s42, %s43
      %p57 = scmp.eq.s32.totalorder %s35, 2
      %p58 = por %p56, %p57
      %p60 = scmp.ne.s32.totalorder %s43, %s59
      %p61 = scmp.eq.s32.totalorder %s35, 0
      %p62 = por %p60, %p61
      %s63 = ssub.s32 %s29, %s36
      %p64 = scmp.eq.s32.totalorder %s63, 0
      %s66 = sadd.s32 %s65, 1
      %s67 = scalar_select %p64, %s65, %s66
      %p70 = pneg %p64
      %p71 = scmp.eq.s32.totalorder %s29, 2
      %p72 = por %p70, %p71
      %p73 = scmp.ne.s32.totalorder %s65, %s68
      %p74 = scmp.eq.s32.totalorder %s29, 0
      %p75 = por %p73, %p74
      %p76 = scmp.ne.s32.totalorder %s65, %s68
      %p77 = scmp.eq.s32.totalorder %s34, 2
      %p78 = por %p76, %p77
      %p79 = scmp.ne.s32.totalorder %s68, %s69
      %p80 = scmp.eq.s32.totalorder %s34, 0
      %p81 = por %p79, %p80
      %p82 = scmp.ne.s32.totalorder %s68, %s69
      %p83 = scmp.eq.s32.totalorder %s35, 2
      %p84 = por %p82, %p83
      %p86 = scmp.ne.s32.totalorder %s69, %s85
      %p87 = scmp.eq.s32.totalorder %s35, 0
      %p88 = por %p86, %p87
      %s90 = sadd.s32 %s89, 1
      %p93 = scmp.eq.s32.totalorder %s29, 2
      %p94 = scmp.ne.s32.totalorder %s89, %s91
      %p95 = scmp.eq.s32.totalorder %s29, 0
      %p96 = por %p94, %p95
      %p97 = scmp.ne.s32.totalorder %s89, %s91
      %p98 = scmp.eq.s32.totalorder %s34, 2
      %p99 = por %p97, %p98
      %p100 = scmp.ne.s32.totalorder %s91, %s92
      %p101 = scmp.eq.s32.totalorder %s34, 0
      %p102 = por %p100, %p101
      %p103 = scmp.ne.s32.totalorder %s91, %s92
      %p104 = scmp.eq.s32.totalorder %s35, 2
      %p105 = por %p103, %p104
      %p107 = scmp.ne.s32.totalorder %s92, %s106
      %p108 = scmp.eq.s32.totalorder %s35, 0
      %p109 = por %p107, %p108
      %s111 = sadd.s32 %s110, 1
      %p114 = scmp.eq.s32.totalorder %s29, 2
      %p115 = scmp.ne.s32.totalorder %s110, %s112
      %p116 = scmp.eq.s32.totalorder %s29, 0
      %p117 = por %p115, %p116
      %p118 = scmp.ne.s32.totalorder %s110, %s112
      %p119 = scmp.eq.s32.totalorder %s34, 2
      %p120 = por %p118, %p119
      %p121 = scmp.ne.s32.totalorder %s112, %s113
      %p122 = scmp.eq.s32.totalorder %s34, 0
      %p123 = por %p121, %p122
      %p124 = scmp.ne.s32.totalorder %s112, %s113
      %p125 = scmp.eq.s32.totalorder %s35, 2
      %p126 = por %p124, %p125
      %p128 = scmp.ne.s32.totalorder %s113, %s127
      %p129 = scmp.eq.s32.totalorder %s35, 0
      %p130 = por %p128, %p129
      %s132 = sadd.s32 %s131, 1
      %p135 = scmp.eq.s32.totalorder %s29, 2
      %p136 = scmp.ne.s32.totalorder %s131, %s133
      %p137 = scmp.eq.s32.totalorder %s29, 0
      %p138 = por %p136, %p137
      %p139 = scmp.ne.s32.totalorder %s131, %s133
      %p140 = scmp.eq.s32.totalorder %s34, 2
      %p141 = por %p139, %p140
      %p142 = scmp.ne.s32.totalorder %s133, %s134
      %p143 = scmp.eq.s32.totalorder %s34, 0
      %p144 = por %p142, %p143
      %p145 = scmp.ne.s32.totalorder %s133, %s134
      %p146 = scmp.eq.s32.totalorder %s35, 2
      %p147 = por %p145, %p146
      %p149 = scmp.ne.s32.totalorder %s134, %s148
      %p150 = scmp.eq.s32.totalorder %s35, 0
      %p151 = por %p149, %p150
      %s153 = sadd.s32 %s152, 1
      %p156 = scmp.eq.s32.totalorder %s29, 2
      %p157 = scmp.ne.s32.totalorder %s152, %s154
      %p158 = scmp.eq.s32.totalorder %s29, 0
      %p159 = por %p157, %p158
      %p160 = scmp.ne.s32.totalorder %s152, %s154
      %p161 = scmp.eq.s32.totalorder %s34, 2
      %p162 = por %p160, %p161
      %p163 = scmp.ne.s32.totalorder %s154, %s155
      %p164 = scmp.eq.s32.totalorder %s34, 0
      %p165 = por %p163, %p164
      %p166 = scmp.ne.s32.totalorder %s154, %s155
      %p167 = scmp.eq.s32.totalorder %s35, 2
      %p168 = por %p166, %p167
      %p170 = scmp.ne.s32.totalorder %s155, %s169
      %p171 = scmp.eq.s32.totalorder %s35, 0
      %p172 = por %p170, %p171
      %s174 = sadd.s32 %s173, 1
      %p177 = scmp.eq.s32.totalorder %s29, 2
      %p178 = scmp.ne.s32.totalorder %s173, %s175
      %p179 = scmp.eq.s32.totalorder %s29, 0
      %p180 = por %p178, %p179
      %p181 = scmp.ne.s32.totalorder %s173, %s175
      %p182 = scmp.eq.s32.totalorder %s34, 2
      %p183 = por %p181, %p182
      %p184 = scmp.ne.s32.totalorder %s175, %s176
      %p185 = scmp.eq.s32.totalorder %s34, 0
      %p186 = por %p184, %p185
      %p187 = scmp.ne.s32.totalorder %s175, %s176
      %p188 = scmp.eq.s32.totalorder %s35, 2
      %p189 = por %p187, %p188
      %p191 = scmp.ne.s32.totalorder %s176, %s190
      %p192 = scmp.eq.s32.totalorder %s35, 0
      %p193 = por %p191, %p192
      %s195 = sadd.s32 %s194, 1
      %p198 = scmp.eq.s32.totalorder %s29, 2
      %p199 = scmp.ne.s32.totalorder %s194, %s196
      %p200 = scmp.eq.s32.totalorder %s29, 0
      %p201 = por %p199, %p200
      %p202 = scmp.ne.s32.totalorder %s194, %s196
      %p203 = scmp.eq.s32.totalorder %s34, 2
      %p204 = por %p202, %p203
      %p205 = scmp.ne.s32.totalorder %s196, %s197
      %p206 = scmp.eq.s32.totalorder %s34, 0
      %p207 = por %p205, %p206
      %p208 = scmp.ne.s32.totalorder %s196, %s197
      %p209 = scmp.eq.s32.totalorder %s35, 2
      %p210 = por %p208, %p209
      %p212 = scmp.ne.s32.totalorder %s197, %s211
      %p213 = scmp.eq.s32.totalorder %s35, 0
      %p214 = por %p212, %p213
      %s215 = ssub.s32 %s29, %s36
      %p216 = scmp.eq.s32.totalorder %s215, 0
      %s218 = sadd.s32 %s217, 1
      %s219 = scalar_select %p216, %s217, %s218
      %p222 = pneg %p216
      %p223 = scmp.eq.s32.totalorder %s29, 2
      %p224 = por %p222, %p223
      %p225 = scmp.ne.s32.totalorder %s217, %s220
      %p226 = scmp.eq.s32.totalorder %s29, 0
      %p227 = por %p225, %p226
      %p228 = scmp.ne.s32.totalorder %s217, %s220
      %p229 = scmp.eq.s32.totalorder %s34, 2
      %p230 = por %p228, %p229
      %p231 = scmp.ne.s32.totalorder %s220, %s221
      %p232 = scmp.eq.s32.totalorder %s34, 0
      %p233 = por %p231, %p232
      %p234 = scmp.ne.s32.totalorder %s220, %s221
      %p235 = scmp.eq.s32.totalorder %s35, 2
      %p236 = por %p234, %p235
      %p238 = scmp.ne.s32.totalorder %s221, %s237
      %p239 = scmp.eq.s32.totalorder %s35, 0
      %p240 = por %p238, %p239
      %s241 = ssub.s32 %s29, %s36
      %p242 = scmp.eq.s32.totalorder %s241, 0
      %s244 = sadd.s32 %s243, 1
      %s245 = scalar_select %p242, %s243, %s244
      %p248 = pneg %p242
      %p249 = scmp.eq.s32.totalorder %s29, 2
      %p250 = por %p248, %p249
      %p251 = scmp.ne.s32.totalorder %s243, %s246
      %p252 = scmp.eq.s32.totalorder %s29, 0
      %p253 = por %p251, %p252
      %p254 = scmp.ne.s32.totalorder %s243, %s246
      %p255 = scmp.eq.s32.totalorder %s34, 2
      %p256 = por %p254, %p255
      %p257 = scmp.ne.s32.totalorder %s246, %s247
      %p258 = scmp.eq.s32.totalorder %s34, 0
      %p259 = por %p257, %p258
      %p260 = scmp.ne.s32.totalorder %s246, %s247
      %p261 = scmp.eq.s32.totalorder %s35, 2
      %p262 = por %p260, %p261
      %p264 = scmp.ne.s32.totalorder %s247, %s263
      %p265 = scmp.eq.s32.totalorder %s35, 0
      %p266 = por %p264, %p265
      %s267 = ssub.s32 %s29, %s36
      %p268 = scmp.eq.s32.totalorder %s267, 0
      %s270 = sadd.s32 %s269, 1
      %s271 = scalar_select %p268, %s269, %s270
      %p274 = pneg %p268
      %p275 = scmp.eq.s32.totalorder %s29, 2
      %p276 = por %p274, %p275
      %p277 = scmp.ne.s32.totalorder %s269, %s272
      %p278 = scmp.eq.s32.totalorder %s29, 0
      %p279 = por %p277, %p278
      %p280 = scmp.ne.s32.totalorder %s269, %s272
      %p281 = scmp.eq.s32.totalorder %s34, 2
      %p282 = por %p280, %p281
      %p283 = scmp.ne.s32.totalorder %s272, %s273
      %p284 = scmp.eq.s32.totalorder %s34, 0
      %p285 = por %p283, %p284
      %p286 = scmp.ne.s32.totalorder %s272, %s273
      %p287 = scmp.eq.s32.totalorder %s35, 2
      %p288 = por %p286, %p287
      %p290 = scmp.ne.s32.totalorder %s273, %s289
      %p291 = scmp.eq.s32.totalorder %s35, 0
      %p292 = por %p290, %p291
      %p293 = scmp.le.s32.totalorder 1, %s29
      %p294 = scmp.lt.s32.totalorder %s29, 4
      %p295 = pnand %p293, %p294
      %p296 = pneg %p295
      // Predicated region
      $region9: #{tpu_custom_call.1} parent=5 // pred_check
        _
      $region10: #{tpu_custom_call.1} parent=5 // pred_check_branch
        %298 = sbr.rel (%p295) target = $region12
      $region11: #{tpu_custom_call.1} parent=5 // pred_region
        %s299 = ssub.s32 %s29, 1
        // Predicated region
        $region13: #{tpu_custom_call.1} parent=11 // pred_check
          %p300 = pneg %p102
        $region14: #{tpu_custom_call.1} parent=11 // pred_check_branch
          %302 = sbr.rel (%p300) target = $region16
        $region15: #{tpu_custom_call.1} parent=11 // pred_region
          %s304 = ssub.s32 10240, 10240
          %305 = vsyncadd [#allocation6], %s304
          %s306 = sshll.u32 [#allocation7], 4
          %s307 = int_to_ptr.vmem [resolvable:$true] %s306
          %312 = dma.hbm_to_vmem [thread:$0]  %s2, 10240, %s307, [#allocation6], 320, 320, 20
        $region16: #{tpu_custom_call.1} parent=11 // pred_fallthru
          _
        // Predicated region
        $region17: #{tpu_custom_call.1} parent=11 // pred_check
          %p313 = pneg %p123
        $region18: #{tpu_custom_call.1} parent=11 // pred_check_branch
          %315 = sbr.rel (%p313) target = $region20
        $region19: #{tpu_custom_call.1} parent=11 // pred_region
          _
        $region20: #{tpu_custom_call.1} parent=11 // pred_fallthru
          _
        // Predicated region
        $region21: #{tpu_custom_call.1} parent=11 // pred_check
          %p316 = pneg %p144
        $region22: #{tpu_custom_call.1} parent=11 // pred_check_branch
          %318 = sbr.rel (%p316) target = $region24
        $region23: #{tpu_custom_call.1} parent=11 // pred_region
          %s320 = ssub.s32 20480, 20480
          %321 = vsyncadd [#allocation9], %s320
          %s322 = sshll.u32 [#allocation8], 4
          %s323 = int_to_ptr.vmem [resolvable:$true] %s322
          %328 = dma.hbm_to_vmem [thread:$0]  %s4, 20480, %s323, [#allocation9], 256, 256, 16
        $region24: #{tpu_custom_call.1} parent=11 // pred_fallthru
          _
        // Predicated region
        $region25: #{tpu_custom_call.1} parent=11 // pred_check
          %p329 = pneg %p165
        $region26: #{tpu_custom_call.1} parent=11 // pred_check_branch
          %331 = sbr.rel (%p329) target = $region28
        $region27: #{tpu_custom_call.1} parent=11 // pred_region
          _
        $region28: #{tpu_custom_call.1} parent=11 // pred_fallthru
          _
        // Predicated region
        $region29: #{tpu_custom_call.1} parent=11 // pred_check
          %p332 = pneg %p186
        $region30: #{tpu_custom_call.1} parent=11 // pred_check_branch
          %334 = sbr.rel (%p332) target = $region32
        $region31: #{tpu_custom_call.1} parent=11 // pred_region
          %s336 = ssub.s32 10240, 10240
          %337 = vsyncadd [#allocation9], %s336
          %s338 = sshll.u32 [#allocation10], 4
          %s339 = int_to_ptr.vmem [resolvable:$true] %s338
          %344 = dma.hbm_to_vmem [thread:$0]  %s6, 10240, %s339, [#allocation9], 320, 320, 20
        $region32: #{tpu_custom_call.1} parent=11 // pred_fallthru
          _
        // Predicated region
        $region33: #{tpu_custom_call.1} parent=11 // pred_check
          %p345 = pneg %p207
        $region34: #{tpu_custom_call.1} parent=11 // pred_check_branch
          %347 = sbr.rel (%p345) target = $region36
        $region35: #{tpu_custom_call.1} parent=11 // pred_region
          _
        $region36: #{tpu_custom_call.1} parent=11 // pred_fallthru
          _
      $region12: #{tpu_custom_call.1} parent=5 // pred_fallthru
        _
      %p348 = scmp.lt.s32.totalorder %s29, 3
      // Predicated region
      $region37: #{tpu_custom_call.1} parent=5 // pred_check
        %p349 = pneg %p348
      $region38: #{tpu_custom_call.1} parent=5 // pred_check_branch
        %351 = sbr.rel (%p349) target = $region40
      $region39: #{tpu_custom_call.1} parent=5 // pred_region
        // Predicated region
        $region41: #{tpu_custom_call.1} parent=39 // pred_check
          %p352 = pneg %p49
        $region42: #{tpu_custom_call.1} parent=39 // pred_check_branch
          %354 = sbr.rel (%p352) target = $region44
        $region43: #{tpu_custom_call.1} parent=39 // pred_region
          %s355 = sand.u32 %s39, 1
          %s356 = scalar_lea.sflag [#allocation3], %s355
          %s357 = sand.u32 %s39, 1
          %s358 = smul.addr %s357, 128
          %s359 = scalar_lea.vmem [#allocation2], %s358
          %s360 = smul.u32 16, %s29
          %s362 = ssub.s32 2048, 2048
          %363 = vsyncadd %s356, %s362
          %s364 = smul.addr %s360, 2
          %s365 = smul.addr %s364, 64
          %s366 = scalar_lea.hbm %s0, %s365
          %s367 = sshll.u32 %s359, 4
          %s368 = int_to_ptr.vmem [resolvable:$true] %s367
          %373 = dma.hbm_to_vmem [thread:$0]  %s366, 2048, %s368, %s356, 128, 128, 8
        $region44: #{tpu_custom_call.1} parent=39 // pred_fallthru
          _
        // Predicated region
        $region45: #{tpu_custom_call.1} parent=39 // pred_check
          %p374 = pneg %p75
        $region46: #{tpu_custom_call.1} parent=39 // pred_check_branch
          %376 = sbr.rel (%p374) target = $region48
        $region47: #{tpu_custom_call.1} parent=39 // pred_region
          %s377 = sand.u32 %s29, 1
          %s378 = scalar_lea.sflag [#allocation6], %s377
          %s379 = sand.u32 %s65, 1
          %s380 = smul.addr %s379, 256
          %s381 = scalar_lea.vmem [#allocation5], %s380
          %s382 = smul.u32 16, %s29
          %s384 = ssub.s32 4096, 4096
          %385 = vsyncadd %s378, %s384
          %s386 = smul.addr %s382, 2
          %s387 = smul.addr %s386, 128
          %s388 = scalar_lea.hbm %s1, %s387
          %s389 = sshll.u32 %s381, 4
          %s390 = int_to_ptr.vmem [resolvable:$true] %s389
          %395 = dma.hbm_to_vmem [thread:$0]  %s388, 4096, %s390, %s378, 256, 256, 16
        $region48: #{tpu_custom_call.1} parent=39 // pred_fallthru
          _
        // Predicated region
        $region49: #{tpu_custom_call.1} parent=39 // pred_check
          %p396 = pneg %p227
        $region50: #{tpu_custom_call.1} parent=39 // pred_check_branch
          %398 = sbr.rel (%p396) target = $region52
        $region51: #{tpu_custom_call.1} parent=39 // pred_region
          %s399 = sand.u32 %s217, 1
          %s400 = scalar_lea.sflag [#allocation12], %s399
          %s401 = sand.u32 %s217, 1
          %s402 = smul.addr %s401, 320
          %s403 = scalar_lea.vmem [#allocation11], %s402
          %s404 = smul.u32 16, %s29
          %s406 = ssub.s32 5120, 5120
          %407 = vsyncadd %s400, %s406
          %s408 = smul.addr %s404, 5
          %s409 = smul.addr %s408, 64
          %s410 = scalar_lea.hbm %s8, %s409
          %s411 = sshll.u32 %s403, 4
          %s412 = int_to_ptr.vmem [resolvable:$true] %s411
          %417 = dma.hbm_to_vmem [thread:$0]  %s410, 5120, %s412, %s400, 320, 320, 20
        $region52: #{tpu_custom_call.1} parent=39 // pred_fallthru
          _
        // Predicated region
        $region53: #{tpu_custom_call.1} parent=39 // pred_check
          %p418 = pneg %p253
        $region54: #{tpu_custom_call.1} parent=39 // pred_check_branch
          %420 = sbr.rel (%p418) target = $region56
        $region55: #{tpu_custom_call.1} parent=39 // pred_region
          %p421 = scmp.lt.s32.totalorder %s29, 2
          %s422 = scalar_select %p421, %s29, 2
          %s423 = scalar_lea.vmem %s9, %s422
        $region56: #{tpu_custom_call.1} parent=39 // pred_fallthru
          _
      $region40: #{tpu_custom_call.1} parent=5 // pred_fallthru
        _
      %p424 = scmp.le.s32.totalorder 1, %s29
      %p425 = scmp.lt.s32.totalorder %s29, 4
      %p426 = pnand %p424, %p425
      %p427 = pneg %p426
      // Predicated region
      $region57: #{tpu_custom_call.1} parent=5 // pred_check
        _
      $region58: #{tpu_custom_call.1} parent=5 // pred_check_branch
        %429 = sbr.rel (%p426) target = $region60
      $region59: #{tpu_custom_call.1} parent=5 // pred_region
        %s430 = ssub.s32 %s29, 1
        %s431 = sand.u32 %s42, 1
        %s432 = scalar_lea.sflag [#allocation3], %s431
        %s433 = sand.u32 %s42, 1
        %s434 = smul.addr %s433, 128
        %s435 = scalar_lea.vmem [#allocation2], %s434
        // Predicated region
        $region61: #{tpu_custom_call.1} parent=59 // pred_check
          %p436 = pneg %p55
        $region62: #{tpu_custom_call.1} parent=59 // pred_check_branch
          %438 = sbr.rel (%p436) target = $region64
        $region63: #{tpu_custom_call.1} parent=59 // pred_region
          %439 = dma.done %s432, 2048
        $region64: #{tpu_custom_call.1} parent=59 // pred_fallthru
          _
        %s440 = sand.u32 %s34, 1
        %s441 = scalar_lea.sflag [#allocation6], %s440
        %s442 = sand.u32 %s68, 1
        %s443 = smul.addr %s442, 256
        %s444 = scalar_lea.vmem [#allocation5], %s443
        // Predicated region
        $region65: #{tpu_custom_call.1} parent=59 // pred_check
          %p445 = pneg %p81
        $region66: #{tpu_custom_call.1} parent=59 // pred_check_branch
          %447 = sbr.rel (%p445) target = $region68
        $region67: #{tpu_custom_call.1} parent=59 // pred_region
          %448 = dma.done %s441, 4096
        $region68: #{tpu_custom_call.1} parent=59 // pred_fallthru
          _
        // Predicated region
        $region69: #{tpu_custom_call.1} parent=59 // pred_check
          %p449 = pneg %p102
        $region70: #{tpu_custom_call.1} parent=59 // pred_check_branch
          %451 = sbr.rel (%p449) target = $region72
        $region71: #{tpu_custom_call.1} parent=59 // pred_region
          %452 = dma.done [#allocation6], 10240
        $region72: #{tpu_custom_call.1} parent=59 // pred_fallthru
          _
        // Predicated region
        $region73: #{tpu_custom_call.1} parent=59 // pred_check
          %p453 = pneg %p144
        $region74: #{tpu_custom_call.1} parent=59 // pred_check_branch
          %455 = sbr.rel (%p453) target = $region76
        $region75: #{tpu_custom_call.1} parent=59 // pred_region
          %456 = dma.done [#allocation9], 20480
        $region76: #{tpu_custom_call.1} parent=59 // pred_fallthru
          _
        // Predicated region
        $region77: #{tpu_custom_call.1} parent=59 // pred_check
          %p457 = pneg %p186
        $region78: #{tpu_custom_call.1} parent=59 // pred_check_branch
          %459 = sbr.rel (%p457) target = $region80
        $region79: #{tpu_custom_call.1} parent=59 // pred_region
          %460 = dma.done [#allocation9], 10240
        $region80: #{tpu_custom_call.1} parent=59 // pred_fallthru
          _
        %s461 = sand.u32 %s220, 1
        %s462 = scalar_lea.sflag [#allocation12], %s461
        %s463 = sand.u32 %s220, 1
        %s464 = smul.addr %s463, 320
        %s465 = scalar_lea.vmem [#allocation11], %s464
        // Predicated region
        $region81: #{tpu_custom_call.1} parent=59 // pred_check
          %p466 = pneg %p233
        $region82: #{tpu_custom_call.1} parent=59 // pred_check_branch
          %468 = sbr.rel (%p466) target = $region84
        $region83: #{tpu_custom_call.1} parent=59 // pred_region
          %469 = dma.done %s462, 5120
        $region84: #{tpu_custom_call.1} parent=59 // pred_fallthru
          _
        %s470 = sand.u32 %s42, 1
        %s471 = scalar_lea.sflag [#allocation3], %s470
        %s472 = sand.u32 %s42, 1
        %s473 = smul.addr %s472, 128
        %s474 = scalar_lea.vmem [#allocation2], %s473
        %p475 = pneg %p55
        %p476 = pneg %p52
        %s477 = sand.u32 %s34, 1
        %s478 = scalar_lea.sflag [#allocation6], %s477
        %s479 = sand.u32 %s68, 1
        %s480 = smul.addr %s479, 256
        %s481 = scalar_lea.vmem [#allocation5], %s480
        %p482 = pneg %p81
        %p483 = pneg %p78
        %p484 = pneg %p102
        %p485 = pneg %p99
        %p486 = pneg %p123
        %p487 = pneg %p120
        %p488 = pneg %p144
        %p489 = pneg %p141
        %p490 = pneg %p165
        %p491 = pneg %p162
        %p492 = pneg %p186
        %p493 = pneg %p183
        %p494 = pneg %p207
        %p495 = pneg %p204
        %s496 = sand.u32 %s220, 1
        %s497 = scalar_lea.sflag [#allocation12], %s496
        %s498 = sand.u32 %s220, 1
        %s499 = smul.addr %s498, 320
        %s500 = scalar_lea.vmem [#allocation11], %s499
        %p501 = pneg %p233
        %p502 = pneg %p230
        %p503 = scmp.lt.s32.totalorder %s34, 2
        %s504 = scalar_select %p503, %s34, 2
        %s505 = scalar_lea.vmem %s9, %s504
        %p506 = pneg %p259
        %p507 = pneg %p256
        %p508 = pneg %p285
        %p509 = pneg %p282
        %s510 = sand.u32 %s272, 1
        %s511 = scalar_lea.sflag [#allocation4], %s510
        %s512 = sand.u32 %s272, 1
        %s513 = scalar_lea.vmem [#allocation13], %s512
        %s514 = smul.u32 16, %s34
        %s515 = smul.u32 16, %s34
        %s516 = smul.u32 16, %s34
        %p517 = scmp.lt.s32.totalorder %s34, 2
        %s518 = scalar_select %p517, %s34, 2
        %s519 = scalar_lea.vmem %s9, %s518
        %v521 = vld [vmem:[%s435] sm:$0xff]
        %v522 = vld [vmem:[%s435 + $0x8] sm:$0xff]
        %v523 = vld [vmem:[%s435 + $0x10] sm:$0xff]
        %v524 = vld [vmem:[%s435 + $0x18] sm:$0xff]
        %v525 = vld [vmem:[%s435 + $0x20] sm:$0xff]
        %v526 = vld [vmem:[%s435 + $0x28] sm:$0xff]
        %v527 = vld [vmem:[%s435 + $0x30] sm:$0xff]
        %v528 = vld [vmem:[%s435 + $0x38] sm:$0xff]
        %v529 = vld [vmem:[%s435 + $0x40] sm:$0xff]
        %v530 = vld [vmem:[%s435 + $0x48] sm:$0xff]
        %v531 = vld [vmem:[%s435 + $0x50] sm:$0xff]
        %v532 = vld [vmem:[%s435 + $0x58] sm:$0xff]
        %v533 = vld [vmem:[%s435 + $0x60] sm:$0xff]
        %v534 = vld [vmem:[%s435 + $0x68] sm:$0xff]
        %v535 = vld [vmem:[%s435 + $0x70] sm:$0xff]
        %v536 = vld [vmem:[%s435 + $0x78] sm:$0xff]
        %v537 = vunpack.c.l.bf16 %v521
        %v538 = vunpack.c.h.bf16 %v521
        %v539 = vunpack.c.l.bf16 %v522
        %v540 = vunpack.c.h.bf16 %v522
        %v541 = vunpack.c.l.bf16 %v523
        %v542 = vunpack.c.h.bf16 %v523
        %v543 = vunpack.c.l.bf16 %v524
        %v544 = vunpack.c.h.bf16 %v524
        %v545 = vunpack.c.l.bf16 %v525
        %v546 = vunpack.c.h.bf16 %v525
        %v547 = vunpack.c.l.bf16 %v526
        %v548 = vunpack.c.h.bf16 %v526
        %v549 = vunpack.c.l.bf16 %v527
        %v550 = vunpack.c.h.bf16 %v527
        %v551 = vunpack.c.l.bf16 %v528
        %v552 = vunpack.c.h.bf16 %v528
        %v553 = vunpack.c.l.bf16 %v529
        %v554 = vunpack.c.h.bf16 %v529
        %v555 = vunpack.c.l.bf16 %v530
        %v556 = vunpack.c.h.bf16 %v530
        %v557 = vunpack.c.l.bf16 %v531
        %v558 = vunpack.c.h.bf16 %v531
        %v559 = vunpack.c.l.bf16 %v532
        %v560 = vunpack.c.h.bf16 %v532
        %v561 = vunpack.c.l.bf16 %v533
        %v562 = vunpack.c.h.bf16 %v533
        %v563 = vunpack.c.l.bf16 %v534
        %v564 = vunpack.c.h.bf16 %v534
        %v565 = vunpack.c.l.bf16 %v535
        %v566 = vunpack.c.h.bf16 %v535
        %v567 = vunpack.c.l.bf16 %v536
        %v568 = vunpack.c.h.bf16 %v536
        %v569 = vmul.f32 %v537, %v537
        %v570 = vmul.f32 %v538, %v538
        %v571 = vmul.f32 %v539, %v539
        %v572 = vmul.f32 %v540, %v540
        %v573 = vmul.f32 %v541, %v541
        %v574 = vmul.f32 %v542, %v542
        %v575 = vmul.f32 %v543, %v543
        %v576 = vmul.f32 %v544, %v544
        %v577 = vmul.f32 %v545, %v545
        %v578 = vmul.f32 %v546, %v546
        %v579 = vmul.f32 %v547, %v547
        %v580 = vmul.f32 %v548, %v548
        %v581 = vmul.f32 %v549, %v549
        %v582 = vmul.f32 %v550, %v550
        %v583 = vmul.f32 %v551, %v551
        %v584 = vmul.f32 %v552, %v552
        %v585 = vmul.f32 %v553, %v553
        %v586 = vmul.f32 %v554, %v554
        %v587 = vmul.f32 %v555, %v555
        %v588 = vmul.f32 %v556, %v556
        %v589 = vmul.f32 %v557, %v557
        %v590 = vmul.f32 %v558, %v558
        %v591 = vmul.f32 %v559, %v559
        %v592 = vmul.f32 %v560, %v560
        %v593 = vmul.f32 %v561, %v561
        %v594 = vmul.f32 %v562, %v562
        %v595 = vmul.f32 %v563, %v563
        %v596 = vmul.f32 %v564, %v564
        %v597 = vmul.f32 %v565, %v565
        %v598 = vmul.f32 %v566, %v566
        %v599 = vmul.f32 %v567, %v567
        %v600 = vmul.f32 %v568, %v568
        %v601 = vadd.f32 %v569, %v570
        %602 = vadd.xlane.f32.xlu0 %v601
        %v603 = vpop.xlane.xlu0 %602
        %v604 = vadd.f32 %v571, %v572
        %605 = vadd.xlane.f32.xlu0 %v604
        %v606 = vpop.xlane.xlu0 %605
        %v607 = vadd.f32 %v573, %v574
        %608 = vadd.xlane.f32.xlu0 %v607
        %v609 = vpop.xlane.xlu0 %608
        %v610 = vadd.f32 %v575, %v576
        %611 = vadd.xlane.f32.xlu0 %v610
        %v612 = vpop.xlane.xlu0 %611
        %v613 = vadd.f32 %v577, %v578
        %614 = vadd.xlane.f32.xlu0 %v613
        %v615 = vpop.xlane.xlu0 %614
        %v616 = vadd.f32 %v579, %v580
        %617 = vadd.xlane.f32.xlu0 %v616
        %v618 = vpop.xlane.xlu0 %617
        %v619 = vadd.f32 %v581, %v582
        %620 = vadd.xlane.f32.xlu0 %v619
        %v621 = vpop.xlane.xlu0 %620
        %v622 = vadd.f32 %v583, %v584
        %623 = vadd.xlane.f32.xlu0 %v622
        %v624 = vpop.xlane.xlu0 %623
        %v625 = vadd.f32 %v585, %v586
        %626 = vadd.xlane.f32.xlu0 %v625
        %v627 = vpop.xlane.xlu0 %626
        %v628 = vadd.f32 %v587, %v588
        %629 = vadd.xlane.f32.xlu0 %v628
        %v630 = vpop.xlane.xlu0 %629
        %v631 = vadd.f32 %v589, %v590
        %632 = vadd.xlane.f32.xlu0 %v631
        %v633 = vpop.xlane.xlu0 %632
        %v634 = vadd.f32 %v591, %v592
        %635 = vadd.xlane.f32.xlu0 %v634
        %v636 = vpop.xlane.xlu0 %635
        %v637 = vadd.f32 %v593, %v594
        %638 = vadd.xlane.f32.xlu0 %v637
        %v639 = vpop.xlane.xlu0 %638
        %v640 = vadd.f32 %v595, %v596
        %641 = vadd.xlane.f32.xlu0 %v640
        %v642 = vpop.xlane.xlu0 %641
        %v643 = vadd.f32 %v597, %v598
        %644 = vadd.xlane.f32.xlu0 %v643
        %v645 = vpop.xlane.xlu0 %644
        %v646 = vadd.f32 %v599, %v600
        %647 = vadd.xlane.f32.xlu0 %v646
        %v648 = vpop.xlane.xlu0 %647
        %v649 = vmax.f32 %v603, 1e-24
        %v650 = vmax.f32 %v606, 1e-24
        %v651 = vmax.f32 %v609, 1e-24
        %v652 = vmax.f32 %v612, 1e-24
        %v653 = vmax.f32 %v615, 1e-24
        %v654 = vmax.f32 %v618, 1e-24
        %v655 = vmax.f32 %v621, 1e-24
        %v656 = vmax.f32 %v624, 1e-24
        %v657 = vmax.f32 %v627, 1e-24
        %v658 = vmax.f32 %v630, 1e-24
        %v659 = vmax.f32 %v633, 1e-24
        %v660 = vmax.f32 %v636, 1e-24
        %v661 = vmax.f32 %v639, 1e-24
        %v662 = vmax.f32 %v642, 1e-24
        %v663 = vmax.f32 %v645, 1e-24
        %v664 = vmax.f32 %v648, 1e-24
        %v665 = vrsqrt.pop %v649
        %v666 = vrsqrt.pop %v650
        %v667 = vrsqrt.pop %v651
        %v668 = vrsqrt.pop %v652
        %v669 = vrsqrt.pop %v653
        %v670 = vrsqrt.pop %v654
        %v671 = vrsqrt.pop %v655
        %v672 = vrsqrt.pop %v656
        %v673 = vrsqrt.pop %v657
        %v674 = vrsqrt.pop %v658
        %v675 = vrsqrt.pop %v659
        %v676 = vrsqrt.pop %v660
        %v677 = vrsqrt.pop %v661
        %v678 = vrsqrt.pop %v662
        %v679 = vrsqrt.pop %v663
        %v680 = vrsqrt.pop %v664
        %v681 = vmul.f32 %v537, %v665
        %v682 = vmul.f32 %v538, %v665
        %v683 = vmul.f32 %v539, %v666
        %v684 = vmul.f32 %v540, %v666
        %v685 = vmul.f32 %v541, %v667
        %v686 = vmul.f32 %v542, %v667
        %v687 = vmul.f32 %v543, %v668
        %v688 = vmul.f32 %v544, %v668
        %v689 = vmul.f32 %v545, %v669
        %v690 = vmul.f32 %v546, %v669
        %v691 = vmul.f32 %v547, %v670
        %v692 = vmul.f32 %v548, %v670
        %v693 = vmul.f32 %v549, %v671
        %v694 = vmul.f32 %v550, %v671
        %v695 = vmul.f32 %v551, %v672
        %v696 = vmul.f32 %v552, %v672
        %v697 = vmul.f32 %v553, %v673
        %v698 = vmul.f32 %v554, %v673
        %v699 = vmul.f32 %v555, %v674
        %v700 = vmul.f32 %v556, %v674
        %v701 = vmul.f32 %v557, %v675
        %v702 = vmul.f32 %v558, %v675
        %v703 = vmul.f32 %v559, %v676
        %v704 = vmul.f32 %v560, %v676
        %v705 = vmul.f32 %v561, %v677
        %v706 = vmul.f32 %v562, %v677
        %v707 = vmul.f32 %v563, %v678
        %v708 = vmul.f32 %v564, %v678
        %v709 = vmul.f32 %v565, %v679
        %v710 = vmul.f32 %v566, %v679
        %v711 = vmul.f32 %v567, %v680
        %v712 = vmul.f32 %v568, %v680
        %v713 = vpack.c.bf16 %v683, %v681
        %v714 = vpack.c.bf16 %v684, %v682
        %v715 = vpack.c.bf16 %v687, %v685
        %v716 = vpack.c.bf16 %v688, %v686
        %v717 = vpack.c.bf16 %v691, %v689
        %v718 = vpack.c.bf16 %v692, %v690
        %v719 = vpack.c.bf16 %v695, %v693
        %v720 = vpack.c.bf16 %v696, %v694
        %v721 = vpack.c.bf16 %v699, %v697
        %v722 = vpack.c.bf16 %v700, %v698
        %v723 = vpack.c.bf16 %v703, %v701
        %v724 = vpack.c.bf16 %v704, %v702
        %v725 = vpack.c.bf16 %v707, %v705
        %v726 = vpack.c.bf16 %v708, %v706
        %v727 = vpack.c.bf16 %v711, %v709
        %v728 = vpack.c.bf16 %v712, %v710
        %v729 = vld [vmem:[#allocation7] sm:$0xff]
        %v730 = vld [vmem:[#allocation7 + $0x8] sm:$0xff]
        %v731 = vld [vmem:[#allocation7 + $0x10] sm:$0xf]
        %v732 = vld [vmem:[#allocation7 + $0x14] sm:$0xff]
        %v733 = vld [vmem:[#allocation7 + $0x1c] sm:$0xff]
        %v734 = vld [vmem:[#allocation7 + $0x24] sm:$0xf]
        %v735 = vld [vmem:[#allocation7 + $0x28] sm:$0xff]
        %v736 = vld [vmem:[#allocation7 + $0x30] sm:$0xff]
        %v737 = vld [vmem:[#allocation7 + $0x38] sm:$0xf]
        %v738 = vld [vmem:[#allocation7 + $0x3c] sm:$0xff]
        %v739 = vld [vmem:[#allocation7 + $0x44] sm:$0xff]
        %v740 = vld [vmem:[#allocation7 + $0x4c] sm:$0xf]
        %v741 = vld [vmem:[#allocation7 + $0x50] sm:$0xff]
        %v742 = vld [vmem:[#allocation7 + $0x58] sm:$0xff]
        %v743 = vld [vmem:[#allocation7 + $0x60] sm:$0xf]
        %v744 = vld [vmem:[#allocation7 + $0x64] sm:$0xff]
        %v745 = vld [vmem:[#allocation7 + $0x6c] sm:$0xff]
        %v746 = vld [vmem:[#allocation7 + $0x74] sm:$0xf]
        %v747 = vld [vmem:[#allocation7 + $0x78] sm:$0xff]
        %v748 = vld [vmem:[#allocation7 + $0x80] sm:$0xff]
        %v749 = vld [vmem:[#allocation7 + $0x88] sm:$0xf]
        %v750 = vld [vmem:[#allocation7 + $0x8c] sm:$0xff]
        %v751 = vld [vmem:[#allocation7 + $0x94] sm:$0xff]
        %v752 = vld [vmem:[#allocation7 + $0x9c] sm:$0xf]
        %v753 = vld [vmem:[#allocation7 + $0xa0] sm:$0xff]
        %v754 = vld [vmem:[#allocation7 + $0xa8] sm:$0xff]
        %v755 = vld [vmem:[#allocation7 + $0xb0] sm:$0xf]
        %v756 = vld [vmem:[#allocation7 + $0xb4] sm:$0xff]
        %v757 = vld [vmem:[#allocation7 + $0xbc] sm:$0xff]
        %v758 = vld [vmem:[#allocation7 + $0xc4] sm:$0xf]
        %v759 = vld [vmem:[#allocation7 + $0xc8] sm:$0xff]
        %v760 = vld [vmem:[#allocation7 + $0xd0] sm:$0xff]
        %v761 = vld [vmem:[#allocation7 + $0xd8] sm:$0xf]
        %v762 = vld [vmem:[#allocation7 + $0xdc] sm:$0xff]
        %v763 = vld [vmem:[#allocation7 + $0xe4] sm:$0xff]
        %v764 = vld [vmem:[#allocation7 + $0xec] sm:$0xf]
        %v765 = vld [vmem:[#allocation7 + $0xf0] sm:$0xff]
        %v766 = vld [vmem:[#allocation7 + $0xf8] sm:$0xff]
        %v767 = vld [vmem:[#allocation7 + $0x100] sm:$0xf]
        %v768 = vld [vmem:[#allocation7 + $0x104] sm:$0xff]
        %v769 = vld [vmem:[#allocation7 + $0x10c] sm:$0xff]
        %v770 = vld [vmem:[#allocation7 + $0x114] sm:$0xf]
        %v771 = vld [vmem:[#allocation7 + $0x118] sm:$0xff]
        %v772 = vld [vmem:[#allocation7 + $0x120] sm:$0xff]
        %v773 = vld [vmem:[#allocation7 + $0x128] sm:$0xf]
        %v774 = vld [vmem:[#allocation7 + $0x12c] sm:$0xff]
        %v775 = vld [vmem:[#allocation7 + $0x134] sm:$0xff]
        %v776 = vld [vmem:[#allocation7 + $0x13c] sm:$0xf]
        %v777 = vld [vmem:[#allocation7 + $0x140] sm:$0xff]
        %v778 = vld [vmem:[#allocation7 + $0x148] sm:$0xff]
        %v779 = vld [vmem:[#allocation7 + $0x150] sm:$0xf]
        %v780 = vld [vmem:[#allocation7 + $0x154] sm:$0xff]
        %v781 = vld [vmem:[#allocation7 + $0x15c] sm:$0xff]
        %v782 = vld [vmem:[#allocation7 + $0x164] sm:$0xf]
        %v783 = vld [vmem:[#allocation7 + $0x168] sm:$0xff]
        %v784 = vld [vmem:[#allocation7 + $0x170] sm:$0xff]
        %v785 = vld [vmem:[#allocation7 + $0x178] sm:$0xf]
        %v786 = vld [vmem:[#allocation7 + $0x17c] sm:$0xff]
        %v787 = vld [vmem:[#allocation7 + $0x184] sm:$0xff]
        %v788 = vld [vmem:[#allocation7 + $0x18c] sm:$0xf]
        %v789 = vld [vmem:[#allocation7 + $0x190] sm:$0xff]
        %v790 = vld [vmem:[#allocation7 + $0x198] sm:$0xff]
        %v791 = vld [vmem:[#allocation7 + $0x1a0] sm:$0xf]
        %v792 = vld [vmem:[#allocation7 + $0x1a4] sm:$0xff]
        %v793 = vld [vmem:[#allocation7 + $0x1ac] sm:$0xff]
        %v794 = vld [vmem:[#allocation7 + $0x1b4] sm:$0xf]
        %v795 = vld [vmem:[#allocation7 + $0x1b8] sm:$0xff]
        %v796 = vld [vmem:[#allocation7 + $0x1c0] sm:$0xff]
        %v797 = vld [vmem:[#allocation7 + $0x1c8] sm:$0xf]
        %v798 = vld [vmem:[#allocation7 + $0x1cc] sm:$0xff]
        %v799 = vld [vmem:[#allocation7 + $0x1d4] sm:$0xff]
        %v800 = vld [vmem:[#allocation7 + $0x1dc] sm:$0xf]
        %v801 = vld [vmem:[#allocation7 + $0x1e0] sm:$0xff]
        %v802 = vld [vmem:[#allocation7 + $0x1e8] sm:$0xff]
        %v803 = vld [vmem:[#allocation7 + $0x1f0] sm:$0xf]
        %v804 = vld [vmem:[#allocation7 + $0x1f4] sm:$0xff]
        %v805 = vld [vmem:[#allocation7 + $0x1fc] sm:$0xff]
        %v806 = vld [vmem:[#allocation7 + $0x204] sm:$0xf]
        %v807 = vld [vmem:[#allocation7 + $0x208] sm:$0xff]
        %v808 = vld [vmem:[#allocation7 + $0x210] sm:$0xff]
        %v809 = vld [vmem:[#allocation7 + $0x218] sm:$0xf]
        %v810 = vld [vmem:[#allocation7 + $0x21c] sm:$0xff]
        %v811 = vld [vmem:[#allocation7 + $0x224] sm:$0xff]
        %v812 = vld [vmem:[#allocation7 + $0x22c] sm:$0xf]
        %v813 = vld [vmem:[#allocation7 + $0x230] sm:$0xff]
        %v814 = vld [vmem:[#allocation7 + $0x238] sm:$0xff]
        %v815 = vld [vmem:[#allocation7 + $0x240] sm:$0xf]
        %v816 = vld [vmem:[#allocation7 + $0x244] sm:$0xff]
        %v817 = vld [vmem:[#allocation7 + $0x24c] sm:$0xff]
        %v818 = vld [vmem:[#allocation7 + $0x254] sm:$0xf]
        %v819 = vld [vmem:[#allocation7 + $0x258] sm:$0xff]
        %v820 = vld [vmem:[#allocation7 + $0x260] sm:$0xff]
        %v821 = vld [vmem:[#allocation7 + $0x268] sm:$0xf]
        %v822 = vld [vmem:[#allocation7 + $0x26c] sm:$0xff]
        %v823 = vld [vmem:[#allocation7 + $0x274] sm:$0xff]
        %v824 = vld [vmem:[#allocation7 + $0x27c] sm:$0xf]
        %v825 = vld [vmem:[%s3] sm:$0x1f]
        %v827 = vlaneseq
        %v828 = vshrl.u32 %v827, 7
        %v829 = vsub.s32 0, %v828
        %v830 = vrot.slane %v825, %v829
        %v831 = vlaneseq
        %v832 = vshrl.u32 %v831, 7
        %v833 = vsub.s32 1, %v832
        %v834 = vrot.slane %v825, %v833
        %v835 = vlaneseq
        %v836 = vshrl.u32 %v835, 7
        %v837 = vsub.s32 2, %v836
        %v838 = vrot.slane %v825, %v837
        %v839 = vlaneseq
        %v840 = vshrl.u32 %v839, 7
        %v841 = vsub.s32 3, %v840
        %v842 = vrot.slane %v825, %v841
        %v843 = vlaneseq
        %v844 = vshrl.u32 %v843, 7
        %v845 = vsub.s32 4, %v844
        %v846 = vrot.slane %v825, %v845
        %v948 = vunpack.c.l.b16 %v729
        %v949 = vunpack.c.h.b16 %v729
        %v950 = vunpack.c.l.b16 %v730
        %v951 = vunpack.c.h.b16 %v730
        %v952 = vunpack.c.l.b16 %v731
        %v953 = vunpack.c.l.b16 %v732
        %v954 = vunpack.c.h.b16 %v732
        %v955 = vunpack.c.l.b16 %v733
        %v956 = vunpack.c.h.b16 %v733
        %v957 = vunpack.c.l.b16 %v734
        %v958 = vunpack.c.l.b16 %v735
        %v959 = vunpack.c.h.b16 %v735
        %v960 = vunpack.c.l.b16 %v736
        %v961 = vunpack.c.h.b16 %v736
        %v962 = vunpack.c.l.b16 %v737
        %v963 = vunpack.c.l.b16 %v738
        %v964 = vunpack.c.h.b16 %v738
        %v965 = vunpack.c.l.b16 %v739
        %v966 = vunpack.c.h.b16 %v739
        %v967 = vunpack.c.l.b16 %v740
        %v968 = vunpack.c.l.b16 %v741
        %v969 = vunpack.c.h.b16 %v741
        %v970 = vunpack.c.l.b16 %v742
        %v971 = vunpack.c.h.b16 %v742
        %v972 = vunpack.c.l.b16 %v743
        %v973 = vunpack.c.l.b16 %v744
        %v974 = vunpack.c.h.b16 %v744
        %v975 = vunpack.c.l.b16 %v745
        %v976 = vunpack.c.h.b16 %v745
        %v977 = vunpack.c.l.b16 %v746
        %v978 = vunpack.c.l.b16 %v747
        %v979 = vunpack.c.h.b16 %v747
        %v980 = vunpack.c.l.b16 %v748
        %v981 = vunpack.c.h.b16 %v748
        %v982 = vunpack.c.l.b16 %v749
        %v983 = vunpack.c.l.b16 %v750
        %v984 = vunpack.c.h.b16 %v750
        %v985 = vunpack.c.l.b16 %v751
        %v986 = vunpack.c.h.b16 %v751
        %v987 = vunpack.c.l.b16 %v752
        %v988 = vunpack.c.l.b16 %v753
        %v989 = vunpack.c.h.b16 %v753
        %v990 = vunpack.c.l.b16 %v754
        %v991 = vunpack.c.h.b16 %v754
        %v992 = vunpack.c.l.b16 %v755
        %v993 = vunpack.c.l.b16 %v756
        %v994 = vunpack.c.h.b16 %v756
        %v995 = vunpack.c.l.b16 %v757
        %v996 = vunpack.c.h.b16 %v757
        %v997 = vunpack.c.l.b16 %v758
        %v998 = vunpack.c.l.b16 %v759
        %v999 = vunpack.c.h.b16 %v759
        %v1000 = vunpack.c.l.b16 %v760
        %v1001 = vunpack.c.h.b16 %v760
        %v1002 = vunpack.c.l.b16 %v761
        %v1003 = vunpack.c.l.b16 %v762
        %v1004 = vunpack.c.h.b16 %v762
        %v1005 = vunpack.c.l.b16 %v763
        %v1006 = vunpack.c.h.b16 %v763
        %v1007 = vunpack.c.l.b16 %v764
        %v1008 = vunpack.c.l.b16 %v765
        %v1009 = vunpack.c.h.b16 %v765
        %v1010 = vunpack.c.l.b16 %v766
        %v1011 = vunpack.c.h.b16 %v766
        %v1012 = vunpack.c.l.b16 %v767
        %v1013 = vunpack.c.l.b16 %v768
        %v1014 = vunpack.c.h.b16 %v768
        %v1015 = vunpack.c.l.b16 %v769
        %v1016 = vunpack.c.h.b16 %v769
        %v1017 = vunpack.c.l.b16 %v770
        %v1018 = vunpack.c.l.b16 %v771
        %v1019 = vunpack.c.h.b16 %v771
        %v1020 = vunpack.c.l.b16 %v772
        %v1021 = vunpack.c.h.b16 %v772
        %v1022 = vunpack.c.l.b16 %v773
        %v1023 = vunpack.c.l.b16 %v774
        %v1024 = vunpack.c.h.b16 %v774
        %v1025 = vunpack.c.l.b16 %v775
        %v1026 = vunpack.c.h.b16 %v775
        %v1027 = vunpack.c.l.b16 %v776
        %v1028 = vunpack.c.l.b16 %v777
        %v1029 = vunpack.c.h.b16 %v777
        %v1030 = vunpack.c.l.b16 %v778
        %v1031 = vunpack.c.h.b16 %v778
        %v1032 = vunpack.c.l.b16 %v779
        %v1033 = vunpack.c.l.b16 %v780
        %v1034 = vunpack.c.h.b16 %v780
        %v1035 = vunpack.c.l.b16 %v781
        %v1036 = vunpack.c.h.b16 %v781
        %v1037 = vunpack.c.l.b16 %v782
        %v1038 = vunpack.c.l.b16 %v783
        %v1039 = vunpack.c.h.b16 %v783
        %v1040 = vunpack.c.l.b16 %v784
        %v1041 = vunpack.c.h.b16 %v784
        %v1042 = vunpack.c.l.b16 %v785
        %v1043 = vunpack.c.l.b16 %v786
        %v1044 = vunpack.c.h.b16 %v786
        %v1045 = vunpack.c.l.b16 %v787
        %v1046 = vunpack.c.h.b16 %v787
        %v1047 = vunpack.c.l.b16 %v788
        %v1048 = vunpack.c.l.b16 %v789
        %v1049 = vunpack.c.h.b16 %v789
        %v1050 = vunpack.c.l.b16 %v790
        %v1051 = vunpack.c.h.b16 %v790
        %v1052 = vunpack.c.l.b16 %v791
        %v1053 = vunpack.c.l.b16 %v792
        %v1054 = vunpack.c.h.b16 %v792
        %v1055 = vunpack.c.l.b16 %v793
        %v1056 = vunpack.c.h.b16 %v793
        %v1057 = vunpack.c.l.b16 %v794
        %v1058 = vunpack.c.l.b16 %v795
        %v1059 = vunpack.c.h.b16 %v795
        %v1060 = vunpack.c.l.b16 %v796
        %v1061 = vunpack.c.h.b16 %v796
        %v1062 = vunpack.c.l.b16 %v797
        %v1063 = vunpack.c.l.b16 %v798
        %v1064 = vunpack.c.h.b16 %v798
        %v1065 = vunpack.c.l.b16 %v799
        %v1066 = vunpack.c.h.b16 %v799
        %v1067 = vunpack.c.l.b16 %v800
        %v1068 = vunpack.c.l.b16 %v801
        %v1069 = vunpack.c.h.b16 %v801
        %v1070 = vunpack.c.l.b16 %v802
        %v1071 = vunpack.c.h.b16 %v802
        %v1072 = vunpack.c.l.b16 %v803
        %v1073 = vunpack.c.l.b16 %v804
        %v1074 = vunpack.c.h.b16 %v804
        %v1075 = vunpack.c.l.b16 %v805
        %v1076 = vunpack.c.h.b16 %v805
        %v1077 = vunpack.c.l.b16 %v806
        %v1078 = vunpack.c.l.b16 %v807
        %v1079 = vunpack.c.h.b16 %v807
        %v1080 = vunpack.c.l.b16 %v808
        %v1081 = vunpack.c.h.b16 %v808
        %v1082 = vunpack.c.l.b16 %v809
        %v1083 = vunpack.c.l.b16 %v810
        %v1084 = vunpack.c.h.b16 %v810
        %v1085 = vunpack.c.l.b16 %v811
        %v1086 = vunpack.c.h.b16 %v811
        %v1087 = vunpack.c.l.b16 %v812
        %v1088 = vunpack.c.l.b16 %v813
        %v1089 = vunpack.c.h.b16 %v813
        %v1090 = vunpack.c.l.b16 %v814
        %v1091 = vunpack.c.h.b16 %v814
        %v1092 = vunpack.c.l.b16 %v815
        %v1093 = vunpack.c.l.b16 %v816
        %v1094 = vunpack.c.h.b16 %v816
        %v1095 = vunpack.c.l.b16 %v817
        %v1096 = vunpack.c.h.b16 %v817
        %v1097 = vunpack.c.l.b16 %v818
        %v1098 = vunpack.c.l.b16 %v819
        %v1099 = vunpack.c.h.b16 %v819
        %v1100 = vunpack.c.l.b16 %v820
        %v1101 = vunpack.c.h.b16 %v820
        %v1102 = vunpack.c.l.b16 %v821
        %v1103 = vunpack.c.l.b16 %v822
        %v1104 = vunpack.c.h.b16 %v822
        %v1105 = vunpack.c.l.b16 %v823
        %v1106 = vunpack.c.h.b16 %v823
        %v1107 = vunpack.c.l.b16 %v824
        %v1108 = vpack.c.b16 %v953, %v948
        %v1109 = vpack.c.b16 %v954, %v949
        %v1110 = vpack.c.b16 %v955, %v950
        %v1111 = vpack.c.b16 %v956, %v951
        %v1112 = vpack.c.b16 %v957, %v952
        %v1113 = vpack.c.b16 %v963, %v958
        %v1114 = vpack.c.b16 %v964, %v959
        %v1115 = vpack.c.b16 %v965, %v960
        %v1116 = vpack.c.b16 %v966, %v961
        %v1117 = vpack.c.b16 %v967, %v962
        %v1118 = vpack.c.b16 %v973, %v968
        %v1119 = vpack.c.b16 %v974, %v969
        %v1120 = vpack.c.b16 %v975, %v970
        %v1121 = vpack.c.b16 %v976, %v971
        %v1122 = vpack.c.b16 %v977, %v972
        %v1123 = vpack.c.b16 %v983, %v978
        %v1124 = vpack.c.b16 %v984, %v979
        %v1125 = vpack.c.b16 %v985, %v980
        %v1126 = vpack.c.b16 %v986, %v981
        %v1127 = vpack.c.b16 %v987, %v982
        %v1128 = vpack.c.b16 %v993, %v988
        %v1129 = vpack.c.b16 %v994, %v989
        %v1130 = vpack.c.b16 %v995, %v990
        %v1131 = vpack.c.b16 %v996, %v991
        %v1132 = vpack.c.b16 %v997, %v992
        %v1133 = vpack.c.b16 %v1003, %v998
        %v1134 = vpack.c.b16 %v1004, %v999
        %v1135 = vpack.c.b16 %v1005, %v1000
        %v1136 = vpack.c.b16 %v1006, %v1001
        %v1137 = vpack.c.b16 %v1007, %v1002
        %v1138 = vpack.c.b16 %v1013, %v1008
        %v1139 = vpack.c.b16 %v1014, %v1009
        %v1140 = vpack.c.b16 %v1015, %v1010
        %v1141 = vpack.c.b16 %v1016, %v1011
        %v1142 = vpack.c.b16 %v1017, %v1012
        %v1143 = vpack.c.b16 %v1023, %v1018
        %v1144 = vpack.c.b16 %v1024, %v1019
        %v1145 = vpack.c.b16 %v1025, %v1020
        %v1146 = vpack.c.b16 %v1026, %v1021
        %v1147 = vpack.c.b16 %v1027, %v1022
        %v1148 = vpack.c.b16 %v1033, %v1028
        %v1149 = vpack.c.b16 %v1034, %v1029
        %v1150 = vpack.c.b16 %v1035, %v1030
        %v1151 = vpack.c.b16 %v1036, %v1031
        %v1152 = vpack.c.b16 %v1037, %v1032
        %v1153 = vpack.c.b16 %v1043, %v1038
        %v1154 = vpack.c.b16 %v1044, %v1039
        %v1155 = vpack.c.b16 %v1045, %v1040
        %v1156 = vpack.c.b16 %v1046, %v1041
        %v1157 = vpack.c.b16 %v1047, %v1042
        %v1158 = vpack.c.b16 %v1053, %v1048
        %v1159 = vpack.c.b16 %v1054, %v1049
        %v1160 = vpack.c.b16 %v1055, %v1050
        %v1161 = vpack.c.b16 %v1056, %v1051
        %v1162 = vpack.c.b16 %v1057, %v1052
        %v1163 = vpack.c.b16 %v1063, %v1058
        %v1164 = vpack.c.b16 %v1064, %v1059
        %v1165 = vpack.c.b16 %v1065, %v1060
        %v1166 = vpack.c.b16 %v1066, %v1061
        %v1167 = vpack.c.b16 %v1067, %v1062
        %v1168 = vpack.c.b16 %v1073, %v1068
        %v1169 = vpack.c.b16 %v1074, %v1069
        %v1170 = vpack.c.b16 %v1075, %v1070
        %v1171 = vpack.c.b16 %v1076, %v1071
        %v1172 = vpack.c.b16 %v1077, %v1072
        %v1173 = vpack.c.b16 %v1083, %v1078
        %v1174 = vpack.c.b16 %v1084, %v1079
        %v1175 = vpack.c.b16 %v1085, %v1080
        %v1176 = vpack.c.b16 %v1086, %v1081
        %v1177 = vpack.c.b16 %v1087, %v1082
        %v1178 = vpack.c.b16 %v1093, %v1088
        %v1179 = vpack.c.b16 %v1094, %v1089
        %v1180 = vpack.c.b16 %v1095, %v1090
        %v1181 = vpack.c.b16 %v1096, %v1091
        %v1182 = vpack.c.b16 %v1097, %v1092
        %v1183 = vpack.c.b16 %v1103, %v1098
        %v1184 = vpack.c.b16 %v1104, %v1099
        %v1185 = vpack.c.b16 %v1105, %v1100
        %v1186 = vpack.c.b16 %v1106, %v1101
        %v1187 = vpack.c.b16 %v1107, %v1102
        %1268 = vmatprep.subr.bf16.mxu0 %v1109
        %1269 = vmatpush1.bf16.msra.mxu0 %v1108
        %1270 = vmatprep.subr.bf16.mxu0 %v1114
        %1271 = vmatpush1.bf16.msra.mxu0 %v1113
        %1272 = vmatprep.subr.bf16.mxu0 %v1119
        %1273 = vmatpush1.bf16.msra.mxu0 %v1118
        %1274 = vmatprep.subr.bf16.mxu0 %v1124
        %1275 = vmatpush1.bf16.msra.mxu0 %v1123
        %1276 = vmatprep.subr.bf16.mxu0 %v1129
        %1277 = vmatpush1.bf16.msra.mxu0 %v1128
        %1278 = vmatprep.subr.bf16.mxu0 %v1134
        %1279 = vmatpush1.bf16.msra.mxu0 %v1133
        %1280 = vmatprep.subr.bf16.mxu0 %v1139
        %1281 = vmatpush1.bf16.msra.mxu0 %v1138
        %1282 = vmatprep.subr.bf16.mxu0 %v1144
        %1283 = vmatpush1.bf16.msra.mxu0 %v1143
        %1284 = vmatprep.subr.bf16.mxu0 %v1149
        %1285 = vmatpush1.bf16.msra.mxu0 %v1148
        %1286 = vmatprep.subr.bf16.mxu0 %v1154
        %1287 = vmatpush1.bf16.msra.mxu0 %v1153
        %1288 = vmatprep.subr.bf16.mxu0 %v1159
        %1289 = vmatpush1.bf16.msra.mxu0 %v1158
        %1290 = vmatprep.subr.bf16.mxu0 %v1164
        %1291 = vmatpush1.bf16.msra.mxu0 %v1163
        %1292 = vmatprep.subr.bf16.mxu0 %v1169
        %1293 = vmatpush1.bf16.msra.mxu0 %v1168
        %1294 = vmatprep.subr.bf16.mxu0 %v1174
        %1295 = vmatpush1.bf16.msra.mxu0 %v1173
        %1296 = vmatprep.subr.bf16.mxu0 %v1179
        %1297 = vmatpush1.bf16.msra.mxu0 %v1178
        %1298 = vmatprep.subr.bf16.mxu0 %v1184
        %1299 = vmatpush1.bf16.msra.mxu0 %v1183
        %1300 = vmatprep.mubr.bf16.mxu0 %v714
        %1301 = vmatmul.mubr.bf16.gmra.mrb[0].mxu0 %v713
        %v1302 = vpop.f32.mrb[0].mxu0
        %v1303 = vadd.f32 %v830, %v1302
        %v1304 = vpop.f32.mrb[0].mxu0
        %v1305 = vadd.f32 %v834, %v1304
        %v1306 = vpop.f32.mrb[0].mxu0
        %v1307 = vadd.f32 %v830, %v1306
        %v1308 = vpop.f32.mrb[0].mxu0
        %v1309 = vadd.f32 %v834, %v1308
        %1310 = vmatprep.mubr.bf16.mxu0 %v716
        %1311 = vmatmul.mubr.bf16.gmra.mrb[0].mxu0 %v715
        %v1312 = vpop.f32.mrb[0].mxu0
        %v1313 = vadd.f32 %v830, %v1312
        %v1314 = vpop.f32.mrb[0].mxu0
        %v1315 = vadd.f32 %v834, %v1314
        %v1316 = vpop.f32.mrb[0].mxu0
        %v1317 = vadd.f32 %v830, %v1316
        %v1318 = vpop.f32.mrb[0].mxu0
        %v1319 = vadd.f32 %v834, %v1318
        %1320 = vmatprep.mubr.bf16.mxu0 %v718
        %1321 = vmatmul.mubr.bf16.gmra.mrb[0].mxu0 %v717
        %v1322 = vpop.f32.mrb[0].mxu0
        %v1323 = vadd.f32 %v830, %v1322
        %v1324 = vpop.f32.mrb[0].mxu0
        %v1325 = vadd.f32 %v834, %v1324
        %v1326 = vpop.f32.mrb[0].mxu0
        %v1327 = vadd.f32 %v830, %v1326
        %v1328 = vpop.f32.mrb[0].mxu0
        %v1329 = vadd.f32 %v834, %v1328
        %1330 = vmatprep.mubr.bf16.mxu0 %v720
        %1331 = vmatmul.mubr.bf16.gmra.mrb[0].mxu0 %v719
        %v1332 = vpop.f32.mrb[0].mxu0
        %v1333 = vadd.f32 %v830, %v1332
        %v1334 = vpop.f32.mrb[0].mxu0
        %v1335 = vadd.f32 %v834, %v1334
        %v1336 = vpop.f32.mrb[0].mxu0
        %v1337 = vadd.f32 %v830, %v1336
        %v1338 = vpop.f32.mrb[0].mxu0
        %v1339 = vadd.f32 %v834, %v1338
        %1340 = vmatprep.mubr.bf16.mxu0 %v722
        %1341 = vmatmul.mubr.bf16.gmra.mrb[0].mxu0 %v721
        %v1342 = vpop.f32.mrb[0].mxu0
        %v1343 = vadd.f32 %v830, %v1342
        %v1344 = vpop.f32.mrb[0].mxu0
        %v1345 = vadd.f32 %v834, %v1344
        %v1346 = vpop.f32.mrb[0].mxu0
        %v1347 = vadd.f32 %v830, %v1346
        %v1348 = vpop.f32.mrb[0].mxu0
        %v1349 = vadd.f32 %v834, %v1348
        %1350 = vmatprep.mubr.bf16.mxu0 %v724
        %1351 = vmatmul.mubr.bf16.gmra.mrb[0].mxu0 %v723
        %v1352 = vpop.f32.mrb[0].mxu0
        %v1353 = vadd.f32 %v830, %v1352
        %v1354 = vpop.f32.mrb[0].mxu0
        %v1355 = vadd.f32 %v834, %v1354
        %v1356 = vpop.f32.mrb[0].mxu0
        %v1357 = vadd.f32 %v830, %v1356
        %v1358 = vpop.f32.mrb[0].mxu0
        %v1359 = vadd.f32 %v834, %v1358
        %1360 = vmatprep.mubr.bf16.mxu0 %v726
        %1361 = vmatmul.mubr.bf16.gmra.mrb[0].mxu0 %v725
        %v1362 = vpop.f32.mrb[0].mxu0
        %v1363 = vadd.f32 %v830, %v1362
        %v1364 = vpop.f32.mrb[0].mxu0
        %v1365 = vadd.f32 %v834, %v1364
        %v1366 = vpop.f32.mrb[0].mxu0
        %v1367 = vadd.f32 %v830, %v1366
        %v1368 = vpop.f32.mrb[0].mxu0
        %v1369 = vadd.f32 %v834, %v1368
        %1370 = vmatprep.mubr.bf16.mxu0 %v728
        %1371 = vmatmul.mubr.bf16.gmra.mrb[0].mxu0 %v727
        %v1372 = vpop.f32.mrb[0].mxu0
        %v1373 = vadd.f32 %v830, %v1372
        %v1374 = vpop.f32.mrb[0].mxu0
        %v1375 = vadd.f32 %v834, %v1374
        %v1376 = vpop.f32.mrb[0].mxu0
        %v1377 = vadd.f32 %v830, %v1376
        %v1378 = vpop.f32.mrb[0].mxu0
        %v1379 = vadd.f32 %v834, %v1378
        %1380 = vdwg.mxu0
        %1381 = vmatprep.subr.bf16.mxu0 %v1111
        %1382 = vmatpush1.bf16.msra.mxu0 %v1110
        %1383 = vmatprep.subr.bf16.mxu0 %v1116
        %1384 = vmatpush1.bf16.msra.mxu0 %v1115
        %1385 = vmatprep.subr.bf16.mxu0 %v1121
        %1386 = vmatpush1.bf16.msra.mxu0 %v1120
        %1387 = vmatprep.subr.bf16.mxu0 %v1126
        %1388 = vmatpush1.bf16.msra.mxu0 %v1125
        %1389 = vmatprep.subr.bf16.mxu0 %v1131
        %1390 = vmatpush1.bf16.msra.mxu0 %v1130
        %1391 = vmatprep.subr.bf16.mxu0 %v1136
        %1392 = vmatpush1.bf16.msra.mxu0 %v1135
        %1393 = vmatprep.subr.bf16.mxu0 %v1141
        %1394 = vmatpush1.bf16.msra.mxu0 %v1140
        %1395 = vmatprep.subr.bf16.mxu0 %v1146
        %1396 = vmatpush1.bf16.msra.mxu0 %v1145
        %1397 = vmatprep.subr.bf16.mxu0 %v1151
        %1398 = vmatpush1.bf16.msra.mxu0 %v1150
        %1399 = vmatprep.subr.bf16.mxu0 %v1156
        %1400 = vmatpush1.bf16.msra.mxu0 %v1155
        %1401 = vmatprep.subr.bf16.mxu0 %v1161
        %1402 = vmatpush1.bf16.msra.mxu0 %v1160
        %1403 = vmatprep.subr.bf16.mxu0 %v1166
        %1404 = vmatpush1.bf16.msra.mxu0 %v1165
        %1405 = vmatprep.subr.bf16.mxu0 %v1171
        %1406 = vmatpush1.bf16.msra.mxu0 %v1170
        %1407 = vmatprep.subr.bf16.mxu0 %v1176
        %1408 = vmatpush1.bf16.msra.mxu0 %v1175
        %1409 = vmatprep.subr.bf16.mxu0 %v1181
        %1410 = vmatpush1.bf16.msra.mxu0 %v1180
        %1411 = vmatprep.subr.bf16.mxu0 %v1186
        %1412 = vmatpush1.bf16.msra.mxu0 %v1185
        %1413 = vmatprep.mubr.bf16.mxu0 %v714
        %1414 = vmatmul.mubr.bf16.gmra.mrb[0].mxu0 %v713
        %v1415 = vpop.f32.mrb[0].mxu0
        %v1416 = vadd.f32 %v838, %v1415
        %v1417 = vpop.f32.mrb[0].mxu0
        %v1418 = vadd.f32 %v842, %v1417
        %v1419 = vpop.f32.mrb[0].mxu0
        %v1420 = vadd.f32 %v838, %v1419
        %v1421 = vpop.f32.mrb[0].mxu0
        %v1422 = vadd.f32 %v842, %v1421
        %1423 = vmatprep.mubr.bf16.mxu0 %v716
        %1424 = vmatmul.mubr.bf16.gmra.mrb[0].mxu0 %v715
        %v1425 = vpop.f32.mrb[0].mxu0
        %v1426 = vadd.f32 %v838, %v1425
        %v1427 = vpop.f32.mrb[0].mxu0
        %v1428 = vadd.f32 %v842, %v1427
        %v1429 = vpop.f32.mrb[0].mxu0
        %v1430 = vadd.f32 %v838, %v1429
        %v1431 = vpop.f32.mrb[0].mxu0
        %v1432 = vadd.f32 %v842, %v1431
        %1433 = vmatprep.mubr.bf16.mxu0 %v718
        %1434 = vmatmul.mubr.bf16.gmra.mrb[0].mxu0 %v717
        %v1435 = vpop.f32.mrb[0].mxu0
        %v1436 = vadd.f32 %v838, %v1435
        %v1437 = vpop.f32.mrb[0].mxu0
        %v1438 = vadd.f32 %v842, %v1437
        %v1439 = vpop.f32.mrb[0].mxu0
        %v1440 = vadd.f32 %v838, %v1439
        %v1441 = vpop.f32.mrb[0].mxu0
        %v1442 = vadd.f32 %v842, %v1441
        %1443 = vmatprep.mubr.bf16.mxu0 %v720
        %1444 = vmatmul.mubr.bf16.gmra.mrb[0].mxu0 %v719
        %v1445 = vpop.f32.mrb[0].mxu0
        %v1446 = vadd.f32 %v838, %v1445
        %v1447 = vpop.f32.mrb[0].mxu0
        %v1448 = vadd.f32 %v842, %v1447
        %v1449 = vpop.f32.mrb[0].mxu0
        %v1450 = vadd.f32 %v838, %v1449
        %v1451 = vpop.f32.mrb[0].mxu0
        %v1452 = vadd.f32 %v842, %v1451
        %1453 = vmatprep.mubr.bf16.mxu0 %v722
        %1454 = vmatmul.mubr.bf16.gmra.mrb[0].mxu0 %v721
        %v1455 = vpop.f32.mrb[0].mxu0
        %v1456 = vadd.f32 %v838, %v1455
        %v1457 = vpop.f32.mrb[0].mxu0
        %v1458 = vadd.f32 %v842, %v1457
        %v1459 = vpop.f32.mrb[0].mxu0
        %v1460 = vadd.f32 %v838, %v1459
        %v1461 = vpop.f32.mrb[0].mxu0
        %v1462 = vadd.f32 %v842, %v1461
        %1463 = vmatprep.mubr.bf16.mxu0 %v724
        %1464 = vmatmul.mubr.bf16.gmra.mrb[0].mxu0 %v723
        %v1465 = vpop.f32.mrb[0].mxu0
        %v1466 = vadd.f32 %v838, %v1465
        %v1467 = vpop.f32.mrb[0].mxu0
        %v1468 = vadd.f32 %v842, %v1467
        %v1469 = vpop.f32.mrb[0].mxu0
        %v1470 = vadd.f32 %v838, %v1469
        %v1471 = vpop.f32.mrb[0].mxu0
        %v1472 = vadd.f32 %v842, %v1471
        %1473 = vmatprep.mubr.bf16.mxu0 %v726
        %1474 = vmatmul.mubr.bf16.gmra.mrb[0].mxu0 %v725
        %v1475 = vpop.f32.mrb[0].mxu0
        %v1476 = vadd.f32 %v838, %v1475
        %v1477 = vpop.f32.mrb[0].mxu0
        %v1478 = vadd.f32 %v842, %v1477
        %v1479 = vpop.f32.mrb[0].mxu0
        %v1480 = vadd.f32 %v838, %v1479
        %v1481 = vpop.f32.mrb[0].mxu0
        %v1482 = vadd.f32 %v842, %v1481
        %1483 = vmatprep.mubr.bf16.mxu0 %v728
        %1484 = vmatmul.mubr.bf16.gmra.mrb[0].mxu0 %v727
        %v1485 = vpop.f32.mrb[0].mxu0
        %v1486 = vadd.f32 %v838, %v1485
        %v1487 = vpop.f32.mrb[0].mxu0
        %v1488 = vadd.f32 %v842, %v1487
        %v1489 = vpop.f32.mrb[0].mxu0
        %v1490 = vadd.f32 %v838, %v1489
        %v1491 = vpop.f32.mrb[0].mxu0
        %v1492 = vadd.f32 %v842, %v1491
        %1493 = vdwg.mxu0
        %1494 = vmatprep.subr.bf16.mxu0 0
        %1495 = vmatpush1.bf16.msra.mxu0 %v1112
        %1496 = vmatprep.subr.bf16.mxu0 0
        %1497 = vmatpush1.bf16.msra.mxu0 %v1117
        %1498 = vmatprep.subr.bf16.mxu0 0
        %1499 = vmatpush1.bf16.msra.mxu0 %v1122
        %1500 = vmatprep.subr.bf16.mxu0 0
        %1501 = vmatpush1.bf16.msra.mxu0 %v1127
        %1502 = vmatprep.subr.bf16.mxu0 0
        %1503 = vmatpush1.bf16.msra.mxu0 %v1132
        %1504 = vmatprep.subr.bf16.mxu0 0
        %1505 = vmatpush1.bf16.msra.mxu0 %v1137
        %1506 = vmatprep.subr.bf16.mxu0 0
        %1507 = vmatpush1.bf16.msra.mxu0 %v1142
        %1508 = vmatprep.subr.bf16.mxu0 0
        %1509 = vmatpush1.bf16.msra.mxu0 %v1147
        %1510 = vmatprep.subr.bf16.mxu0 0
        %1511 = vmatpush1.bf16.msra.mxu0 %v1152
        %1512 = vmatprep.subr.bf16.mxu0 0
        %1513 = vmatpush1.bf16.msra.mxu0 %v1157
        %1514 = vmatprep.subr.bf16.mxu0 0
        %1515 = vmatpush1.bf16.msra.mxu0 %v1162
        %1516 = vmatprep.subr.bf16.mxu0 0
        %1517 = vmatpush1.bf16.msra.mxu0 %v1167
        %1518 = vmatprep.subr.bf16.mxu0 0
        %1519 = vmatpush1.bf16.msra.mxu0 %v1172
        %1520 = vmatprep.subr.bf16.mxu0 0
        %1521 = vmatpush1.bf16.msra.mxu0 %v1177
        %1522 = vmatprep.subr.bf16.mxu0 0
        %1523 = vmatpush1.bf16.msra.mxu0 %v1182
        %1524 = vmatprep.subr.bf16.mxu0 0
        %1525 = vmatpush1.bf16.msra.mxu0 %v1187
        %1526 = vmatprep.mubr.bf16.mxu0 %v714
        %1527 = vmatmul.mubr.bf16.gmra.mrb[0].mxu0 %v713
        %v1528 = vpop.f32.mrb[0].mxu0
        %v1529 = vadd.f32 %v846, %v1528
        %v1530 = vpop.f32.mrb[0].mxu0
        %v1531 = vpop.f32.mrb[0].mxu0
        %v1532 = vadd.f32 %v846, %v1531
        %v1533 = vpop.f32.mrb[0].mxu0
        %1534 = vmatprep.mubr.bf16.mxu0 %v716
        %1535 = vmatmul.mubr.bf16.gmra.mrb[0].mxu0 %v715
        %v1536 = vpop.f32.mrb[0].mxu0
        %v1537 = vadd.f32 %v846, %v1536
        %v1538 = vpop.f32.mrb[0].mxu0
        %v1539 = vpop.f32.mrb[0].mxu0
        %v1540 = vadd.f32 %v846, %v1539
        %v1541 = vpop.f32.mrb[0].mxu0
        %1542 = vmatprep.mubr.bf16.mxu0 %v718
        %1543 = vmatmul.mubr.bf16.gmra.mrb[0].mxu0 %v717
        %v1544 = vpop.f32.mrb[0].mxu0
        %v1545 = vadd.f32 %v846, %v1544
        %v1546 = vpop.f32.mrb[0].mxu0
        %v1547 = vpop.f32.mrb[0].mxu0
        %v1548 = vadd.f32 %v846, %v1547
        %v1549 = vpop.f32.mrb[0].mxu0
        %1550 = vmatprep.mubr.bf16.mxu0 %v720
        %1551 = vmatmul.mubr.bf16.gmra.mrb[0].mxu0 %v719
        %v1552 = vpop.f32.mrb[0].mxu0
        %v1553 = vadd.f32 %v846, %v1552
        %v1554 = vpop.f32.mrb[0].mxu0
        %v1555 = vpop.f32.mrb[0].mxu0
        %v1556 = vadd.f32 %v846, %v1555
        %v1557 = vpop.f32.mrb[0].mxu0
        %1558 = vmatprep.mubr.bf16.mxu0 %v722
        %1559 = vmatmul.mubr.bf16.gmra.mrb[0].mxu0 %v721
        %v1560 = vpop.f32.mrb[0].mxu0
        %v1561 = vadd.f32 %v846, %v1560
        %v1562 = vpop.f32.mrb[0].mxu0
        %v1563 = vpop.f32.mrb[0].mxu0
        %v1564 = vadd.f32 %v846, %v1563
        %v1565 = vpop.f32.mrb[0].mxu0
        %1566 = vmatprep.mubr.bf16.mxu0 %v724
        %1567 = vmatmul.mubr.bf16.gmra.mrb[0].mxu0 %v723
        %v1568 = vpop.f32.mrb[0].mxu0
        %v1569 = vadd.f32 %v846, %v1568
        %v1570 = vpop.f32.mrb[0].mxu0
        %v1571 = vpop.f32.mrb[0].mxu0
        %v1572 = vadd.f32 %v846, %v1571
        %v1573 = vpop.f32.mrb[0].mxu0
        %1574 = vmatprep.mubr.bf16.mxu0 %v726
        %1575 = vmatmul.mubr.bf16.gmra.mrb[0].mxu0 %v725
        %v1576 = vpop.f32.mrb[0].mxu0
        %v1577 = vadd.f32 %v846, %v1576
        %v1578 = vpop.f32.mrb[0].mxu0
        %v1579 = vpop.f32.mrb[0].mxu0
        %v1580 = vadd.f32 %v846, %v1579
        %v1581 = vpop.f32.mrb[0].mxu0
        %1582 = vmatprep.mubr.bf16.mxu0 %v728
        %1583 = vmatmul.mubr.bf16.gmra.mrb[0].mxu0 %v727
        %v1584 = vpop.f32.mrb[0].mxu0
        %v1585 = vadd.f32 %v846, %v1584
        %v1586 = vpop.f32.mrb[0].mxu0
        %v1587 = vpop.f32.mrb[0].mxu0
        %v1588 = vadd.f32 %v846, %v1587
        %v1589 = vpop.f32.mrb[0].mxu0
        %1590 = vdwg.mxu0
        %v1591 = vtanh.pop %v1303
        %v1592 = vtanh.pop %v1305
        %v1593 = vtanh.pop %v1416
        %v1594 = vtanh.pop %v1418
        %v1595 = vtanh.pop %v1529
        %v1596 = vtanh.pop %v1307
        %v1597 = vtanh.pop %v1309
        %v1598 = vtanh.pop %v1420
        %v1599 = vtanh.pop %v1422
        %v1600 = vtanh.pop %v1532
        %v1601 = vtanh.pop %v1313
        %v1602 = vtanh.pop %v1315
        %v1603 = vtanh.pop %v1426
        %v1604 = vtanh.pop %v1428
        %v1605 = vtanh.pop %v1537
        %v1606 = vtanh.pop %v1317
        %v1607 = vtanh.pop %v1319
        %v1608 = vtanh.pop %v1430
        %v1609 = vtanh.pop %v1432
        %v1610 = vtanh.pop %v1540
        %v1611 = vtanh.pop %v1323
        %v1612 = vtanh.pop %v1325
        %v1613 = vtanh.pop %v1436
        %v1614 = vtanh.pop %v1438
        %v1615 = vtanh.pop %v1545
        %v1616 = vtanh.pop %v1327
        %v1617 = vtanh.pop %v1329
        %v1618 = vtanh.pop %v1440
        %v1619 = vtanh.pop %v1442
        %v1620 = vtanh.pop %v1548
        %v1621 = vtanh.pop %v1333
        %v1622 = vtanh.pop %v1335
        %v1623 = vtanh.pop %v1446
        %v1624 = vtanh.pop %v1448
        %v1625 = vtanh.pop %v1553
        %v1626 = vtanh.pop %v1337
        %v1627 = vtanh.pop %v1339
        %v1628 = vtanh.pop %v1450
        %v1629 = vtanh.pop %v1452
        %v1630 = vtanh.pop %v1556
        %v1631 = vtanh.pop %v1343
        %v1632 = vtanh.pop %v1345
        %v1633 = vtanh.pop %v1456
        %v1634 = vtanh.pop %v1458
        %v1635 = vtanh.pop %v1561
        %v1636 = vtanh.pop %v1347
        %v1637 = vtanh.pop %v1349
        %v1638 = vtanh.pop %v1460
        %v1639 = vtanh.pop %v1462
        %v1640 = vtanh.pop %v1564
        %v1641 = vtanh.pop %v1353
        %v1642 = vtanh.pop %v1355
        %v1643 = vtanh.pop %v1466
        %v1644 = vtanh.pop %v1468
        %v1645 = vtanh.pop %v1569
        %v1646 = vtanh.pop %v1357
        %v1647 = vtanh.pop %v1359
        %v1648 = vtanh.pop %v1470
        %v1649 = vtanh.pop %v1472
        %v1650 = vtanh.pop %v1572
        %v1651 = vtanh.pop %v1363
        %v1652 = vtanh.pop %v1365
        %v1653 = vtanh.pop %v1476
        %v1654 = vtanh.pop %v1478
        %v1655 = vtanh.pop %v1577
        %v1656 = vtanh.pop %v1367
        %v1657 = vtanh.pop %v1369
        %v1658 = vtanh.pop %v1480
        %v1659 = vtanh.pop %v1482
        %v1660 = vtanh.pop %v1580
        %v1661 = vtanh.pop %v1373
        %v1662 = vtanh.pop %v1375
        %v1663 = vtanh.pop %v1486
        %v1664 = vtanh.pop %v1488
        %v1665 = vtanh.pop %v1585
        %v1666 = vtanh.pop %v1377
        %v1667 = vtanh.pop %v1379
        %v1668 = vtanh.pop %v1490
        %v1669 = vtanh.pop %v1492
        %v1670 = vtanh.pop %v1588
        %v1671 = vpack.c.bf16 %v1596, %v1591
        %v1672 = vpack.c.bf16 %v1597, %v1592
        %v1673 = vpack.c.bf16 %v1598, %v1593
        %v1674 = vpack.c.bf16 %v1599, %v1594
        %v1675 = vpack.c.bf16 %v1600, %v1595
        %v1676 = vpack.c.bf16 %v1606, %v1601
        %v1677 = vpack.c.bf16 %v1607, %v1602
        %v1678 = vpack.c.bf16 %v1608, %v1603
        %v1679 = vpack.c.bf16 %v1609, %v1604
        %v1680 = vpack.c.bf16 %v1610, %v1605
        %v1681 = vpack.c.bf16 %v1616, %v1611
        %v1682 = vpack.c.bf16 %v1617, %v1612
        %v1683 = vpack.c.bf16 %v1618, %v1613
        %v1684 = vpack.c.bf16 %v1619, %v1614
        %v1685 = vpack.c.bf16 %v1620, %v1615
        %v1686 = vpack.c.bf16 %v1626, %v1621
        %v1687 = vpack.c.bf16 %v1627, %v1622
        %v1688 = vpack.c.bf16 %v1628, %v1623
        %v1689 = vpack.c.bf16 %v1629, %v1624
        %v1690 = vpack.c.bf16 %v1630, %v1625
        %v1691 = vpack.c.bf16 %v1636, %v1631
        %v1692 = vpack.c.bf16 %v1637, %v1632
        %v1693 = vpack.c.bf16 %v1638, %v1633
        %v1694 = vpack.c.bf16 %v1639, %v1634
        %v1695 = vpack.c.bf16 %v1640, %v1635
        %v1696 = vpack.c.bf16 %v1646, %v1641
        %v1697 = vpack.c.bf16 %v1647, %v1642
        %v1698 = vpack.c.bf16 %v1648, %v1643
        %v1699 = vpack.c.bf16 %v1649, %v1644
        %v1700 = vpack.c.bf16 %v1650, %v1645
        %v1701 = vpack.c.bf16 %v1656, %v1651
        %v1702 = vpack.c.bf16 %v1657, %v1652
        %v1703 = vpack.c.bf16 %v1658, %v1653
        %v1704 = vpack.c.bf16 %v1659, %v1654
        %v1705 = vpack.c.bf16 %v1660, %v1655
        %v1706 = vpack.c.bf16 %v1666, %v1661
        %v1707 = vpack.c.bf16 %v1667, %v1662
        %v1708 = vpack.c.bf16 %v1668, %v1663
        %v1709 = vpack.c.bf16 %v1669, %v1664
        %v1710 = vpack.c.bf16 %v1670, %v1665
        %v1711 = vld [vmem:[#allocation8] sm:$0xff]
        %v1712 = vld [vmem:[#allocation8 + $0x8] sm:$0xff]
        %v1713 = vld [vmem:[#allocation8 + $0x10] sm:$0xff]
        %v1714 = vld [vmem:[#allocation8 + $0x18] sm:$0xff]
        %v1715 = vld [vmem:[#allocation8 + $0x20] sm:$0xff]
        %v1716 = vld [vmem:[#allocation8 + $0x28] sm:$0xff]
        %v1717 = vld [vmem:[#allocation8 + $0x30] sm:$0xff]
        %v1718 = vld [vmem:[#allocation8 + $0x38] sm:$0xff]
        %v1719 = vld [vmem:[#allocation8 + $0x40] sm:$0xff]
        %v1720 = vld [vmem:[#allocation8 + $0x48] sm:$0xff]
        %v1721 = vld [vmem:[#allocation8 + $0x50] sm:$0xff]
        %v1722 = vld [vmem:[#allocation8 + $0x58] sm:$0xff]
        %v1723 = vld [vmem:[#allocation8 + $0x60] sm:$0xff]
        %v1724 = vld [vmem:[#allocation8 + $0x68] sm:$0xff]
        %v1725 = vld [vmem:[#allocation8 + $0x70] sm:$0xff]
        %v1726 = vld [vmem:[#allocation8 + $0x78] sm:$0xff]
        %v1727 = vld [vmem:[#allocation8 + $0x80] sm:$0xff]
        %v1728 = vld [vmem:[#allocation8 + $0x88] sm:$0xff]
        %v1729 = vld [vmem:[#allocation8 + $0x90] sm:$0xff]
        %v1730 = vld [vmem:[#allocation8 + $0x98] sm:$0xff]
        %v1731 = vld [vmem:[#allocation8 + $0xa0] sm:$0xff]
        %v1732 = vld [vmem:[#allocation8 + $0xa8] sm:$0xff]
        %v1733 = vld [vmem:[#allocation8 + $0xb0] sm:$0xff]
        %v1734 = vld [vmem:[#allocation8 + $0xb8] sm:$0xff]
        %v1735 = vld [vmem:[#allocation8 + $0xc0] sm:$0xff]
        %v1736 = vld [vmem:[#allocation8 + $0xc8] sm:$0xff]
        %v1737 = vld [vmem:[#allocation8 + $0xd0] sm:$0xff]
        %v1738 = vld [vmem:[#allocation8 + $0xd8] sm:$0xff]
        %v1739 = vld [vmem:[#allocation8 + $0xe0] sm:$0xff]
        %v1740 = vld [vmem:[#allocation8 + $0xe8] sm:$0xff]
        %v1741 = vld [vmem:[#allocation8 + $0xf0] sm:$0xff]
        %v1742 = vld [vmem:[#allocation8 + $0xf8] sm:$0xff]
        %v1743 = vld [vmem:[#allocation8 + $0x100] sm:$0xff]
        %v1744 = vld [vmem:[#allocation8 + $0x108] sm:$0xff]
        %v1745 = vld [vmem:[#allocation8 + $0x110] sm:$0xff]
        %v1746 = vld [vmem:[#allocation8 + $0x118] sm:$0xff]
        %v1747 = vld [vmem:[#allocation8 + $0x120] sm:$0xff]
        %v1748 = vld [vmem:[#allocation8 + $0x128] sm:$0xff]
        %v1749 = vld [vmem:[#allocation8 + $0x130] sm:$0xff]
        %v1750 = vld [vmem:[#allocation8 + $0x138] sm:$0xff]
        %v1751 = vld [vmem:[#allocation8 + $0x140] sm:$0xff]
        %v1752 = vld [vmem:[#allocation8 + $0x148] sm:$0xff]
        %v1753 = vld [vmem:[#allocation8 + $0x150] sm:$0xff]
        %v1754 = vld [vmem:[#allocation8 + $0x158] sm:$0xff]
        %v1755 = vld [vmem:[#allocation8 + $0x160] sm:$0xff]
        %v1756 = vld [vmem:[#allocation8 + $0x168] sm:$0xff]
        %v1757 = vld [vmem:[#allocation8 + $0x170] sm:$0xff]
        %v1758 = vld [vmem:[#allocation8 + $0x178] sm:$0xff]
        %v1759 = vld [vmem:[#allocation8 + $0x180] sm:$0xff]
        %v1760 = vld [vmem:[#allocation8 + $0x188] sm:$0xff]
        %v1761 = vld [vmem:[#allocation8 + $0x190] sm:$0xff]
        %v1762 = vld [vmem:[#allocation8 + $0x198] sm:$0xff]
        %v1763 = vld [vmem:[#allocation8 + $0x1a0] sm:$0xff]
        %v1764 = vld [vmem:[#allocation8 + $0x1a8] sm:$0xff]
        %v1765 = vld [vmem:[#allocation8 + $0x1b0] sm:$0xff]
        %v1766 = vld [vmem:[#allocation8 + $0x1b8] sm:$0xff]
        %v1767 = vld [vmem:[#allocation8 + $0x1c0] sm:$0xff]
        %v1768 = vld [vmem:[#allocation8 + $0x1c8] sm:$0xff]
        %v1769 = vld [vmem:[#allocation8 + $0x1d0] sm:$0xff]
        %v1770 = vld [vmem:[#allocation8 + $0x1d8] sm:$0xff]
        %v1771 = vld [vmem:[#allocation8 + $0x1e0] sm:$0xff]
        %v1772 = vld [vmem:[#allocation8 + $0x1e8] sm:$0xff]
        %v1773 = vld [vmem:[#allocation8 + $0x1f0] sm:$0xff]
        %v1774 = vld [vmem:[#allocation8 + $0x1f8] sm:$0xff]
        %v1775 = vld [vmem:[#allocation8 + $0x200] sm:$0xff]
        %v1776 = vld [vmem:[#allocation8 + $0x208] sm:$0xff]
        %v1777 = vld [vmem:[#allocation8 + $0x210] sm:$0xff]
        %v1778 = vld [vmem:[#allocation8 + $0x218] sm:$0xff]
        %v1779 = vld [vmem:[#allocation8 + $0x220] sm:$0xff]
        %v1780 = vld [vmem:[#allocation8 + $0x228] sm:$0xff]
        %v1781 = vld [vmem:[#allocation8 + $0x230] sm:$0xff]
        %v1782 = vld [vmem:[#allocation8 + $0x238] sm:$0xff]
        %v1783 = vld [vmem:[#allocation8 + $0x240] sm:$0xff]
        %v1784 = vld [vmem:[#allocation8 + $0x248] sm:$0xff]
        %v1785 = vld [vmem:[#allocation8 + $0x250] sm:$0xff]
        %v1786 = vld [vmem:[#allocation8 + $0x258] sm:$0xff]
        %v1787 = vld [vmem:[#allocation8 + $0x260] sm:$0xff]
        %v1788 = vld [vmem:[#allocation8 + $0x268] sm:$0xff]
        %v1789 = vld [vmem:[#allocation8 + $0x270] sm:$0xff]
        %v1790 = vld [vmem:[#allocation8 + $0x278] sm:$0xff]
        %v1791 = vld [vmem:[#allocation8 + $0x280] sm:$0xff]
        %v1792 = vld [vmem:[#allocation8 + $0x288] sm:$0xff]
        %v1793 = vld [vmem:[#allocation8 + $0x290] sm:$0xff]
        %v1794 = vld [vmem:[#allocation8 + $0x298] sm:$0xff]
        %v1795 = vld [vmem:[#allocation8 + $0x2a0] sm:$0xff]
        %v1796 = vld [vmem:[#allocation8 + $0x2a8] sm:$0xff]
        %v1797 = vld [vmem:[#allocation8 + $0x2b0] sm:$0xff]
        %v1798 = vld [vmem:[#allocation8 + $0x2b8] sm:$0xff]
        %v1799 = vld [vmem:[#allocation8 + $0x2c0] sm:$0xff]
        %v1800 = vld [vmem:[#allocation8 + $0x2c8] sm:$0xff]
        %v1801 = vld [vmem:[#allocation8 + $0x2d0] sm:$0xff]
        %v1802 = vld [vmem:[#allocation8 + $0x2d8] sm:$0xff]
        %v1803 = vld [vmem:[#allocation8 + $0x2e0] sm:$0xff]
        %v1804 = vld [vmem:[#allocation8 + $0x2e8] sm:$0xff]
        %v1805 = vld [vmem:[#allocation8 + $0x2f0] sm:$0xff]
        %v1806 = vld [vmem:[#allocation8 + $0x2f8] sm:$0xff]
        %v1807 = vld [vmem:[#allocation8 + $0x300] sm:$0xff]
        %v1808 = vld [vmem:[#allocation8 + $0x308] sm:$0xff]
        %v1809 = vld [vmem:[#allocation8 + $0x310] sm:$0xff]
        %v1810 = vld [vmem:[#allocation8 + $0x318] sm:$0xff]
        %v1811 = vld [vmem:[#allocation8 + $0x320] sm:$0xff]
        %v1812 = vld [vmem:[#allocation8 + $0x328] sm:$0xff]
        %v1813 = vld [vmem:[#allocation8 + $0x330] sm:$0xff]
        %v1814 = vld [vmem:[#allocation8 + $0x338] sm:$0xff]
        %v1815 = vld [vmem:[#allocation8 + $0x340] sm:$0xff]
        %v1816 = vld [vmem:[#allocation8 + $0x348] sm:$0xff]
        %v1817 = vld [vmem:[#allocation8 + $0x350] sm:$0xff]
        %v1818 = vld [vmem:[#allocation8 + $0x358] sm:$0xff]
        %v1819 = vld [vmem:[#allocation8 + $0x360] sm:$0xff]
        %v1820 = vld [vmem:[#allocation8 + $0x368] sm:$0xff]
        %v1821 = vld [vmem:[#allocation8 + $0x370] sm:$0xff]
        %v1822 = vld [vmem:[#allocation8 + $0x378] sm:$0xff]
        %v1823 = vld [vmem:[#allocation8 + $0x380] sm:$0xff]
        %v1824 = vld [vmem:[#allocation8 + $0x388] sm:$0xff]
        %v1825 = vld [vmem:[#allocation8 + $0x390] sm:$0xff]
        %v1826 = vld [vmem:[#allocation8 + $0x398] sm:$0xff]
        %v1827 = vld [vmem:[#allocation8 + $0x3a0] sm:$0xff]
        %v1828 = vld [vmem:[#allocation8 + $0x3a8] sm:$0xff]
        %v1829 = vld [vmem:[#allocation8 + $0x3b0] sm:$0xff]
        %v1830 = vld [vmem:[#allocation8 + $0x3b8] sm:$0xff]
        %v1831 = vld [vmem:[#allocation8 + $0x3c0] sm:$0xff]
        %v1832 = vld [vmem:[#allocation8 + $0x3c8] sm:$0xff]
        %v1833 = vld [vmem:[#allocation8 + $0x3d0] sm:$0xff]
        %v1834 = vld [vmem:[#allocation8 + $0x3d8] sm:$0xff]
        %v1835 = vld [vmem:[#allocation8 + $0x3e0] sm:$0xff]
        %v1836 = vld [vmem:[#allocation8 + $0x3e8] sm:$0xff]
        %v1837 = vld [vmem:[#allocation8 + $0x3f0] sm:$0xff]
        %v1838 = vld [vmem:[#allocation8 + $0x3f8] sm:$0xff]
        %v1839 = vld [vmem:[#allocation8 + $0x400] sm:$0xff]
        %v1840 = vld [vmem:[#allocation8 + $0x408] sm:$0xff]
        %v1841 = vld [vmem:[#allocation8 + $0x410] sm:$0xff]
        %v1842 = vld [vmem:[#allocation8 + $0x418] sm:$0xff]
        %v1843 = vld [vmem:[#allocation8 + $0x420] sm:$0xff]
        %v1844 = vld [vmem:[#allocation8 + $0x428] sm:$0xff]
        %v1845 = vld [vmem:[#allocation8 + $0x430] sm:$0xff]
        %v1846 = vld [vmem:[#allocation8 + $0x438] sm:$0xff]
        %v1847 = vld [vmem:[#allocation8 + $0x440] sm:$0xff]
        %v1848 = vld [vmem:[#allocation8 + $0x448] sm:$0xff]
        %v1849 = vld [vmem:[#allocation8 + $0x450] sm:$0xff]
        %v1850 = vld [vmem:[#allocation8 + $0x458] sm:$0xff]
        %v1851 = vld [vmem:[#allocation8 + $0x460] sm:$0xff]
        %v1852 = vld [vmem:[#allocation8 + $0x468] sm:$0xff]
        %v1853 = vld [vmem:[#allocation8 + $0x470] sm:$0xff]
        %v1854 = vld [vmem:[#allocation8 + $0x478] sm:$0xff]
        %v1855 = vld [vmem:[#allocation8 + $0x480] sm:$0xff]
        %v1856 = vld [vmem:[#allocation8 + $0x488] sm:$0xff]
        %v1857 = vld [vmem:[#allocation8 + $0x490] sm:$0xff]
        %v1858 = vld [vmem:[#allocation8 + $0x498] sm:$0xff]
        %v1859 = vld [vmem:[#allocation8 + $0x4a0] sm:$0xff]
        %v1860 = vld [vmem:[#allocation8 + $0x4a8] sm:$0xff]
        %v1861 = vld [vmem:[#allocation8 + $0x4b0] sm:$0xff]
        %v1862 = vld [vmem:[#allocation8 + $0x4b8] sm:$0xff]
        %v1863 = vld [vmem:[#allocation8 + $0x4c0] sm:$0xff]
        %v1864 = vld [vmem:[#allocation8 + $0x4c8] sm:$0xff]
        %v1865 = vld [vmem:[#allocation8 + $0x4d0] sm:$0xff]
        %v1866 = vld [vmem:[#allocation8 + $0x4d8] sm:$0xff]
        %v1867 = vld [vmem:[#allocation8 + $0x4e0] sm:$0xff]
        %v1868 = vld [vmem:[#allocation8 + $0x4e8] sm:$0xff]
        %v1869 = vld [vmem:[#allocation8 + $0x4f0] sm:$0xff]
        %v1870 = vld [vmem:[#allocation8 + $0x4f8] sm:$0xff]
        %v1871 = vld [vmem:[%s5] sm:$0xf]
        %v1873 = vlaneseq
        %v1874 = vshrl.u32 %v1873, 7
        %v1875 = vsub.s32 0, %v1874
        %v1876 = vrot.slane %v1871, %v1875
        %v1877 = vlaneseq
        %v1878 = vshrl.u32 %v1877, 7
        %v1879 = vsub.s32 1, %v1878
        %v1880 = vrot.slane %v1871, %v1879
        %v1881 = vlaneseq
        %v1882 = vshrl.u32 %v1881, 7
        %v1883 = vsub.s32 2, %v1882
        %v1884 = vrot.slane %v1871, %v1883
        %v1885 = vlaneseq
        %v1886 = vshrl.u32 %v1885, 7
        %v1887 = vsub.s32 3, %v1886
        %v1888 = vrot.slane %v1871, %v1887
        %v2053 = vunpack.c.l.b16 %v1711
        %v2054 = vunpack.c.h.b16 %v1711
        %v2055 = vunpack.c.l.b16 %v1712
        %v2056 = vunpack.c.h.b16 %v1712
        %v2057 = vunpack.c.l.b16 %v1713
        %v2058 = vunpack.c.h.b16 %v1713
        %v2059 = vunpack.c.l.b16 %v1714
        %v2060 = vunpack.c.h.b16 %v1714
        %v2061 = vunpack.c.l.b16 %v1715
        %v2062 = vunpack.c.h.b16 %v1715
        %v2063 = vunpack.c.l.b16 %v1716
        %v2064 = vunpack.c.h.b16 %v1716
        %v2065 = vunpack.c.l.b16 %v1717
        %v2066 = vunpack.c.h.b16 %v1717
        %v2067 = vunpack.c.l.b16 %v1718
        %v2068 = vunpack.c.h.b16 %v1718
        %v2069 = vunpack.c.l.b16 %v1719
        %v2070 = vunpack.c.h.b16 %v1719
        %v2071 = vunpack.c.l.b16 %v1720
        %v2072 = vunpack.c.h.b16 %v1720
        %v2073 = vunpack.c.l.b16 %v1721
        %v2074 = vunpack.c.h.b16 %v1721
        %v2075 = vunpack.c.l.b16 %v1722
        %v2076 = vunpack.c.h.b16 %v1722
        %v2077 = vunpack.c.l.b16 %v1723
        %v2078 = vunpack.c.h.b16 %v1723
        %v2079 = vunpack.c.l.b16 %v1724
        %v2080 = vunpack.c.h.b16 %v1724
        %v2081 = vunpack.c.l.b16 %v1725
        %v2082 = vunpack.c.h.b16 %v1725
        %v2083 = vunpack.c.l.b16 %v1726
        %v2084 = vunpack.c.h.b16 %v1726
        %v2085 = vunpack.c.l.b16 %v1727
        %v2086 = vunpack.c.h.b16 %v1727
        %v2087 = vunpack.c.l.b16 %v1728
        %v2088 = vunpack.c.h.b16 %v1728
        %v2089 = vunpack.c.l.b16 %v1729
        %v2090 = vunpack.c.h.b16 %v1729
        %v2091 = vunpack.c.l.b16 %v1730
        %v2092 = vunpack.c.h.b16 %v1730
        %v2093 = vunpack.c.l.b16 %v1731
        %v2094 = vunpack.c.h.b16 %v1731
        %v2095 = vunpack.c.l.b16 %v1732
        %v2096 = vunpack.c.h.b16 %v1732
        %v2097 = vunpack.c.l.b16 %v1733
        %v2098 = vunpack.c.h.b16 %v1733
        %v2099 = vunpack.c.l.b16 %v1734
        %v2100 = vunpack.c.h.b16 %v1734
        %v2101 = vunpack.c.l.b16 %v1735
        %v2102 = vunpack.c.h.b16 %v1735
        %v2103 = vunpack.c.l.b16 %v1736
        %v2104 = vunpack.c.h.b16 %v1736
        %v2105 = vunpack.c.l.b16 %v1737
        %v2106 = vunpack.c.h.b16 %v1737
        %v2107 = vunpack.c.l.b16 %v1738
        %v2108 = vunpack.c.h.b16 %v1738
        %v2109 = vunpack.c.l.b16 %v1739
        %v2110 = vunpack.c.h.b16 %v1739
        %v2111 = vunpack.c.l.b16 %v1740
        %v2112 = vunpack.c.h.b16 %v1740
        %v2113 = vunpack.c.l.b16 %v1741
        %v2114 = vunpack.c.h.b16 %v1741
        %v2115 = vunpack.c.l.b16 %v1742
        %v2116 = vunpack.c.h.b16 %v1742
        %v2117 = vunpack.c.l.b16 %v1743
        %v2118 = vunpack.c.h.b16 %v1743
        %v2119 = vunpack.c.l.b16 %v1744
        %v2120 = vunpack.c.h.b16 %v1744
        %v2121 = vunpack.c.l.b16 %v1745
        %v2122 = vunpack.c.h.b16 %v1745
        %v2123 = vunpack.c.l.b16 %v1746
        %v2124 = vunpack.c.h.b16 %v1746
        %v2125 = vunpack.c.l.b16 %v1747
        %v2126 = vunpack.c.h.b16 %v1747
        %v2127 = vunpack.c.l.b16 %v1748
        %v2128 = vunpack.c.h.b16 %v1748
        %v2129 = vunpack.c.l.b16 %v1749
        %v2130 = vunpack.c.h.b16 %v1749
        %v2131 = vunpack.c.l.b16 %v1750
        %v2132 = vunpack.c.h.b16 %v1750
        %v2133 = vunpack.c.l.b16 %v1751
        %v2134 = vunpack.c.h.b16 %v1751
        %v2135 = vunpack.c.l.b16 %v1752
        %v2136 = vunpack.c.h.b16 %v1752
        %v2137 = vunpack.c.l.b16 %v1753
        %v2138 = vunpack.c.h.b16 %v1753
        %v2139 = vunpack.c.l.b16 %v1754
        %v2140 = vunpack.c.h.b16 %v1754
        %v2141 = vunpack.c.l.b16 %v1755
        %v2142 = vunpack.c.h.b16 %v1755
        %v2143 = vunpack.c.l.b16 %v1756
        %v2144 = vunpack.c.h.b16 %v1756
        %v2145 = vunpack.c.l.b16 %v1757
        %v2146 = vunpack.c.h.b16 %v1757
        %v2147 = vunpack.c.l.b16 %v1758
        %v2148 = vunpack.c.h.b16 %v1758
        %v2149 = vunpack.c.l.b16 %v1759
        %v2150 = vunpack.c.h.b16 %v1759
        %v2151 = vunpack.c.l.b16 %v1760
        %v2152 = vunpack.c.h.b16 %v1760
        %v2153 = vunpack.c.l.b16 %v1761
        %v2154 = vunpack.c.h.b16 %v1761
        %v2155 = vunpack.c.l.b16 %v1762
        %v2156 = vunpack.c.h.b16 %v1762
        %v2157 = vunpack.c.l.b16 %v1763
        %v2158 = vunpack.c.h.b16 %v1763
        %v2159 = vunpack.c.l.b16 %v1764
        %v2160 = vunpack.c.h.b16 %v1764
        %v2161 = vunpack.c.l.b16 %v1765
        %v2162 = vunpack.c.h.b16 %v1765
        %v2163 = vunpack.c.l.b16 %v1766
        %v2164 = vunpack.c.h.b16 %v1766
        %v2165 = vunpack.c.l.b16 %v1767
        %v2166 = vunpack.c.h.b16 %v1767
        %v2167 = vunpack.c.l.b16 %v1768
        %v2168 = vunpack.c.h.b16 %v1768
        %v2169 = vunpack.c.l.b16 %v1769
        %v2170 = vunpack.c.h.b16 %v1769
        %v2171 = vunpack.c.l.b16 %v1770
        %v2172 = vunpack.c.h.b16 %v1770
        %v2173 = vunpack.c.l.b16 %v1771
        %v2174 = vunpack.c.h.b16 %v1771
        %v2175 = vunpack.c.l.b16 %v1772
        %v2176 = vunpack.c.h.b16 %v1772
        %v2177 = vunpack.c.l.b16 %v1773
        %v2178 = vunpack.c.h.b16 %v1773
        %v2179 = vunpack.c.l.b16 %v1774
        %v2180 = vunpack.c.h.b16 %v1774
        %v2181 = vunpack.c.l.b16 %v1775
        %v2182 = vunpack.c.h.b16 %v1775
        %v2183 = vunpack.c.l.b16 %v1776
        %v2184 = vunpack.c.h.b16 %v1776
        %v2185 = vunpack.c.l.b16 %v1777
        %v2186 = vunpack.c.h.b16 %v1777
        %v2187 = vunpack.c.l.b16 %v1778
        %v2188 = vunpack.c.h.b16 %v1778
        %v2189 = vunpack.c.l.b16 %v1779
        %v2190 = vunpack.c.h.b16 %v1779
        %v2191 = vunpack.c.l.b16 %v1780
        %v2192 = vunpack.c.h.b16 %v1780
        %v2193 = vunpack.c.l.b16 %v1781
        %v2194 = vunpack.c.h.b16 %v1781
        %v2195 = vunpack.c.l.b16 %v1782
        %v2196 = vunpack.c.h.b16 %v1782
        %v2197 = vunpack.c.l.b16 %v1783
        %v2198 = vunpack.c.h.b16 %v1783
        %v2199 = vunpack.c.l.b16 %v1784
        %v2200 = vunpack.c.h.b16 %v1784
        %v2201 = vunpack.c.l.b16 %v1785
        %v2202 = vunpack.c.h.b16 %v1785
        %v2203 = vunpack.c.l.b16 %v1786
        %v2204 = vunpack.c.h.b16 %v1786
        %v2205 = vunpack.c.l.b16 %v1787
        %v2206 = vunpack.c.h.b16 %v1787
        %v2207 = vunpack.c.l.b16 %v1788
        %v2208 = vunpack.c.h.b16 %v1788
        %v2209 = vunpack.c.l.b16 %v1789
        %v2210 = vunpack.c.h.b16 %v1789
        %v2211 = vunpack.c.l.b16 %v1790
        %v2212 = vunpack.c.h.b16 %v1790
        %v2213 = vunpack.c.l.b16 %v1791
        %v2214 = vunpack.c.h.b16 %v1791
        %v2215 = vunpack.c.l.b16 %v1792
        %v2216 = vunpack.c.h.b16 %v1792
        %v2217 = vunpack.c.l.b16 %v1793
        %v2218 = vunpack.c.h.b16 %v1793
        %v2219 = vunpack.c.l.b16 %v1794
        %v2220 = vunpack.c.h.b16 %v1794
        %v2221 = vunpack.c.l.b16 %v1795
        %v2222 = vunpack.c.h.b16 %v1795
        %v2223 = vunpack.c.l.b16 %v1796
        %v2224 = vunpack.c.h.b16 %v1796
        %v2225 = vunpack.c.l.b16 %v1797
        %v2226 = vunpack.c.h.b16 %v1797
        %v2227 = vunpack.c.l.b16 %v1798
        %v2228 = vunpack.c.h.b16 %v1798
        %v2229 = vunpack.c.l.b16 %v1799
        %v2230 = vunpack.c.h.b16 %v1799
        %v2231 = vunpack.c.l.b16 %v1800
        %v2232 = vunpack.c.h.b16 %v1800
        %v2233 = vunpack.c.l.b16 %v1801
        %v2234 = vunpack.c.h.b16 %v1801
        %v2235 = vunpack.c.l.b16 %v1802
        %v2236 = vunpack.c.h.b16 %v1802
        %v2237 = vunpack.c.l.b16 %v1803
        %v2238 = vunpack.c.h.b16 %v1803
        %v2239 = vunpack.c.l.b16 %v1804
        %v2240 = vunpack.c.h.b16 %v1804
        %v2241 = vunpack.c.l.b16 %v1805
        %v2242 = vunpack.c.h.b16 %v1805
        %v2243 = vunpack.c.l.b16 %v1806
        %v2244 = vunpack.c.h.b16 %v1806
        %v2245 = vunpack.c.l.b16 %v1807
        %v2246 = vunpack.c.h.b16 %v1807
        %v2247 = vunpack.c.l.b16 %v1808
        %v2248 = vunpack.c.h.b16 %v1808
        %v2249 = vunpack.c.l.b16 %v1809
        %v2250 = vunpack.c.h.b16 %v1809
        %v2251 = vunpack.c.l.b16 %v1810
        %v2252 = vunpack.c.h.b16 %v1810
        %v2253 = vunpack.c.l.b16 %v1811
        %v2254 = vunpack.c.h.b16 %v1811
        %v2255 = vunpack.c.l.b16 %v1812
        %v2256 = vunpack.c.h.b16 %v1812
        %v2257 = vunpack.c.l.b16 %v1813
        %v2258 = vunpack.c.h.b16 %v1813
        %v2259 = vunpack.c.l.b16 %v1814
        %v2260 = vunpack.c.h.b16 %v1814
        %v2261 = vunpack.c.l.b16 %v1815
        %v2262 = vunpack.c.h.b16 %v1815
        %v2263 = vunpack.c.l.b16 %v1816
        %v2264 = vunpack.c.h.b16 %v1816
        %v2265 = vunpack.c.l.b16 %v1817
        %v2266 = vunpack.c.h.b16 %v1817
        %v2267 = vunpack.c.l.b16 %v1818
        %v2268 = vunpack.c.h.b16 %v1818
        %v2269 = vunpack.c.l.b16 %v1819
        %v2270 = vunpack.c.h.b16 %v1819
        %v2271 = vunpack.c.l.b16 %v1820
        %v2272 = vunpack.c.h.b16 %v1820
        %v2273 = vunpack.c.l.b16 %v1821
        %v2274 = vunpack.c.h.b16 %v1821
        %v2275 = vunpack.c.l.b16 %v1822
        %v2276 = vunpack.c.h.b16 %v1822
        %v2277 = vunpack.c.l.b16 %v1823
        %v2278 = vunpack.c.h.b16 %v1823
        %v2279 = vunpack.c.l.b16 %v1824
        %v2280 = vunpack.c.h.b16 %v1824
        %v2281 = vunpack.c.l.b16 %v1825
        %v2282 = vunpack.c.h.b16 %v1825
        %v2283 = vunpack.c.l.b16 %v1826
        %v2284 = vunpack.c.h.b16 %v1826
        %v2285 = vunpack.c.l.b16 %v1827
        %v2286 = vunpack.c.h.b16 %v1827
        %v2287 = vunpack.c.l.b16 %v1828
        %v2288 = vunpack.c.h.b16 %v1828
        %v2289 = vunpack.c.l.b16 %v1829
        %v2290 = vunpack.c.h.b16 %v1829
        %v2291 = vunpack.c.l.b16 %v1830
        %v2292 = vunpack.c.h.b16 %v1830
        %v2293 = vunpack.c.l.b16 %v1831
        %v2294 = vunpack.c.h.b16 %v1831
        %v2295 = vunpack.c.l.b16 %v1832
        %v2296 = vunpack.c.h.b16 %v1832
        %v2297 = vunpack.c.l.b16 %v1833
        %v2298 = vunpack.c.h.b16 %v1833
        %v2299 = vunpack.c.l.b16 %v1834
        %v2300 = vunpack.c.h.b16 %v1834
        %v2301 = vunpack.c.l.b16 %v1835
        %v2302 = vunpack.c.h.b16 %v1835
        %v2303 = vunpack.c.l.b16 %v1836
        %v2304 = vunpack.c.h.b16 %v1836
        %v2305 = vunpack.c.l.b16 %v1837
        %v2306 = vunpack.c.h.b16 %v1837
        %v2307 = vunpack.c.l.b16 %v1838
        %v2308 = vunpack.c.h.b16 %v1838
        %v2309 = vunpack.c.l.b16 %v1839
        %v2310 = vunpack.c.h.b16 %v1839
        %v2311 = vunpack.c.l.b16 %v1840
        %v2312 = vunpack.c.h.b16 %v1840
        %v2313 = vunpack.c.l.b16 %v1841
        %v2314 = vunpack.c.h.b16 %v1841
        %v2315 = vunpack.c.l.b16 %v1842
        %v2316 = vunpack.c.h.b16 %v1842
        %v2317 = vunpack.c.l.b16 %v1843
        %v2318 = vunpack.c.h.b16 %v1843
        %v2319 = vunpack.c.l.b16 %v1844
        %v2320 = vunpack.c.h.b16 %v1844
        %v2321 = vunpack.c.l.b16 %v1845
        %v2322 = vunpack.c.h.b16 %v1845
        %v2323 = vunpack.c.l.b16 %v1846
        %v2324 = vunpack.c.h.b16 %v1846
        %v2325 = vunpack.c.l.b16 %v1847
        %v2326 = vunpack.c.h.b16 %v1847
        %v2327 = vunpack.c.l.b16 %v1848
        %v2328 = vunpack.c.h.b16 %v1848
        %v2329 = vunpack.c.l.b16 %v1849
        %v2330 = vunpack.c.h.b16 %v1849
        %v2331 = vunpack.c.l.b16 %v1850
        %v2332 = vunpack.c.h.b16 %v1850
        %v2333 = vunpack.c.l.b16 %v1851
        %v2334 = vunpack.c.h.b16 %v1851
        %v2335 = vunpack.c.l.b16 %v1852
        %v2336 = vunpack.c.h.b16 %v1852
        %v2337 = vunpack.c.l.b16 %v1853
        %v2338 = vunpack.c.h.b16 %v1853
        %v2339 = vunpack.c.l.b16 %v1854
        %v2340 = vunpack.c.h.b16 %v1854
        %v2341 = vunpack.c.l.b16 %v1855
        %v2342 = vunpack.c.h.b16 %v1855
        %v2343 = vunpack.c.l.b16 %v1856
        %v2344 = vunpack.c.h.b16 %v1856
        %v2345 = vunpack.c.l.b16 %v1857
        %v2346 = vunpack.c.h.b16 %v1857
        %v2347 = vunpack.c.l.b16 %v1858
        %v2348 = vunpack.c.h.b16 %v1858
        %v2349 = vunpack.c.l.b16 %v1859
        %v2350 = vunpack.c.h.b16 %v1859
        %v2351 = vunpack.c.l.b16 %v1860
        %v2352 = vunpack.c.h.b16 %v1860
        %v2353 = vunpack.c.l.b16 %v1861
        %v2354 = vunpack.c.h.b16 %v1861
        %v2355 = vunpack.c.l.b16 %v1862
        %v2356 = vunpack.c.h.b16 %v1862
        %v2357 = vunpack.c.l.b16 %v1863
        %v2358 = vunpack.c.h.b16 %v1863
        %v2359 = vunpack.c.l.b16 %v1864
        %v2360 = vunpack.c.h.b16 %v1864
        %v2361 = vunpack.c.l.b16 %v1865
        %v2362 = vunpack.c.h.b16 %v1865
        %v2363 = vunpack.c.l.b16 %v1866
        %v2364 = vunpack.c.h.b16 %v1866
        %v2365 = vunpack.c.l.b16 %v1867
        %v2366 = vunpack.c.h.b16 %v1867
        %v2367 = vunpack.c.l.b16 %v1868
        %v2368 = vunpack.c.h.b16 %v1868
        %v2369 = vunpack.c.l.b16 %v1869
        %v2370 = vunpack.c.h.b16 %v1869
        %v2371 = vunpack.c.l.b16 %v1870
        %v2372 = vunpack.c.h.b16 %v1870
        %v2373 = vpack.c.b16 %v2057, %v2053
        %v2374 = vpack.c.b16 %v2058, %v2054
        %v2375 = vpack.c.b16 %v2059, %v2055
        %v2376 = vpack.c.b16 %v2060, %v2056
        %v2377 = vpack.c.b16 %v2065, %v2061
        %v2378 = vpack.c.b16 %v2066, %v2062
        %v2379 = vpack.c.b16 %v2067, %v2063
        %v2380 = vpack.c.b16 %v2068, %v2064
        %v2381 = vpack.c.b16 %v2073, %v2069
        %v2382 = vpack.c.b16 %v2074, %v2070
        %v2383 = vpack.c.b16 %v2075, %v2071
        %v2384 = vpack.c.b16 %v2076, %v2072
        %v2385 = vpack.c.b16 %v2081, %v2077
        %v2386 = vpack.c.b16 %v2082, %v2078
        %v2387 = vpack.c.b16 %v2083, %v2079
        %v2388 = vpack.c.b16 %v2084, %v2080
        %v2389 = vpack.c.b16 %v2089, %v2085
        %v2390 = vpack.c.b16 %v2090, %v2086
        %v2391 = vpack.c.b16 %v2091, %v2087
        %v2392 = vpack.c.b16 %v2092, %v2088
        %v2393 = vpack.c.b16 %v2097, %v2093
        %v2394 = vpack.c.b16 %v2098, %v2094
        %v2395 = vpack.c.b16 %v2099, %v2095
        %v2396 = vpack.c.b16 %v2100, %v2096
        %v2397 = vpack.c.b16 %v2105, %v2101
        %v2398 = vpack.c.b16 %v2106, %v2102
        %v2399 = vpack.c.b16 %v2107, %v2103
        %v2400 = vpack.c.b16 %v2108, %v2104
        %v2401 = vpack.c.b16 %v2113, %v2109
        %v2402 = vpack.c.b16 %v2114, %v2110
        %v2403 = vpack.c.b16 %v2115, %v2111
        %v2404 = vpack.c.b16 %v2116, %v2112
        %v2405 = vpack.c.b16 %v2121, %v2117
        %v2406 = vpack.c.b16 %v2122, %v2118
        %v2407 = vpack.c.b16 %v2123, %v2119
        %v2408 = vpack.c.b16 %v2124, %v2120
        %v2409 = vpack.c.b16 %v2129, %v2125
        %v2410 = vpack.c.b16 %v2130, %v2126
        %v2411 = vpack.c.b16 %v2131, %v2127
        %v2412 = vpack.c.b16 %v2132, %v2128
        %v2413 = vpack.c.b16 %v2137, %v2133
        %v2414 = vpack.c.b16 %v2138, %v2134
        %v2415 = vpack.c.b16 %v2139, %v2135
        %v2416 = vpack.c.b16 %v2140, %v2136
        %v2417 = vpack.c.b16 %v2145, %v2141
        %v2418 = vpack.c.b16 %v2146, %v2142
        %v2419 = vpack.c.b16 %v2147, %v2143
        %v2420 = vpack.c.b16 %v2148, %v2144
        %v2421 = vpack.c.b16 %v2153, %v2149
        %v2422 = vpack.c.b16 %v2154, %v2150
        %v2423 = vpack.c.b16 %v2155, %v2151
        %v2424 = vpack.c.b16 %v2156, %v2152
        %v2425 = vpack.c.b16 %v2161, %v2157
        %v2426 = vpack.c.b16 %v2162, %v2158
        %v2427 = vpack.c.b16 %v2163, %v2159
        %v2428 = vpack.c.b16 %v2164, %v2160
        %v2429 = vpack.c.b16 %v2169, %v2165
        %v2430 = vpack.c.b16 %v2170, %v2166
        %v2431 = vpack.c.b16 %v2171, %v2167
        %v2432 = vpack.c.b16 %v2172, %v2168
        %v2433 = vpack.c.b16 %v2177, %v2173
        %v2434 = vpack.c.b16 %v2178, %v2174
        %v2435 = vpack.c.b16 %v2179, %v2175
        %v2436 = vpack.c.b16 %v2180, %v2176
        %v2437 = vpack.c.b16 %v2185, %v2181
        %v2438 = vpack.c.b16 %v2186, %v2182
        %v2439 = vpack.c.b16 %v2187, %v2183
        %v2440 = vpack.c.b16 %v2188, %v2184
        %v2441 = vpack.c.b16 %v2193, %v2189
        %v2442 = vpack.c.b16 %v2194, %v2190
        %v2443 = vpack.c.b16 %v2195, %v2191
        %v2444 = vpack.c.b16 %v2196, %v2192
        %v2445 = vpack.c.b16 %v2201, %v2197
        %v2446 = vpack.c.b16 %v2202, %v2198
        %v2447 = vpack.c.b16 %v2203, %v2199
        %v2448 = vpack.c.b16 %v2204, %v2200
        %v2449 = vpack.c.b16 %v2209, %v2205
        %v2450 = vpack.c.b16 %v2210, %v2206
        %v2451 = vpack.c.b16 %v2211, %v2207
        %v2452 = vpack.c.b16 %v2212, %v2208
        %v2453 = vpack.c.b16 %v2217, %v2213
        %v2454 = vpack.c.b16 %v2218, %v2214
        %v2455 = vpack.c.b16 %v2219, %v2215
        %v2456 = vpack.c.b16 %v2220, %v2216
        %v2457 = vpack.c.b16 %v2225, %v2221
        %v2458 = vpack.c.b16 %v2226, %v2222
        %v2459 = vpack.c.b16 %v2227, %v2223
        %v2460 = vpack.c.b16 %v2228, %v2224
        %v2461 = vpack.c.b16 %v2233, %v2229
        %v2462 = vpack.c.b16 %v2234, %v2230
        %v2463 = vpack.c.b16 %v2235, %v2231
        %v2464 = vpack.c.b16 %v2236, %v2232
        %v2465 = vpack.c.b16 %v2241, %v2237
        %v2466 = vpack.c.b16 %v2242, %v2238
        %v2467 = vpack.c.b16 %v2243, %v2239
        %v2468 = vpack.c.b16 %v2244, %v2240
        %v2469 = vpack.c.b16 %v2249, %v2245
        %v2470 = vpack.c.b16 %v2250, %v2246
        %v2471 = vpack.c.b16 %v2251, %v2247
        %v2472 = vpack.c.b16 %v2252, %v2248
        %v2473 = vpack.c.b16 %v2257, %v2253
        %v2474 = vpack.c.b16 %v2258, %v2254
        %v2475 = vpack.c.b16 %v2259, %v2255
        %v2476 = vpack.c.b16 %v2260, %v2256
        %v2477 = vpack.c.b16 %v2265, %v2261
        %v2478 = vpack.c.b16 %v2266, %v2262
        %v2479 = vpack.c.b16 %v2267, %v2263
        %v2480 = vpack.c.b16 %v2268, %v2264
        %v2481 = vpack.c.b16 %v2273, %v2269
        %v2482 = vpack.c.b16 %v2274, %v2270
        %v2483 = vpack.c.b16 %v2275, %v2271
        %v2484 = vpack.c.b16 %v2276, %v2272
        %v2485 = vpack.c.b16 %v2281, %v2277
        %v2486 = vpack.c.b16 %v2282, %v2278
        %v2487 = vpack.c.b16 %v2283, %v2279
        %v2488 = vpack.c.b16 %v2284, %v2280
        %v2489 = vpack.c.b16 %v2289, %v2285
        %v2490 = vpack.c.b16 %v2290, %v2286
        %v2491 = vpack.c.b16 %v2291, %v2287
        %v2492 = vpack.c.b16 %v2292, %v2288
        %v2493 = vpack.c.b16 %v2297, %v2293
        %v2494 = vpack.c.b16 %v2298, %v2294
        %v2495 = vpack.c.b16 %v2299, %v2295
        %v2496 = vpack.c.b16 %v2300, %v2296
        %v2497 = vpack.c.b16 %v2305, %v2301
        %v2498 = vpack.c.b16 %v2306, %v2302
        %v2499 = vpack.c.b16 %v2307, %v2303
        %v2500 = vpack.c.b16 %v2308, %v2304
        %v2501 = vpack.c.b16 %v2313, %v2309
        %v2502 = vpack.c.b16 %v2314, %v2310
        %v2503 = vpack.c.b16 %v2315, %v2311
        %v2504 = vpack.c.b16 %v2316, %v2312
        %v2505 = vpack.c.b16 %v2321, %v2317
        %v2506 = vpack.c.b16 %v2322, %v2318
        %v2507 = vpack.c.b16 %v2323, %v2319
        %v2508 = vpack.c.b16 %v2324, %v2320
        %v2509 = vpack.c.b16 %v2329, %v2325
        %v2510 = vpack.c.b16 %v2330, %v2326
        %v2511 = vpack.c.b16 %v2331, %v2327
        %v2512 = vpack.c.b16 %v2332, %v2328
        %v2513 = vpack.c.b16 %v2337, %v2333
        %v2514 = vpack.c.b16 %v2338, %v2334
        %v2515 = vpack.c.b16 %v2339, %v2335
        %v2516 = vpack.c.b16 %v2340, %v2336
        %v2517 = vpack.c.b16 %v2345, %v2341
        %v2518 = vpack.c.b16 %v2346, %v2342
        %v2519 = vpack.c.b16 %v2347, %v2343
        %v2520 = vpack.c.b16 %v2348, %v2344
        %v2521 = vpack.c.b16 %v2353, %v2349
        %v2522 = vpack.c.b16 %v2354, %v2350
        %v2523 = vpack.c.b16 %v2355, %v2351
        %v2524 = vpack.c.b16 %v2356, %v2352
        %v2525 = vpack.c.b16 %v2361, %v2357
        %v2526 = vpack.c.b16 %v2362, %v2358
        %v2527 = vpack.c.b16 %v2363, %v2359
        %v2528 = vpack.c.b16 %v2364, %v2360
        %v2529 = vpack.c.b16 %v2369, %v2365
        %v2530 = vpack.c.b16 %v2370, %v2366
        %v2531 = vpack.c.b16 %v2371, %v2367
        %v2532 = vpack.c.b16 %v2372, %v2368
        %2693 = vmatprep.subr.bf16.mxu0 %v2374
        %2694 = vmatpush1.bf16.msra.mxu0 %v2373
        %2695 = vmatprep.subr.bf16.mxu0 %v2378
        %2696 = vmatpush1.bf16.msra.mxu0 %v2377
        %2697 = vmatprep.subr.bf16.mxu0 %v2382
        %2698 = vmatpush1.bf16.msra.mxu0 %v2381
        %2699 = vmatprep.subr.bf16.mxu0 %v2386
        %2700 = vmatpush1.bf16.msra.mxu0 %v2385
        %2701 = vmatprep.subr.bf16.mxu0 %v2390
        %2702 = vmatpush1.bf16.msra.mxu0 %v2389
        %2703 = vmatprep.subr.bf16.mxu0 %v2394
        %2704 = vmatpush1.bf16.msra.mxu0 %v2393
        %2705 = vmatprep.subr.bf16.mxu0 %v2398
        %2706 = vmatpush1.bf16.msra.mxu0 %v2397
        %2707 = vmatprep.subr.bf16.mxu0 %v2402
        %2708 = vmatpush1.bf16.msra.mxu0 %v2401
        %2709 = vmatprep.subr.bf16.mxu0 %v2406
        %2710 = vmatpush1.bf16.msra.mxu0 %v2405
        %2711 = vmatprep.subr.bf16.mxu0 %v2410
        %2712 = vmatpush1.bf16.msra.mxu0 %v2409
        %2713 = vmatprep.subr.bf16.mxu0 %v2414
        %2714 = vmatpush1.bf16.msra.mxu0 %v2413
        %2715 = vmatprep.subr.bf16.mxu0 %v2418
        %2716 = vmatpush1.bf16.msra.mxu0 %v2417
        %2717 = vmatprep.subr.bf16.mxu0 %v2422
        %2718 = vmatpush1.bf16.msra.mxu0 %v2421
        %2719 = vmatprep.subr.bf16.mxu0 %v2426
        %2720 = vmatpush1.bf16.msra.mxu0 %v2425
        %2721 = vmatprep.subr.bf16.mxu0 %v2430
        %2722 = vmatpush1.bf16.msra.mxu0 %v2429
        %2723 = vmatprep.subr.bf16.mxu0 %v2434
        %2724 = vmatpush1.bf16.msra.mxu0 %v2433
        %2725 = vmatprep.mubr.bf16.mxu0 %v1672
        %2726 = vmatmul.mubr.bf16.gmra.mrb[0].mxu0 %v1671
        %v2727 = vpop.f32.mrb[0].mxu0
        %v2728 = vadd.f32 %v1876, %v2727
        %v2729 = vpop.f32.mrb[0].mxu0
        %v2730 = vadd.f32 %v1880, %v2729
        %v2731 = vpop.f32.mrb[0].mxu0
        %v2732 = vadd.f32 %v1876, %v2731
        %v2733 = vpop.f32.mrb[0].mxu0
        %v2734 = vadd.f32 %v1880, %v2733
        %2735 = vmatprep.mubr.bf16.mxu0 %v1677
        %2736 = vmatmul.mubr.bf16.gmra.mrb[0].mxu0 %v1676
        %v2737 = vpop.f32.mrb[0].mxu0
        %v2738 = vadd.f32 %v1876, %v2737
        %v2739 = vpop.f32.mrb[0].mxu0
        %v2740 = vadd.f32 %v1880, %v2739
        %v2741 = vpop.f32.mrb[0].mxu0
        %v2742 = vadd.f32 %v1876, %v2741
        %v2743 = vpop.f32.mrb[0].mxu0
        %v2744 = vadd.f32 %v1880, %v2743
        %2745 = vmatprep.mubr.bf16.mxu0 %v1682
        %2746 = vmatmul.mubr.bf16.gmra.mrb[0].mxu0 %v1681
        %v2747 = vpop.f32.mrb[0].mxu0
        %v2748 = vadd.f32 %v1876, %v2747
        %v2749 = vpop.f32.mrb[0].mxu0
        %v2750 = vadd.f32 %v1880, %v2749
        %v2751 = vpop.f32.mrb[0].mxu0
        %v2752 = vadd.f32 %v1876, %v2751
        %v2753 = vpop.f32.mrb[0].mxu0
        %v2754 = vadd.f32 %v1880, %v2753
        %2755 = vmatprep.mubr.bf16.mxu0 %v1687
        %2756 = vmatmul.mubr.bf16.gmra.mrb[0].mxu0 %v1686
        %v2757 = vpop.f32.mrb[0].mxu0
        %v2758 = vadd.f32 %v1876, %v2757
        %v2759 = vpop.f32.mrb[0].mxu0
        %v2760 = vadd.f32 %v1880, %v2759
        %v2761 = vpop.f32.mrb[0].mxu0
        %v2762 = vadd.f32 %v1876, %v2761
        %v2763 = vpop.f32.mrb[0].mxu0
        %v2764 = vadd.f32 %v1880, %v2763
        %2765 = vmatprep.mubr.bf16.mxu0 %v1692
        %2766 = vmatmul.mubr.bf16.gmra.mrb[0].mxu0 %v1691
        %v2767 = vpop.f32.mrb[0].mxu0
        %v2768 = vadd.f32 %v1876, %v2767
        %v2769 = vpop.f32.mrb[0].mxu0
        %v2770 = vadd.f32 %v1880, %v2769
        %v2771 = vpop.f32.mrb[0].mxu0
        %v2772 = vadd.f32 %v1876, %v2771
        %v2773 = vpop.f32.mrb[0].mxu0
        %v2774 = vadd.f32 %v1880, %v2773
        %2775 = vmatprep.mubr.bf16.mxu0 %v1697
        %2776 = vmatmul.mubr.bf16.gmra.mrb[0].mxu0 %v1696
        %v2777 = vpop.f32.mrb[0].mxu0
        %v2778 = vadd.f32 %v1876, %v2777
        %v2779 = vpop.f32.mrb[0].mxu0
        %v2780 = vadd.f32 %v1880, %v2779
        %v2781 = vpop.f32.mrb[0].mxu0
        %v2782 = vadd.f32 %v1876, %v2781
        %v2783 = vpop.f32.mrb[0].mxu0
        %v2784 = vadd.f32 %v1880, %v2783
        %2785 = vmatprep.mubr.bf16.mxu0 %v1702
        %2786 = vmatmul.mubr.bf16.gmra.mrb[0].mxu0 %v1701
        %v2787 = vpop.f32.mrb[0].mxu0
        %v2788 = vadd.f32 %v1876, %v2787
        %v2789 = vpop.f32.mrb[0].mxu0
        %v2790 = vadd.f32 %v1880, %v2789
        %v2791 = vpop.f32.mrb[0].mxu0
        %v2792 = vadd.f32 %v1876, %v2791
        %v2793 = vpop.f32.mrb[0].mxu0
        %v2794 = vadd.f32 %v1880, %v2793
        %2795 = vmatprep.mubr.bf16.mxu0 %v1707
        %2796 = vmatmul.mubr.bf16.gmra.mrb[0].mxu0 %v1706
        %v2797 = vpop.f32.mrb[0].mxu0
        %v2798 = vadd.f32 %v1876, %v2797
        %v2799 = vpop.f32.mrb[0].mxu0
        %v2800 = vadd.f32 %v1880, %v2799
        %v2801 = vpop.f32.mrb[0].mxu0
        %v2802 = vadd.f32 %v1876, %v2801
        %v2803 = vpop.f32.mrb[0].mxu0
        %v2804 = vadd.f32 %v1880, %v2803
        %2805 = vdwg.mxu0
        %2806 = vmatprep.subr.bf16.mxu0 %v2438
        %2807 = vmatpush1.bf16.msra.mxu0 %v2437
        %2808 = vmatprep.subr.bf16.mxu0 %v2442
        %2809 = vmatpush1.bf16.msra.mxu0 %v2441
        %2810 = vmatprep.subr.bf16.mxu0 %v2446
        %2811 = vmatpush1.bf16.msra.mxu0 %v2445
        %2812 = vmatprep.subr.bf16.mxu0 %v2450
        %2813 = vmatpush1.bf16.msra.mxu0 %v2449
        %2814 = vmatprep.subr.bf16.mxu0 %v2454
        %2815 = vmatpush1.bf16.msra.mxu0 %v2453
        %2816 = vmatprep.subr.bf16.mxu0 %v2458
        %2817 = vmatpush1.bf16.msra.mxu0 %v2457
        %2818 = vmatprep.subr.bf16.mxu0 %v2462
        %2819 = vmatpush1.bf16.msra.mxu0 %v2461
        %2820 = vmatprep.subr.bf16.mxu0 %v2466
        %2821 = vmatpush1.bf16.msra.mxu0 %v2465
        %2822 = vmatprep.subr.bf16.mxu0 %v2470
        %2823 = vmatpush1.bf16.msra.mxu0 %v2469
        %2824 = vmatprep.subr.bf16.mxu0 %v2474
        %2825 = vmatpush1.bf16.msra.mxu0 %v2473
        %2826 = vmatprep.subr.bf16.mxu0 %v2478
        %2827 = vmatpush1.bf16.msra.mxu0 %v2477
        %2828 = vmatprep.subr.bf16.mxu0 %v2482
        %2829 = vmatpush1.bf16.msra.mxu0 %v2481
        %2830 = vmatprep.subr.bf16.mxu0 %v2486
        %2831 = vmatpush1.bf16.msra.mxu0 %v2485
        %2832 = vmatprep.subr.bf16.mxu0 %v2490
        %2833 = vmatpush1.bf16.msra.mxu0 %v2489
        %2834 = vmatprep.subr.bf16.mxu0 %v2494
        %2835 = vmatpush1.bf16.msra.mxu0 %v2493
        %2836 = vmatprep.subr.bf16.mxu0 %v2498
        %2837 = vmatpush1.bf16.msra.mxu0 %v2497
        %2838 = vmatprep.mubr.bf16.mxu0 %v1674
        %2839 = vmatmul.mubr.bf16.gmra.mrb[0].mxu0 %v1673
        %v2840 = vpop.f32.mrb[0].mxu0
        %v2841 = vadd.f32 %v2728, %v2840
        %v2842 = vpop.f32.mrb[0].mxu0
        %v2843 = vadd.f32 %v2730, %v2842
        %v2844 = vpop.f32.mrb[0].mxu0
        %v2845 = vadd.f32 %v2732, %v2844
        %v2846 = vpop.f32.mrb[0].mxu0
        %v2847 = vadd.f32 %v2734, %v2846
        %2848 = vmatprep.mubr.bf16.mxu0 %v1679
        %2849 = vmatmul.mubr.bf16.gmra.mrb[0].mxu0 %v1678
        %v2850 = vpop.f32.mrb[0].mxu0
        %v2851 = vadd.f32 %v2738, %v2850
        %v2852 = vpop.f32.mrb[0].mxu0
        %v2853 = vadd.f32 %v2740, %v2852
        %v2854 = vpop.f32.mrb[0].mxu0
        %v2855 = vadd.f32 %v2742, %v2854
        %v2856 = vpop.f32.mrb[0].mxu0
        %v2857 = vadd.f32 %v2744, %v2856
        %2858 = vmatprep.mubr.bf16.mxu0 %v1684
        %2859 = vmatmul.mubr.bf16.gmra.mrb[0].mxu0 %v1683
        %v2860 = vpop.f32.mrb[0].mxu0
        %v2861 = vadd.f32 %v2748, %v2860
        %v2862 = vpop.f32.mrb[0].mxu0
        %v2863 = vadd.f32 %v2750, %v2862
        %v2864 = vpop.f32.mrb[0].mxu0
        %v2865 = vadd.f32 %v2752, %v2864
        %v2866 = vpop.f32.mrb[0].mxu0
        %v2867 = vadd.f32 %v2754, %v2866
        %2868 = vmatprep.mubr.bf16.mxu0 %v1689
        %2869 = vmatmul.mubr.bf16.gmra.mrb[0].mxu0 %v1688
        %v2870 = vpop.f32.mrb[0].mxu0
        %v2871 = vadd.f32 %v2758, %v2870
        %v2872 = vpop.f32.mrb[0].mxu0
        %v2873 = vadd.f32 %v2760, %v2872
        %v2874 = vpop.f32.mrb[0].mxu0
        %v2875 = vadd.f32 %v2762, %v2874
        %v2876 = vpop.f32.mrb[0].mxu0
        %v2877 = vadd.f32 %v2764, %v2876
        %2878 = vmatprep.mubr.bf16.mxu0 %v1694
        %2879 = vmatmul.mubr.bf16.gmra.mrb[0].mxu0 %v1693
        %v2880 = vpop.f32.mrb[0].mxu0
        %v2881 = vadd.f32 %v2768, %v2880
        %v2882 = vpop.f32.mrb[0].mxu0
        %v2883 = vadd.f32 %v2770, %v2882
        %v2884 = vpop.f32.mrb[0].mxu0
        %v2885 = vadd.f32 %v2772, %v2884
        %v2886 = vpop.f32.mrb[0].mxu0
        %v2887 = vadd.f32 %v2774, %v2886
        %2888 = vmatprep.mubr.bf16.mxu0 %v1699
        %2889 = vmatmul.mubr.bf16.gmra.mrb[0].mxu0 %v1698
        %v2890 = vpop.f32.mrb[0].mxu0
        %v2891 = vadd.f32 %v2778, %v2890
        %v2892 = vpop.f32.mrb[0].mxu0
        %v2893 = vadd.f32 %v2780, %v2892
        %v2894 = vpop.f32.mrb[0].mxu0
        %v2895 = vadd.f32 %v2782, %v2894
        %v2896 = vpop.f32.mrb[0].mxu0
        %v2897 = vadd.f32 %v2784, %v2896
        %2898 = vmatprep.mubr.bf16.mxu0 %v1704
        %2899 = vmatmul.mubr.bf16.gmra.mrb[0].mxu0 %v1703
        %v2900 = vpop.f32.mrb[0].mxu0
        %v2901 = vadd.f32 %v2788, %v2900
        %v2902 = vpop.f32.mrb[0].mxu0
        %v2903 = vadd.f32 %v2790, %v2902
        %v2904 = vpop.f32.mrb[0].mxu0
        %v2905 = vadd.f32 %v2792, %v2904
        %v2906 = vpop.f32.mrb[0].mxu0
        %v2907 = vadd.f32 %v2794, %v2906
        %2908 = vmatprep.mubr.bf16.mxu0 %v1709
        %2909 = vmatmul.mubr.bf16.gmra.mrb[0].mxu0 %v1708
        %v2910 = vpop.f32.mrb[0].mxu0
        %v2911 = vadd.f32 %v2798, %v2910
        %v2912 = vpop.f32.mrb[0].mxu0
        %v2913 = vadd.f32 %v2800, %v2912
        %v2914 = vpop.f32.mrb[0].mxu0
        %v2915 = vadd.f32 %v2802, %v2914
        %v2916 = vpop.f32.mrb[0].mxu0
        %v2917 = vadd.f32 %v2804, %v2916
        %2918 = vdwg.mxu0
        %2919 = vmatprep.subr.bf16.mxu0 %v2502
        %2920 = vmatpush1.bf16.msra.mxu0 %v2501
        %2921 = vmatprep.subr.bf16.mxu0 %v2506
        %2922 = vmatpush1.bf16.msra.mxu0 %v2505
        %2923 = vmatprep.subr.bf16.mxu0 %v2510
        %2924 = vmatpush1.bf16.msra.mxu0 %v2509
        %2925 = vmatprep.subr.bf16.mxu0 %v2514
        %2926 = vmatpush1.bf16.msra.mxu0 %v2513
        %2927 = vmatprep.subr.bf16.mxu0 %v2518
        %2928 = vmatpush1.bf16.msra.mxu0 %v2517
        %2929 = vmatprep.subr.bf16.mxu0 %v2522
        %2930 = vmatpush1.bf16.msra.mxu0 %v2521
        %2931 = vmatprep.subr.bf16.mxu0 %v2526
        %2932 = vmatpush1.bf16.msra.mxu0 %v2525
        %2933 = vmatprep.subr.bf16.mxu0 %v2530
        %2934 = vmatpush1.bf16.msra.mxu0 %v2529
        %2935 = vmatprep.subr.bf16.mxu0 0
        %2936 = vmatpush1.bf16.msra.mxu0 0
        %2937 = vmatprep.subr.bf16.mxu0 0
        %2938 = vmatpush1.bf16.msra.mxu0 0
        %2939 = vmatprep.subr.bf16.mxu0 0
        %2940 = vmatpush1.bf16.msra.mxu0 0
        %2941 = vmatprep.subr.bf16.mxu0 0
        %2942 = vmatpush1.bf16.msra.mxu0 0
        %2943 = vmatprep.subr.bf16.mxu0 0
        %2944 = vmatpush1.bf16.msra.mxu0 0
        %2945 = vmatprep.subr.bf16.mxu0 0
        %2946 = vmatpush1.bf16.msra.mxu0 0
        %2947 = vmatprep.subr.bf16.mxu0 0
        %2948 = vmatpush1.bf16.msra.mxu0 0
        %2949 = vmatprep.subr.bf16.mxu0 0
        %2950 = vmatpush1.bf16.msra.mxu0 0
        %2951 = vmatprep.mubr.bf16.mxu0 0
        %2952 = vmatmul.mubr.bf16.gmra.mrb[0].mxu0 %v1675
        %v2953 = vpop.f32.mrb[0].mxu0
        %v2954 = vadd.f32 %v2841, %v2953
        %v2955 = vpop.f32.mrb[0].mxu0
        %v2956 = vadd.f32 %v2843, %v2955
        %v2957 = vpop.f32.mrb[0].mxu0
        %v2958 = vadd.f32 %v2845, %v2957
        %v2959 = vpop.f32.mrb[0].mxu0
        %v2960 = vadd.f32 %v2847, %v2959
        %2961 = vmatprep.mubr.bf16.mxu0 0
        %2962 = vmatmul.mubr.bf16.gmra.mrb[0].mxu0 %v1680
        %v2963 = vpop.f32.mrb[0].mxu0
        %v2964 = vadd.f32 %v2851, %v2963
        %v2965 = vpop.f32.mrb[0].mxu0
        %v2966 = vadd.f32 %v2853, %v2965
        %v2967 = vpop.f32.mrb[0].mxu0
        %v2968 = vadd.f32 %v2855, %v2967
        %v2969 = vpop.f32.mrb[0].mxu0
        %v2970 = vadd.f32 %v2857, %v2969
        %2971 = vmatprep.mubr.bf16.mxu0 0
        %2972 = vmatmul.mubr.bf16.gmra.mrb[0].mxu0 %v1685
        %v2973 = vpop.f32.mrb[0].mxu0
        %v2974 = vadd.f32 %v2861, %v2973
        %v2975 = vpop.f32.mrb[0].mxu0
        %v2976 = vadd.f32 %v2863, %v2975
        %v2977 = vpop.f32.mrb[0].mxu0
        %v2978 = vadd.f32 %v2865, %v2977
        %v2979 = vpop.f32.mrb[0].mxu0
        %v2980 = vadd.f32 %v2867, %v2979
        %2981 = vmatprep.mubr.bf16.mxu0 0
        %2982 = vmatmul.mubr.bf16.gmra.mrb[0].mxu0 %v1690
        %v2983 = vpop.f32.mrb[0].mxu0
        %v2984 = vadd.f32 %v2871, %v2983
        %v2985 = vpop.f32.mrb[0].mxu0
        %v2986 = vadd.f32 %v2873, %v2985
        %v2987 = vpop.f32.mrb[0].mxu0
        %v2988 = vadd.f32 %v2875, %v2987
        %v2989 = vpop.f32.mrb[0].mxu0
        %v2990 = vadd.f32 %v2877, %v2989
        %2991 = vmatprep.mubr.bf16.mxu0 0
        %2992 = vmatmul.mubr.bf16.gmra.mrb[0].mxu0 %v1695
        %v2993 = vpop.f32.mrb[0].mxu0
        %v2994 = vadd.f32 %v2881, %v2993
        %v2995 = vpop.f32.mrb[0].mxu0
        %v2996 = vadd.f32 %v2883, %v2995
        %v2997 = vpop.f32.mrb[0].mxu0
        %v2998 = vadd.f32 %v2885, %v2997
        %v2999 = vpop.f32.mrb[0].mxu0
        %v3000 = vadd.f32 %v2887, %v2999
        %3001 = vmatprep.mubr.bf16.mxu0 0
        %3002 = vmatmul.mubr.bf16.gmra.mrb[0].mxu0 %v1700
        %v3003 = vpop.f32.mrb[0].mxu0
        %v3004 = vadd.f32 %v2891, %v3003
        %v3005 = vpop.f32.mrb[0].mxu0
        %v3006 = vadd.f32 %v2893, %v3005
        %v3007 = vpop.f32.mrb[0].mxu0
        %v3008 = vadd.f32 %v2895, %v3007
        %v3009 = vpop.f32.mrb[0].mxu0
        %v3010 = vadd.f32 %v2897, %v3009
        %3011 = vmatprep.mubr.bf16.mxu0 0
        %3012 = vmatmul.mubr.bf16.gmra.mrb[0].mxu0 %v1705
        %v3013 = vpop.f32.mrb[0].mxu0
        %v3014 = vadd.f32 %v2901, %v3013
        %v3015 = vpop.f32.mrb[0].mxu0
        %v3016 = vadd.f32 %v2903, %v3015
        %v3017 = vpop.f32.mrb[0].mxu0
        %v3018 = vadd.f32 %v2905, %v3017
        %v3019 = vpop.f32.mrb[0].mxu0
        %v3020 = vadd.f32 %v2907, %v3019
        %3021 = vmatprep.mubr.bf16.mxu0 0
        %3022 = vmatmul.mubr.bf16.gmra.mrb[0].mxu0 %v1710
        %v3023 = vpop.f32.mrb[0].mxu0
        %v3024 = vadd.f32 %v2911, %v3023
        %v3025 = vpop.f32.mrb[0].mxu0
        %v3026 = vadd.f32 %v2913, %v3025
        %v3027 = vpop.f32.mrb[0].mxu0
        %v3028 = vadd.f32 %v2915, %v3027
        %v3029 = vpop.f32.mrb[0].mxu0
        %v3030 = vadd.f32 %v2917, %v3029
        %3031 = vdwg.mxu0
        %3032 = vmatprep.subr.bf16.mxu0 %v2376
        %3033 = vmatpush1.bf16.msra.mxu0 %v2375
        %3034 = vmatprep.subr.bf16.mxu0 %v2380
        %3035 = vmatpush1.bf16.msra.mxu0 %v2379
        %3036 = vmatprep.subr.bf16.mxu0 %v2384
        %3037 = vmatpush1.bf16.msra.mxu0 %v2383
        %3038 = vmatprep.subr.bf16.mxu0 %v2388
        %3039 = vmatpush1.bf16.msra.mxu0 %v2387
        %3040 = vmatprep.subr.bf16.mxu0 %v2392
        %3041 = vmatpush1.bf16.msra.mxu0 %v2391
        %3042 = vmatprep.subr.bf16.mxu0 %v2396
        %3043 = vmatpush1.bf16.msra.mxu0 %v2395
        %3044 = vmatprep.subr.bf16.mxu0 %v2400
        %3045 = vmatpush1.bf16.msra.mxu0 %v2399
        %3046 = vmatprep.subr.bf16.mxu0 %v2404
        %3047 = vmatpush1.bf16.msra.mxu0 %v2403
        %3048 = vmatprep.subr.bf16.mxu0 %v2408
        %3049 = vmatpush1.bf16.msra.mxu0 %v2407
        %3050 = vmatprep.subr.bf16.mxu0 %v2412
        %3051 = vmatpush1.bf16.msra.mxu0 %v2411
        %3052 = vmatprep.subr.bf16.mxu0 %v2416
        %3053 = vmatpush1.bf16.msra.mxu0 %v2415
        %3054 = vmatprep.subr.bf16.mxu0 %v2420
        %3055 = vmatpush1.bf16.msra.mxu0 %v2419
        %3056 = vmatprep.subr.bf16.mxu0 %v2424
        %3057 = vmatpush1.bf16.msra.mxu0 %v2423
        %3058 = vmatprep.subr.bf16.mxu0 %v2428
        %3059 = vmatpush1.bf16.msra.mxu0 %v2427
        %3060 = vmatprep.subr.bf16.mxu0 %v2432
        %3061 = vmatpush1.bf16.msra.mxu0 %v2431
        %3062 = vmatprep.subr.bf16.mxu0 %v2436
        %3063 = vmatpush1.bf16.msra.mxu0 %v2435
        %3064 = vmatprep.mubr.bf16.mxu0 %v1672
        %3065 = vmatmul.mubr.bf16.gmra.mrb[0].mxu0 %v1671
        %v3066 = vpop.f32.mrb[0].mxu0
        %v3067 = vadd.f32 %v1884, %v3066
        %v3068 = vpop.f32.mrb[0].mxu0
        %v3069 = vadd.f32 %v1888, %v3068
        %v3070 = vpop.f32.mrb[0].mxu0
        %v3071 = vadd.f32 %v1884, %v3070
        %v3072 = vpop.f32.mrb[0].mxu0
        %v3073 = vadd.f32 %v1888, %v3072
        %3074 = vmatprep.mubr.bf16.mxu0 %v1677
        %3075 = vmatmul.mubr.bf16.gmra.mrb[0].mxu0 %v1676
        %v3076 = vpop.f32.mrb[0].mxu0
        %v3077 = vadd.f32 %v1884, %v3076
        %v3078 = vpop.f32.mrb[0].mxu0
        %v3079 = vadd.f32 %v1888, %v3078
        %v3080 = vpop.f32.mrb[0].mxu0
        %v3081 = vadd.f32 %v1884, %v3080
        %v3082 = vpop.f32.mrb[0].mxu0
        %v3083 = vadd.f32 %v1888, %v3082
        %3084 = vmatprep.mubr.bf16.mxu0 %v1682
        %3085 = vmatmul.mubr.bf16.gmra.mrb[0].mxu0 %v1681
        %v3086 = vpop.f32.mrb[0].mxu0
        %v3087 = vadd.f32 %v1884, %v3086
        %v3088 = vpop.f32.mrb[0].mxu0
        %v3089 = vadd.f32 %v1888, %v3088
        %v3090 = vpop.f32.mrb[0].mxu0
        %v3091 = vadd.f32 %v1884, %v3090
        %v3092 = vpop.f32.mrb[0].mxu0
        %v3093 = vadd.f32 %v1888, %v3092
        %3094 = vmatprep.mubr.bf16.mxu0 %v1687
        %3095 = vmatmul.mubr.bf16.gmra.mrb[0].mxu0 %v1686
        %v3096 = vpop.f32.mrb[0].mxu0
        %v3097 = vadd.f32 %v1884, %v3096
        %v3098 = vpop.f32.mrb[0].mxu0
        %v3099 = vadd.f32 %v1888, %v3098
        %v3100 = vpop.f32.mrb[0].mxu0
        %v3101 = vadd.f32 %v1884, %v3100
        %v3102 = vpop.f32.mrb[0].mxu0
        %v3103 = vadd.f32 %v1888, %v3102
        %3104 = vmatprep.mubr.bf16.mxu0 %v1692
        %3105 = vmatmul.mubr.bf16.gmra.mrb[0].mxu0 %v1691
        %v3106 = vpop.f32.mrb[0].mxu0
        %v3107 = vadd.f32 %v1884, %v3106
        %v3108 = vpop.f32.mrb[0].mxu0
        %v3109 = vadd.f32 %v1888, %v3108
        %v3110 = vpop.f32.mrb[0].mxu0
        %v3111 = vadd.f32 %v1884, %v3110
        %v3112 = vpop.f32.mrb[0].mxu0
        %v3113 = vadd.f32 %v1888, %v3112
        %3114 = vmatprep.mubr.bf16.mxu0 %v1697
        %3115 = vmatmul.mubr.bf16.gmra.mrb[0].mxu0 %v1696
        %v3116 = vpop.f32.mrb[0].mxu0
        %v3117 = vadd.f32 %v1884, %v3116
        %v3118 = vpop.f32.mrb[0].mxu0
        %v3119 = vadd.f32 %v1888, %v3118
        %v3120 = vpop.f32.mrb[0].mxu0
        %v3121 = vadd.f32 %v1884, %v3120
        %v3122 = vpop.f32.mrb[0].mxu0
        %v3123 = vadd.f32 %v1888, %v3122
        %3124 = vmatprep.mubr.bf16.mxu0 %v1702
        %3125 = vmatmul.mubr.bf16.gmra.mrb[0].mxu0 %v1701
        %v3126 = vpop.f32.mrb[0].mxu0
        %v3127 = vadd.f32 %v1884, %v3126
        %v3128 = vpop.f32.mrb[0].mxu0
        %v3129 = vadd.f32 %v1888, %v3128
        %v3130 = vpop.f32.mrb[0].mxu0
        %v3131 = vadd.f32 %v1884, %v3130
        %v3132 = vpop.f32.mrb[0].mxu0
        %v3133 = vadd.f32 %v1888, %v3132
        %3134 = vmatprep.mubr.bf16.mxu0 %v1707
        %3135 = vmatmul.mubr.bf16.gmra.mrb[0].mxu0 %v1706
        %v3136 = vpop.f32.mrb[0].mxu0
        %v3137 = vadd.f32 %v1884, %v3136
        %v3138 = vpop.f32.mrb[0].mxu0
        %v3139 = vadd.f32 %v1888, %v3138
        %v3140 = vpop.f32.mrb[0].mxu0
        %v3141 = vadd.f32 %v1884, %v3140
        %v3142 = vpop.f32.mrb[0].mxu0
        %v3143 = vadd.f32 %v1888, %v3142
        %3144 = vdwg.mxu0
        %3145 = vmatprep.subr.bf16.mxu0 %v2440
        %3146 = vmatpush1.bf16.msra.mxu0 %v2439
        %3147 = vmatprep.subr.bf16.mxu0 %v2444
        %3148 = vmatpush1.bf16.msra.mxu0 %v2443
        %3149 = vmatprep.subr.bf16.mxu0 %v2448
        %3150 = vmatpush1.bf16.msra.mxu0 %v2447
        %3151 = vmatprep.subr.bf16.mxu0 %v2452
        %3152 = vmatpush1.bf16.msra.mxu0 %v2451
        %3153 = vmatprep.subr.bf16.mxu0 %v2456
        %3154 = vmatpush1.bf16.msra.mxu0 %v2455
        %3155 = vmatprep.subr.bf16.mxu0 %v2460
        %3156 = vmatpush1.bf16.msra.mxu0 %v2459
        %3157 = vmatprep.subr.bf16.mxu0 %v2464
        %3158 = vmatpush1.bf16.msra.mxu0 %v2463
        %3159 = vmatprep.subr.bf16.mxu0 %v2468
        %3160 = vmatpush1.bf16.msra.mxu0 %v2467
        %3161 = vmatprep.subr.bf16.mxu0 %v2472
        %3162 = vmatpush1.bf16.msra.mxu0 %v2471
        %3163 = vmatprep.subr.bf16.mxu0 %v2476
        %3164 = vmatpush1.bf16.msra.mxu0 %v2475
        %3165 = vmatprep.subr.bf16.mxu0 %v2480
        %3166 = vmatpush1.bf16.msra.mxu0 %v2479
        %3167 = vmatprep.subr.bf16.mxu0 %v2484
        %3168 = vmatpush1.bf16.msra.mxu0 %v2483
        %3169 = vmatprep.subr.bf16.mxu0 %v2488
        %3170 = vmatpush1.bf16.msra.mxu0 %v2487
        %3171 = vmatprep.subr.bf16.mxu0 %v2492
        %3172 = vmatpush1.bf16.msra.mxu0 %v2491
        %3173 = vmatprep.subr.bf16.mxu0 %v2496
        %3174 = vmatpush1.bf16.msra.mxu0 %v2495
        %3175 = vmatprep.subr.bf16.mxu0 %v2500
        %3176 = vmatpush1.bf16.msra.mxu0 %v2499
        %3177 = vmatprep.mubr.bf16.mxu0 %v1674
        %3178 = vmatmul.mubr.bf16.gmra.mrb[0].mxu0 %v1673
        %v3179 = vpop.f32.mrb[0].mxu0
        %v3180 = vadd.f32 %v3067, %v3179
        %v3181 = vpop.f32.mrb[0].mxu0
        %v3182 = vadd.f32 %v3069, %v3181
        %v3183 = vpop.f32.mrb[0].mxu0
        %v3184 = vadd.f32 %v3071, %v3183
        %v3185 = vpop.f32.mrb[0].mxu0
        %v3186 = vadd.f32 %v3073, %v3185
        %3187 = vmatprep.mubr.bf16.mxu0 %v1679
        %3188 = vmatmul.mubr.bf16.gmra.mrb[0].mxu0 %v1678
        %v3189 = vpop.f32.mrb[0].mxu0
        %v3190 = vadd.f32 %v3077, %v3189
        %v3191 = vpop.f32.mrb[0].mxu0
        %v3192 = vadd.f32 %v3079, %v3191
        %v3193 = vpop.f32.mrb[0].mxu0
        %v3194 = vadd.f32 %v3081, %v3193
        %v3195 = vpop.f32.mrb[0].mxu0
        %v3196 = vadd.f32 %v3083, %v3195
        %3197 = vmatprep.mubr.bf16.mxu0 %v1684
        %3198 = vmatmul.mubr.bf16.gmra.mrb[0].mxu0 %v1683
        %v3199 = vpop.f32.mrb[0].mxu0
        %v3200 = vadd.f32 %v3087, %v3199
        %v3201 = vpop.f32.mrb[0].mxu0
        %v3202 = vadd.f32 %v3089, %v3201
        %v3203 = vpop.f32.mrb[0].mxu0
        %v3204 = vadd.f32 %v3091, %v3203
        %v3205 = vpop.f32.mrb[0].mxu0
        %v3206 = vadd.f32 %v3093, %v3205
        %3207 = vmatprep.mubr.bf16.mxu0 %v1689
        %3208 = vmatmul.mubr.bf16.gmra.mrb[0].mxu0 %v1688
        %v3209 = vpop.f32.mrb[0].mxu0
        %v3210 = vadd.f32 %v3097, %v3209
        %v3211 = vpop.f32.mrb[0].mxu0
        %v3212 = vadd.f32 %v3099, %v3211
        %v3213 = vpop.f32.mrb[0].mxu0
        %v3214 = vadd.f32 %v3101, %v3213
        %v3215 = vpop.f32.mrb[0].mxu0
        %v3216 = vadd.f32 %v3103, %v3215
        %3217 = vmatprep.mubr.bf16.mxu0 %v1694
        %3218 = vmatmul.mubr.bf16.gmra.mrb[0].mxu0 %v1693
        %v3219 = vpop.f32.mrb[0].mxu0
        %v3220 = vadd.f32 %v3107, %v3219
        %v3221 = vpop.f32.mrb[0].mxu0
        %v3222 = vadd.f32 %v3109, %v3221
        %v3223 = vpop.f32.mrb[0].mxu0
        %v3224 = vadd.f32 %v3111, %v3223
        %v3225 = vpop.f32.mrb[0].mxu0
        %v3226 = vadd.f32 %v3113, %v3225
        %3227 = vmatprep.mubr.bf16.mxu0 %v1699
        %3228 = vmatmul.mubr.bf16.gmra.mrb[0].mxu0 %v1698
        %v3229 = vpop.f32.mrb[0].mxu0
        %v3230 = vadd.f32 %v3117, %v3229
        %v3231 = vpop.f32.mrb[0].mxu0
        %v3232 = vadd.f32 %v3119, %v3231
        %v3233 = vpop.f32.mrb[0].mxu0
        %v3234 = vadd.f32 %v3121, %v3233
        %v3235 = vpop.f32.mrb[0].mxu0
        %v3236 = vadd.f32 %v3123, %v3235
        %3237 = vmatprep.mubr.bf16.mxu0 %v1704
        %3238 = vmatmul.mubr.bf16.gmra.mrb[0].mxu0 %v1703
        %v3239 = vpop.f32.mrb[0].mxu0
        %v3240 = vadd.f32 %v3127, %v3239
        %v3241 = vpop.f32.mrb[0].mxu0
        %v3242 = vadd.f32 %v3129, %v3241
        %v3243 = vpop.f32.mrb[0].mxu0
        %v3244 = vadd.f32 %v3131, %v3243
        %v3245 = vpop.f32.mrb[0].mxu0
        %v3246 = vadd.f32 %v3133, %v3245
        %3247 = vmatprep.mubr.bf16.mxu0 %v1709
        %3248 = vmatmul.mubr.bf16.gmra.mrb[0].mxu0 %v1708
        %v3249 = vpop.f32.mrb[0].mxu0
        %v3250 = vadd.f32 %v3137, %v3249
        %v3251 = vpop.f32.mrb[0].mxu0
        %v3252 = vadd.f32 %v3139, %v3251
        %v3253 = vpop.f32.mrb[0].mxu0
        %v3254 = vadd.f32 %v3141, %v3253
        %v3255 = vpop.f32.mrb[0].mxu0
        %v3256 = vadd.f32 %v3143, %v3255
        %3257 = vdwg.mxu0
        %3258 = vmatprep.subr.bf16.mxu0 %v2504
        %3259 = vmatpush1.bf16.msra.mxu0 %v2503
        %3260 = vmatprep.subr.bf16.mxu0 %v2508
        %3261 = vmatpush1.bf16.msra.mxu0 %v2507
        %3262 = vmatprep.subr.bf16.mxu0 %v2512
        %3263 = vmatpush1.bf16.msra.mxu0 %v2511
        %3264 = vmatprep.subr.bf16.mxu0 %v2516
        %3265 = vmatpush1.bf16.msra.mxu0 %v2515
        %3266 = vmatprep.subr.bf16.mxu0 %v2520
        %3267 = vmatpush1.bf16.msra.mxu0 %v2519
        %3268 = vmatprep.subr.bf16.mxu0 %v2524
        %3269 = vmatpush1.bf16.msra.mxu0 %v2523
        %3270 = vmatprep.subr.bf16.mxu0 %v2528
        %3271 = vmatpush1.bf16.msra.mxu0 %v2527
        %3272 = vmatprep.subr.bf16.mxu0 %v2532
        %3273 = vmatpush1.bf16.msra.mxu0 %v2531
        %3274 = vmatprep.subr.bf16.mxu0 0
        %3275 = vmatpush1.bf16.msra.mxu0 0
        %3276 = vmatprep.subr.bf16.mxu0 0
        %3277 = vmatpush1.bf16.msra.mxu0 0
        %3278 = vmatprep.subr.bf16.mxu0 0
        %3279 = vmatpush1.bf16.msra.mxu0 0
        %3280 = vmatprep.subr.bf16.mxu0 0
        %3281 = vmatpush1.bf16.msra.mxu0 0
        %3282 = vmatprep.subr.bf16.mxu0 0
        %3283 = vmatpush1.bf16.msra.mxu0 0
        %3284 = vmatprep.subr.bf16.mxu0 0
        %3285 = vmatpush1.bf16.msra.mxu0 0
        %3286 = vmatprep.subr.bf16.mxu0 0
        %3287 = vmatpush1.bf16.msra.mxu0 0
        %3288 = vmatprep.subr.bf16.mxu0 0
        %3289 = vmatpush1.bf16.msra.mxu0 0
        %3290 = vmatprep.mubr.bf16.mxu0 0
        %3291 = vmatmul.mubr.bf16.gmra.mrb[0].mxu0 %v1675
        %v3292 = vpop.f32.mrb[0].mxu0
        %v3293 = vadd.f32 %v3180, %v3292
        %v3294 = vpop.f32.mrb[0].mxu0
        %v3295 = vadd.f32 %v3182, %v3294
        %v3296 = vpop.f32.mrb[0].mxu0
        %v3297 = vadd.f32 %v3184, %v3296
        %v3298 = vpop.f32.mrb[0].mxu0
        %v3299 = vadd.f32 %v3186, %v3298
        %3300 = vmatprep.mubr.bf16.mxu0 0
        %3301 = vmatmul.mubr.bf16.gmra.mrb[0].mxu0 %v1680
        %v3302 = vpop.f32.mrb[0].mxu0
        %v3303 = vadd.f32 %v3190, %v3302
        %v3304 = vpop.f32.mrb[0].mxu0
        %v3305 = vadd.f32 %v3192, %v3304
        %v3306 = vpop.f32.mrb[0].mxu0
        %v3307 = vadd.f32 %v3194, %v3306
        %v3308 = vpop.f32.mrb[0].mxu0
        %v3309 = vadd.f32 %v3196, %v3308
        %3310 = vmatprep.mubr.bf16.mxu0 0
        %3311 = vmatmul.mubr.bf16.gmra.mrb[0].mxu0 %v1685
        %v3312 = vpop.f32.mrb[0].mxu0
        %v3313 = vadd.f32 %v3200, %v3312
        %v3314 = vpop.f32.mrb[0].mxu0
        %v3315 = vadd.f32 %v3202, %v3314
        %v3316 = vpop.f32.mrb[0].mxu0
        %v3317 = vadd.f32 %v3204, %v3316
        %v3318 = vpop.f32.mrb[0].mxu0
        %v3319 = vadd.f32 %v3206, %v3318
        %3320 = vmatprep.mubr.bf16.mxu0 0
        %3321 = vmatmul.mubr.bf16.gmra.mrb[0].mxu0 %v1690
        %v3322 = vpop.f32.mrb[0].mxu0
        %v3323 = vadd.f32 %v3210, %v3322
        %v3324 = vpop.f32.mrb[0].mxu0
        %v3325 = vadd.f32 %v3212, %v3324
        %v3326 = vpop.f32.mrb[0].mxu0
        %v3327 = vadd.f32 %v3214, %v3326
        %v3328 = vpop.f32.mrb[0].mxu0
        %v3329 = vadd.f32 %v3216, %v3328
        %3330 = vmatprep.mubr.bf16.mxu0 0
        %3331 = vmatmul.mubr.bf16.gmra.mrb[0].mxu0 %v1695
        %v3332 = vpop.f32.mrb[0].mxu0
        %v3333 = vadd.f32 %v3220, %v3332
        %v3334 = vpop.f32.mrb[0].mxu0
        %v3335 = vadd.f32 %v3222, %v3334
        %v3336 = vpop.f32.mrb[0].mxu0
        %v3337 = vadd.f32 %v3224, %v3336
        %v3338 = vpop.f32.mrb[0].mxu0
        %v3339 = vadd.f32 %v3226, %v3338
        %3340 = vmatprep.mubr.bf16.mxu0 0
        %3341 = vmatmul.mubr.bf16.gmra.mrb[0].mxu0 %v1700
        %v3342 = vpop.f32.mrb[0].mxu0
        %v3343 = vadd.f32 %v3230, %v3342
        %v3344 = vpop.f32.mrb[0].mxu0
        %v3345 = vadd.f32 %v3232, %v3344
        %v3346 = vpop.f32.mrb[0].mxu0
        %v3347 = vadd.f32 %v3234, %v3346
        %v3348 = vpop.f32.mrb[0].mxu0
        %v3349 = vadd.f32 %v3236, %v3348
        %3350 = vmatprep.mubr.bf16.mxu0 0
        %3351 = vmatmul.mubr.bf16.gmra.mrb[0].mxu0 %v1705
        %v3352 = vpop.f32.mrb[0].mxu0
        %v3353 = vadd.f32 %v3240, %v3352
        %v3354 = vpop.f32.mrb[0].mxu0
        %v3355 = vadd.f32 %v3242, %v3354
        %v3356 = vpop.f32.mrb[0].mxu0
        %v3357 = vadd.f32 %v3244, %v3356
        %v3358 = vpop.f32.mrb[0].mxu0
        %v3359 = vadd.f32 %v3246, %v3358
        %3360 = vmatprep.mubr.bf16.mxu0 0
        %3361 = vmatmul.mubr.bf16.gmra.mrb[0].mxu0 %v1710
        %v3362 = vpop.f32.mrb[0].mxu0
        %v3363 = vadd.f32 %v3250, %v3362
        %v3364 = vpop.f32.mrb[0].mxu0
        %v3365 = vadd.f32 %v3252, %v3364
        %v3366 = vpop.f32.mrb[0].mxu0
        %v3367 = vadd.f32 %v3254, %v3366
        %v3368 = vpop.f32.mrb[0].mxu0
        %v3369 = vadd.f32 %v3256, %v3368
        %3370 = vdwg.mxu0
        %v3371 = vld [vmem:[%s444] sm:$0xff]
        %v3372 = vld [vmem:[%s444 + $0x8] sm:$0xff]
        %v3373 = vld [vmem:[%s444 + $0x10] sm:$0xff]
        %v3374 = vld [vmem:[%s444 + $0x18] sm:$0xff]
        %v3375 = vld [vmem:[%s444 + $0x20] sm:$0xff]
        %v3376 = vld [vmem:[%s444 + $0x28] sm:$0xff]
        %v3377 = vld [vmem:[%s444 + $0x30] sm:$0xff]
        %v3378 = vld [vmem:[%s444 + $0x38] sm:$0xff]
        %v3379 = vld [vmem:[%s444 + $0x40] sm:$0xff]
        %v3380 = vld [vmem:[%s444 + $0x48] sm:$0xff]
        %v3381 = vld [vmem:[%s444 + $0x50] sm:$0xff]
        %v3382 = vld [vmem:[%s444 + $0x58] sm:$0xff]
        %v3383 = vld [vmem:[%s444 + $0x60] sm:$0xff]
        %v3384 = vld [vmem:[%s444 + $0x68] sm:$0xff]
        %v3385 = vld [vmem:[%s444 + $0x70] sm:$0xff]
        %v3386 = vld [vmem:[%s444 + $0x78] sm:$0xff]
        %v3387 = vld [vmem:[%s444 + $0x80] sm:$0xff]
        %v3388 = vld [vmem:[%s444 + $0x88] sm:$0xff]
        %v3389 = vld [vmem:[%s444 + $0x90] sm:$0xff]
        %v3390 = vld [vmem:[%s444 + $0x98] sm:$0xff]
        %v3391 = vld [vmem:[%s444 + $0xa0] sm:$0xff]
        %v3392 = vld [vmem:[%s444 + $0xa8] sm:$0xff]
        %v3393 = vld [vmem:[%s444 + $0xb0] sm:$0xff]
        %v3394 = vld [vmem:[%s444 + $0xb8] sm:$0xff]
        %v3395 = vld [vmem:[%s444 + $0xc0] sm:$0xff]
        %v3396 = vld [vmem:[%s444 + $0xc8] sm:$0xff]
        %v3397 = vld [vmem:[%s444 + $0xd0] sm:$0xff]
        %v3398 = vld [vmem:[%s444 + $0xd8] sm:$0xff]
        %v3399 = vld [vmem:[%s444 + $0xe0] sm:$0xff]
        %v3400 = vld [vmem:[%s444 + $0xe8] sm:$0xff]
        %v3401 = vld [vmem:[%s444 + $0xf0] sm:$0xff]
        %v3402 = vld [vmem:[%s444 + $0xf8] sm:$0xff]
        %v3403 = vmul.f32 %v3293, 0.5
        %v3404 = vmul.f32 %v3295, 0.5
        %v3405 = vmul.f32 %v3297, 0.5
        %v3406 = vmul.f32 %v3299, 0.5
        %v3407 = vmul.f32 %v3303, 0.5
        %v3408 = vmul.f32 %v3305, 0.5
        %v3409 = vmul.f32 %v3307, 0.5
        %v3410 = vmul.f32 %v3309, 0.5
        %v3411 = vmul.f32 %v3313, 0.5
        %v3412 = vmul.f32 %v3315, 0.5
        %v3413 = vmul.f32 %v3317, 0.5
        %v3414 = vmul.f32 %v3319, 0.5
        %v3415 = vmul.f32 %v3323, 0.5
        %v3416 = vmul.f32 %v3325, 0.5
        %v3417 = vmul.f32 %v3327, 0.5
        %v3418 = vmul.f32 %v3329, 0.5
        %v3419 = vmul.f32 %v3333, 0.5
        %v3420 = vmul.f32 %v3335, 0.5
        %v3421 = vmul.f32 %v3337, 0.5
        %v3422 = vmul.f32 %v3339, 0.5
        %v3423 = vmul.f32 %v3343, 0.5
        %v3424 = vmul.f32 %v3345, 0.5
        %v3425 = vmul.f32 %v3347, 0.5
        %v3426 = vmul.f32 %v3349, 0.5
        %v3427 = vmul.f32 %v3353, 0.5
        %v3428 = vmul.f32 %v3355, 0.5
        %v3429 = vmul.f32 %v3357, 0.5
        %v3430 = vmul.f32 %v3359, 0.5
        %v3431 = vmul.f32 %v3363, 0.5
        %v3432 = vmul.f32 %v3365, 0.5
        %v3433 = vmul.f32 %v3367, 0.5
        %v3434 = vmul.f32 %v3369, 0.5
        %v3435 = vmul.f32 %v3403, 1.442695
        %v3436 = vpow.pop %v3435
        %v3437 = vmul.f32 %v3404, 1.442695
        %v3438 = vpow.pop %v3437
        %v3439 = vmul.f32 %v3405, 1.442695
        %v3440 = vpow.pop %v3439
        %v3441 = vmul.f32 %v3406, 1.442695
        %v3442 = vpow.pop %v3441
        %v3443 = vmul.f32 %v3407, 1.442695
        %v3444 = vpow.pop %v3443
        %v3445 = vmul.f32 %v3408, 1.442695
        %v3446 = vpow.pop %v3445
        %v3447 = vmul.f32 %v3409, 1.442695
        %v3448 = vpow.pop %v3447
        %v3449 = vmul.f32 %v3410, 1.442695
        %v3450 = vpow.pop %v3449
        %v3451 = vmul.f32 %v3411, 1.442695
        %v3452 = vpow.pop %v3451
        %v3453 = vmul.f32 %v3412, 1.442695
        %v3454 = vpow.pop %v3453
        %v3455 = vmul.f32 %v3413, 1.442695
        %v3456 = vpow.pop %v3455
        %v3457 = vmul.f32 %v3414, 1.442695
        %v3458 = vpow.pop %v3457
        %v3459 = vmul.f32 %v3415, 1.442695
        %v3460 = vpow.pop %v3459
        %v3461 = vmul.f32 %v3416, 1.442695
        %v3462 = vpow.pop %v3461
        %v3463 = vmul.f32 %v3417, 1.442695
        %v3464 = vpow.pop %v3463
        %v3465 = vmul.f32 %v3418, 1.442695
        %v3466 = vpow.pop %v3465
        %v3467 = vmul.f32 %v3419, 1.442695
        %v3468 = vpow.pop %v3467
        %v3469 = vmul.f32 %v3420, 1.442695
        %v3470 = vpow.pop %v3469
        %v3471 = vmul.f32 %v3421, 1.442695
        %v3472 = vpow.pop %v3471
        %v3473 = vmul.f32 %v3422, 1.442695
        %v3474 = vpow.pop %v3473
        %v3475 = vmul.f32 %v3423, 1.442695
        %v3476 = vpow.pop %v3475
        %v3477 = vmul.f32 %v3424, 1.442695
        %v3478 = vpow.pop %v3477
        %v3479 = vmul.f32 %v3425, 1.442695
        %v3480 = vpow.pop %v3479
        %v3481 = vmul.f32 %v3426, 1.442695
        %v3482 = vpow.pop %v3481
        %v3483 = vmul.f32 %v3427, 1.442695
        %v3484 = vpow.pop %v3483
        %v3485 = vmul.f32 %v3428, 1.442695
        %v3486 = vpow.pop %v3485
        %v3487 = vmul.f32 %v3429, 1.442695
        %v3488 = vpow.pop %v3487
        %v3489 = vmul.f32 %v3430, 1.442695
        %v3490 = vpow.pop %v3489
        %v3491 = vmul.f32 %v3431, 1.442695
        %v3492 = vpow.pop %v3491
        %v3493 = vmul.f32 %v3432, 1.442695
        %v3494 = vpow.pop %v3493
        %v3495 = vmul.f32 %v3433, 1.442695
        %v3496 = vpow.pop %v3495
        %v3497 = vmul.f32 %v3434, 1.442695
        %v3498 = vpow.pop %v3497
        %v3499 = vmul.f32 %v3371, %v3436
        %v3500 = vmul.f32 %v3372, %v3438
        %v3501 = vmul.f32 %v3373, %v3440
        %v3502 = vmul.f32 %v3374, %v3442
        %v3503 = vmul.f32 %v3375, %v3444
        %v3504 = vmul.f32 %v3376, %v3446
        %v3505 = vmul.f32 %v3377, %v3448
        %v3506 = vmul.f32 %v3378, %v3450
        %v3507 = vmul.f32 %v3379, %v3452
        %v3508 = vmul.f32 %v3380, %v3454
        %v3509 = vmul.f32 %v3381, %v3456
        %v3510 = vmul.f32 %v3382, %v3458
        %v3511 = vmul.f32 %v3383, %v3460
        %v3512 = vmul.f32 %v3384, %v3462
        %v3513 = vmul.f32 %v3385, %v3464
        %v3514 = vmul.f32 %v3386, %v3466
        %v3515 = vmul.f32 %v3387, %v3468
        %v3516 = vmul.f32 %v3388, %v3470
        %v3517 = vmul.f32 %v3389, %v3472
        %v3518 = vmul.f32 %v3390, %v3474
        %v3519 = vmul.f32 %v3391, %v3476
        %v3520 = vmul.f32 %v3392, %v3478
        %v3521 = vmul.f32 %v3393, %v3480
        %v3522 = vmul.f32 %v3394, %v3482
        %v3523 = vmul.f32 %v3395, %v3484
        %v3524 = vmul.f32 %v3396, %v3486
        %v3525 = vmul.f32 %v3397, %v3488
        %v3526 = vmul.f32 %v3398, %v3490
        %v3527 = vmul.f32 %v3399, %v3492
        %v3528 = vmul.f32 %v3400, %v3494
        %v3529 = vmul.f32 %v3401, %v3496
        %v3530 = vmul.f32 %v3402, %v3498
        %v3531 = vadd.f32 %v3499, %v2954
        %v3532 = vadd.f32 %v3500, %v2956
        %v3533 = vadd.f32 %v3501, %v2958
        %v3534 = vadd.f32 %v3502, %v2960
        %v3535 = vadd.f32 %v3503, %v2964
        %v3536 = vadd.f32 %v3504, %v2966
        %v3537 = vadd.f32 %v3505, %v2968
        %v3538 = vadd.f32 %v3506, %v2970
        %v3539 = vadd.f32 %v3507, %v2974
        %v3540 = vadd.f32 %v3508, %v2976
        %v3541 = vadd.f32 %v3509, %v2978
        %v3542 = vadd.f32 %v3510, %v2980
        %v3543 = vadd.f32 %v3511, %v2984
        %v3544 = vadd.f32 %v3512, %v2986
        %v3545 = vadd.f32 %v3513, %v2988
        %v3546 = vadd.f32 %v3514, %v2990
        %v3547 = vadd.f32 %v3515, %v2994
        %v3548 = vadd.f32 %v3516, %v2996
        %v3549 = vadd.f32 %v3517, %v2998
        %v3550 = vadd.f32 %v3518, %v3000
        %v3551 = vadd.f32 %v3519, %v3004
        %v3552 = vadd.f32 %v3520, %v3006
        %v3553 = vadd.f32 %v3521, %v3008
        %v3554 = vadd.f32 %v3522, %v3010
        %v3555 = vadd.f32 %v3523, %v3014
        %v3556 = vadd.f32 %v3524, %v3016
        %v3557 = vadd.f32 %v3525, %v3018
        %v3558 = vadd.f32 %v3526, %v3020
        %v3559 = vadd.f32 %v3527, %v3024
        %v3560 = vadd.f32 %v3528, %v3026
        %v3561 = vadd.f32 %v3529, %v3028
        %v3562 = vadd.f32 %v3530, %v3030
        %v3563 = vpack.c.bf16 %v3533, %v3531
        %v3564 = vpack.c.bf16 %v3534, %v3532
        %v3565 = vpack.c.bf16 %v3537, %v3535
        %v3566 = vpack.c.bf16 %v3538, %v3536
        %v3567 = vpack.c.bf16 %v3541, %v3539
        %v3568 = vpack.c.bf16 %v3542, %v3540
        %v3569 = vpack.c.bf16 %v3545, %v3543
        %v3570 = vpack.c.bf16 %v3546, %v3544
        %v3571 = vpack.c.bf16 %v3549, %v3547
        %v3572 = vpack.c.bf16 %v3550, %v3548
        %v3573 = vpack.c.bf16 %v3553, %v3551
        %v3574 = vpack.c.bf16 %v3554, %v3552
        %v3575 = vpack.c.bf16 %v3557, %v3555
        %v3576 = vpack.c.bf16 %v3558, %v3556
        %v3577 = vpack.c.bf16 %v3561, %v3559
        %v3578 = vpack.c.bf16 %v3562, %v3560
        %v3579 = vld [vmem:[#allocation10] sm:$0xff]
        %v3580 = vld [vmem:[#allocation10 + $0x8] sm:$0xff]
        %v3581 = vld [vmem:[#allocation10 + $0x10] sm:$0xf]
        %v3582 = vld [vmem:[#allocation10 + $0x14] sm:$0xff]
        %v3583 = vld [vmem:[#allocation10 + $0x1c] sm:$0xff]
        %v3584 = vld [vmem:[#allocation10 + $0x24] sm:$0xf]
        %v3585 = vld [vmem:[#allocation10 + $0x28] sm:$0xff]
        %v3586 = vld [vmem:[#allocation10 + $0x30] sm:$0xff]
        %v3587 = vld [vmem:[#allocation10 + $0x38] sm:$0xf]
        %v3588 = vld [vmem:[#allocation10 + $0x3c] sm:$0xff]
        %v3589 = vld [vmem:[#allocation10 + $0x44] sm:$0xff]
        %v3590 = vld [vmem:[#allocation10 + $0x4c] sm:$0xf]
        %v3591 = vld [vmem:[#allocation10 + $0x50] sm:$0xff]
        %v3592 = vld [vmem:[#allocation10 + $0x58] sm:$0xff]
        %v3593 = vld [vmem:[#allocation10 + $0x60] sm:$0xf]
        %v3594 = vld [vmem:[#allocation10 + $0x64] sm:$0xff]
        %v3595 = vld [vmem:[#allocation10 + $0x6c] sm:$0xff]
        %v3596 = vld [vmem:[#allocation10 + $0x74] sm:$0xf]
        %v3597 = vld [vmem:[#allocation10 + $0x78] sm:$0xff]
        %v3598 = vld [vmem:[#allocation10 + $0x80] sm:$0xff]
        %v3599 = vld [vmem:[#allocation10 + $0x88] sm:$0xf]
        %v3600 = vld [vmem:[#allocation10 + $0x8c] sm:$0xff]
        %v3601 = vld [vmem:[#allocation10 + $0x94] sm:$0xff]
        %v3602 = vld [vmem:[#allocation10 + $0x9c] sm:$0xf]
        %v3603 = vld [vmem:[#allocation10 + $0xa0] sm:$0xff]
        %v3604 = vld [vmem:[#allocation10 + $0xa8] sm:$0xff]
        %v3605 = vld [vmem:[#allocation10 + $0xb0] sm:$0xf]
        %v3606 = vld [vmem:[#allocation10 + $0xb4] sm:$0xff]
        %v3607 = vld [vmem:[#allocation10 + $0xbc] sm:$0xff]
        %v3608 = vld [vmem:[#allocation10 + $0xc4] sm:$0xf]
        %v3609 = vld [vmem:[#allocation10 + $0xc8] sm:$0xff]
        %v3610 = vld [vmem:[#allocation10 + $0xd0] sm:$0xff]
        %v3611 = vld [vmem:[#allocation10 + $0xd8] sm:$0xf]
        %v3612 = vld [vmem:[#allocation10 + $0xdc] sm:$0xff]
        %v3613 = vld [vmem:[#allocation10 + $0xe4] sm:$0xff]
        %v3614 = vld [vmem:[#allocation10 + $0xec] sm:$0xf]
        %v3615 = vld [vmem:[#allocation10 + $0xf0] sm:$0xff]
        %v3616 = vld [vmem:[#allocation10 + $0xf8] sm:$0xff]
        %v3617 = vld [vmem:[#allocation10 + $0x100] sm:$0xf]
        %v3618 = vld [vmem:[#allocation10 + $0x104] sm:$0xff]
        %v3619 = vld [vmem:[#allocation10 + $0x10c] sm:$0xff]
        %v3620 = vld [vmem:[#allocation10 + $0x114] sm:$0xf]
        %v3621 = vld [vmem:[#allocation10 + $0x118] sm:$0xff]
        %v3622 = vld [vmem:[#allocation10 + $0x120] sm:$0xff]
        %v3623 = vld [vmem:[#allocation10 + $0x128] sm:$0xf]
        %v3624 = vld [vmem:[#allocation10 + $0x12c] sm:$0xff]
        %v3625 = vld [vmem:[#allocation10 + $0x134] sm:$0xff]
        %v3626 = vld [vmem:[#allocation10 + $0x13c] sm:$0xf]
        %v3627 = vld [vmem:[#allocation10 + $0x140] sm:$0xff]
        %v3628 = vld [vmem:[#allocation10 + $0x148] sm:$0xff]
        %v3629 = vld [vmem:[#allocation10 + $0x150] sm:$0xf]
        %v3630 = vld [vmem:[#allocation10 + $0x154] sm:$0xff]
        %v3631 = vld [vmem:[#allocation10 + $0x15c] sm:$0xff]
        %v3632 = vld [vmem:[#allocation10 + $0x164] sm:$0xf]
        %v3633 = vld [vmem:[#allocation10 + $0x168] sm:$0xff]
        %v3634 = vld [vmem:[#allocation10 + $0x170] sm:$0xff]
        %v3635 = vld [vmem:[#allocation10 + $0x178] sm:$0xf]
        %v3636 = vld [vmem:[#allocation10 + $0x17c] sm:$0xff]
        %v3637 = vld [vmem:[#allocation10 + $0x184] sm:$0xff]
        %v3638 = vld [vmem:[#allocation10 + $0x18c] sm:$0xf]
        %v3639 = vld [vmem:[#allocation10 + $0x190] sm:$0xff]
        %v3640 = vld [vmem:[#allocation10 + $0x198] sm:$0xff]
        %v3641 = vld [vmem:[#allocation10 + $0x1a0] sm:$0xf]
        %v3642 = vld [vmem:[#allocation10 + $0x1a4] sm:$0xff]
        %v3643 = vld [vmem:[#allocation10 + $0x1ac] sm:$0xff]
        %v3644 = vld [vmem:[#allocation10 + $0x1b4] sm:$0xf]
        %v3645 = vld [vmem:[#allocation10 + $0x1b8] sm:$0xff]
        %v3646 = vld [vmem:[#allocation10 + $0x1c0] sm:$0xff]
        %v3647 = vld [vmem:[#allocation10 + $0x1c8] sm:$0xf]
        %v3648 = vld [vmem:[#allocation10 + $0x1cc] sm:$0xff]
        %v3649 = vld [vmem:[#allocation10 + $0x1d4] sm:$0xff]
        %v3650 = vld [vmem:[#allocation10 + $0x1dc] sm:$0xf]
        %v3651 = vld [vmem:[#allocation10 + $0x1e0] sm:$0xff]
        %v3652 = vld [vmem:[#allocation10 + $0x1e8] sm:$0xff]
        %v3653 = vld [vmem:[#allocation10 + $0x1f0] sm:$0xf]
        %v3654 = vld [vmem:[#allocation10 + $0x1f4] sm:$0xff]
        %v3655 = vld [vmem:[#allocation10 + $0x1fc] sm:$0xff]
        %v3656 = vld [vmem:[#allocation10 + $0x204] sm:$0xf]
        %v3657 = vld [vmem:[#allocation10 + $0x208] sm:$0xff]
        %v3658 = vld [vmem:[#allocation10 + $0x210] sm:$0xff]
        %v3659 = vld [vmem:[#allocation10 + $0x218] sm:$0xf]
        %v3660 = vld [vmem:[#allocation10 + $0x21c] sm:$0xff]
        %v3661 = vld [vmem:[#allocation10 + $0x224] sm:$0xff]
        %v3662 = vld [vmem:[#allocation10 + $0x22c] sm:$0xf]
        %v3663 = vld [vmem:[#allocation10 + $0x230] sm:$0xff]
        %v3664 = vld [vmem:[#allocation10 + $0x238] sm:$0xff]
        %v3665 = vld [vmem:[#allocation10 + $0x240] sm:$0xf]
        %v3666 = vld [vmem:[#allocation10 + $0x244] sm:$0xff]
        %v3667 = vld [vmem:[#allocation10 + $0x24c] sm:$0xff]
        %v3668 = vld [vmem:[#allocation10 + $0x254] sm:$0xf]
        %v3669 = vld [vmem:[#allocation10 + $0x258] sm:$0xff]
        %v3670 = vld [vmem:[#allocation10 + $0x260] sm:$0xff]
        %v3671 = vld [vmem:[#allocation10 + $0x268] sm:$0xf]
        %v3672 = vld [vmem:[#allocation10 + $0x26c] sm:$0xff]
        %v3673 = vld [vmem:[#allocation10 + $0x274] sm:$0xff]
        %v3674 = vld [vmem:[#allocation10 + $0x27c] sm:$0xf]
        %v3675 = vld [vmem:[%s7] sm:$0x1f]
        %v3677 = vlaneseq
        %v3678 = vshrl.u32 %v3677, 7
        %v3679 = vsub.s32 0, %v3678
        %v3680 = vrot.slane %v3675, %v3679
        %v3681 = vlaneseq
        %v3682 = vshrl.u32 %v3681, 7
        %v3683 = vsub.s32 1, %v3682
        %v3684 = vrot.slane %v3675, %v3683
        %v3685 = vlaneseq
        %v3686 = vshrl.u32 %v3685, 7
        %v3687 = vsub.s32 2, %v3686
        %v3688 = vrot.slane %v3675, %v3687
        %v3689 = vlaneseq
        %v3690 = vshrl.u32 %v3689, 7
        %v3691 = vsub.s32 3, %v3690
        %v3692 = vrot.slane %v3675, %v3691
        %v3693 = vlaneseq
        %v3694 = vshrl.u32 %v3693, 7
        %v3695 = vsub.s32 4, %v3694
        %v3696 = vrot.slane %v3675, %v3695
        %v3798 = vunpack.c.l.b16 %v3579
        %v3799 = vunpack.c.h.b16 %v3579
        %v3800 = vunpack.c.l.b16 %v3580
        %v3801 = vunpack.c.h.b16 %v3580
        %v3802 = vunpack.c.l.b16 %v3581
        %v3803 = vunpack.c.l.b16 %v3582
        %v3804 = vunpack.c.h.b16 %v3582
        %v3805 = vunpack.c.l.b16 %v3583
        %v3806 = vunpack.c.h.b16 %v3583
        %v3807 = vunpack.c.l.b16 %v3584
        %v3808 = vunpack.c.l.b16 %v3585
        %v3809 = vunpack.c.h.b16 %v3585
        %v3810 = vunpack.c.l.b16 %v3586
        %v3811 = vunpack.c.h.b16 %v3586
        %v3812 = vunpack.c.l.b16 %v3587
        %v3813 = vunpack.c.l.b16 %v3588
        %v3814 = vunpack.c.h.b16 %v3588
        %v3815 = vunpack.c.l.b16 %v3589
        %v3816 = vunpack.c.h.b16 %v3589
        %v3817 = vunpack.c.l.b16 %v3590
        %v3818 = vunpack.c.l.b16 %v3591
        %v3819 = vunpack.c.h.b16 %v3591
        %v3820 = vunpack.c.l.b16 %v3592
        %v3821 = vunpack.c.h.b16 %v3592
        %v3822 = vunpack.c.l.b16 %v3593
        %v3823 = vunpack.c.l.b16 %v3594
        %v3824 = vunpack.c.h.b16 %v3594
        %v3825 = vunpack.c.l.b16 %v3595
        %v3826 = vunpack.c.h.b16 %v3595
        %v3827 = vunpack.c.l.b16 %v3596
        %v3828 = vunpack.c.l.b16 %v3597
        %v3829 = vunpack.c.h.b16 %v3597
        %v3830 = vunpack.c.l.b16 %v3598
        %v3831 = vunpack.c.h.b16 %v3598
        %v3832 = vunpack.c.l.b16 %v3599
        %v3833 = vunpack.c.l.b16 %v3600
        %v3834 = vunpack.c.h.b16 %v3600
        %v3835 = vunpack.c.l.b16 %v3601
        %v3836 = vunpack.c.h.b16 %v3601
        %v3837 = vunpack.c.l.b16 %v3602
        %v3838 = vunpack.c.l.b16 %v3603
        %v3839 = vunpack.c.h.b16 %v3603
        %v3840 = vunpack.c.l.b16 %v3604
        %v3841 = vunpack.c.h.b16 %v3604
        %v3842 = vunpack.c.l.b16 %v3605
        %v3843 = vunpack.c.l.b16 %v3606
        %v3844 = vunpack.c.h.b16 %v3606
        %v3845 = vunpack.c.l.b16 %v3607
        %v3846 = vunpack.c.h.b16 %v3607
        %v3847 = vunpack.c.l.b16 %v3608
        %v3848 = vunpack.c.l.b16 %v3609
        %v3849 = vunpack.c.h.b16 %v3609
        %v3850 = vunpack.c.l.b16 %v3610
        %v3851 = vunpack.c.h.b16 %v3610
        %v3852 = vunpack.c.l.b16 %v3611
        %v3853 = vunpack.c.l.b16 %v3612
        %v3854 = vunpack.c.h.b16 %v3612
        %v3855 = vunpack.c.l.b16 %v3613
        %v3856 = vunpack.c.h.b16 %v3613
        %v3857 = vunpack.c.l.b16 %v3614
        %v3858 = vunpack.c.l.b16 %v3615
        %v3859 = vunpack.c.h.b16 %v3615
        %v3860 = vunpack.c.l.b16 %v3616
        %v3861 = vunpack.c.h.b16 %v3616
        %v3862 = vunpack.c.l.b16 %v3617
        %v3863 = vunpack.c.l.b16 %v3618
        %v3864 = vunpack.c.h.b16 %v3618
        %v3865 = vunpack.c.l.b16 %v3619
        %v3866 = vunpack.c.h.b16 %v3619
        %v3867 = vunpack.c.l.b16 %v3620
        %v3868 = vunpack.c.l.b16 %v3621
        %v3869 = vunpack.c.h.b16 %v3621
        %v3870 = vunpack.c.l.b16 %v3622
        %v3871 = vunpack.c.h.b16 %v3622
        %v3872 = vunpack.c.l.b16 %v3623
        %v3873 = vunpack.c.l.b16 %v3624
        %v3874 = vunpack.c.h.b16 %v3624
        %v3875 = vunpack.c.l.b16 %v3625
        %v3876 = vunpack.c.h.b16 %v3625
        %v3877 = vunpack.c.l.b16 %v3626
        %v3878 = vunpack.c.l.b16 %v3627
        %v3879 = vunpack.c.h.b16 %v3627
        %v3880 = vunpack.c.l.b16 %v3628
        %v3881 = vunpack.c.h.b16 %v3628
        %v3882 = vunpack.c.l.b16 %v3629
        %v3883 = vunpack.c.l.b16 %v3630
        %v3884 = vunpack.c.h.b16 %v3630
        %v3885 = vunpack.c.l.b16 %v3631
        %v3886 = vunpack.c.h.b16 %v3631
        %v3887 = vunpack.c.l.b16 %v3632
        %v3888 = vunpack.c.l.b16 %v3633
        %v3889 = vunpack.c.h.b16 %v3633
        %v3890 = vunpack.c.l.b16 %v3634
        %v3891 = vunpack.c.h.b16 %v3634
        %v3892 = vunpack.c.l.b16 %v3635
        %v3893 = vunpack.c.l.b16 %v3636
        %v3894 = vunpack.c.h.b16 %v3636
        %v3895 = vunpack.c.l.b16 %v3637
        %v3896 = vunpack.c.h.b16 %v3637
        %v3897 = vunpack.c.l.b16 %v3638
        %v3898 = vunpack.c.l.b16 %v3639
        %v3899 = vunpack.c.h.b16 %v3639
        %v3900 = vunpack.c.l.b16 %v3640
        %v3901 = vunpack.c.h.b16 %v3640
        %v3902 = vunpack.c.l.b16 %v3641
        %v3903 = vunpack.c.l.b16 %v3642
        %v3904 = vunpack.c.h.b16 %v3642
        %v3905 = vunpack.c.l.b16 %v3643
        %v3906 = vunpack.c.h.b16 %v3643
        %v3907 = vunpack.c.l.b16 %v3644
        %v3908 = vunpack.c.l.b16 %v3645
        %v3909 = vunpack.c.h.b16 %v3645
        %v3910 = vunpack.c.l.b16 %v3646
        %v3911 = vunpack.c.h.b16 %v3646
        %v3912 = vunpack.c.l.b16 %v3647
        %v3913 = vunpack.c.l.b16 %v3648
        %v3914 = vunpack.c.h.b16 %v3648
        %v3915 = vunpack.c.l.b16 %v3649
        %v3916 = vunpack.c.h.b16 %v3649
        %v3917 = vunpack.c.l.b16 %v3650
        %v3918 = vunpack.c.l.b16 %v3651
        %v3919 = vunpack.c.h.b16 %v3651
        %v3920 = vunpack.c.l.b16 %v3652
        %v3921 = vunpack.c.h.b16 %v3652
        %v3922 = vunpack.c.l.b16 %v3653
        %v3923 = vunpack.c.l.b16 %v3654
        %v3924 = vunpack.c.h.b16 %v3654
        %v3925 = vunpack.c.l.b16 %v3655
        %v3926 = vunpack.c.h.b16 %v3655
        %v3927 = vunpack.c.l.b16 %v3656
        %v3928 = vunpack.c.l.b16 %v3657
        %v3929 = vunpack.c.h.b16 %v3657
        %v3930 = vunpack.c.l.b16 %v3658
        %v3931 = vunpack.c.h.b16 %v3658
        %v3932 = vunpack.c.l.b16 %v3659
        %v3933 = vunpack.c.l.b16 %v3660
        %v3934 = vunpack.c.h.b16 %v3660
        %v3935 = vunpack.c.l.b16 %v3661
        %v3936 = vunpack.c.h.b16 %v3661
        %v3937 = vunpack.c.l.b16 %v3662
        %v3938 = vunpack.c.l.b16 %v3663
        %v3939 = vunpack.c.h.b16 %v3663
        %v3940 = vunpack.c.l.b16 %v3664
        %v3941 = vunpack.c.h.b16 %v3664
        %v3942 = vunpack.c.l.b16 %v3665
        %v3943 = vunpack.c.l.b16 %v3666
        %v3944 = vunpack.c.h.b16 %v3666
        %v3945 = vunpack.c.l.b16 %v3667
        %v3946 = vunpack.c.h.b16 %v3667
        %v3947 = vunpack.c.l.b16 %v3668
        %v3948 = vunpack.c.l.b16 %v3669
        %v3949 = vunpack.c.h.b16 %v3669
        %v3950 = vunpack.c.l.b16 %v3670
        %v3951 = vunpack.c.h.b16 %v3670
        %v3952 = vunpack.c.l.b16 %v3671
        %v3953 = vunpack.c.l.b16 %v3672
        %v3954 = vunpack.c.h.b16 %v3672
        %v3955 = vunpack.c.l.b16 %v3673
        %v3956 = vunpack.c.h.b16 %v3673
        %v3957 = vunpack.c.l.b16 %v3674
        %v3958 = vpack.c.b16 %v3803, %v3798
        %v3959 = vpack.c.b16 %v3804, %v3799
        %v3960 = vpack.c.b16 %v3805, %v3800
        %v3961 = vpack.c.b16 %v3806, %v3801
        %v3962 = vpack.c.b16 %v3807, %v3802
        %v3963 = vpack.c.b16 %v3813, %v3808
        %v3964 = vpack.c.b16 %v3814, %v3809
        %v3965 = vpack.c.b16 %v3815, %v3810
        %v3966 = vpack.c.b16 %v3816, %v3811
        %v3967 = vpack.c.b16 %v3817, %v3812
        %v3968 = vpack.c.b16 %v3823, %v3818
        %v3969 = vpack.c.b16 %v3824, %v3819
        %v3970 = vpack.c.b16 %v3825, %v3820
        %v3971 = vpack.c.b16 %v3826, %v3821
        %v3972 = vpack.c.b16 %v3827, %v3822
        %v3973 = vpack.c.b16 %v3833, %v3828
        %v3974 = vpack.c.b16 %v3834, %v3829
        %v3975 = vpack.c.b16 %v3835, %v3830
        %v3976 = vpack.c.b16 %v3836, %v3831
        %v3977 = vpack.c.b16 %v3837, %v3832
        %v3978 = vpack.c.b16 %v3843, %v3838
        %v3979 = vpack.c.b16 %v3844, %v3839
        %v3980 = vpack.c.b16 %v3845, %v3840
        %v3981 = vpack.c.b16 %v3846, %v3841
        %v3982 = vpack.c.b16 %v3847, %v3842
        %v3983 = vpack.c.b16 %v3853, %v3848
        %v3984 = vpack.c.b16 %v3854, %v3849
        %v3985 = vpack.c.b16 %v3855, %v3850
        %v3986 = vpack.c.b16 %v3856, %v3851
        %v3987 = vpack.c.b16 %v3857, %v3852
        %v3988 = vpack.c.b16 %v3863, %v3858
        %v3989 = vpack.c.b16 %v3864, %v3859
        %v3990 = vpack.c.b16 %v3865, %v3860
        %v3991 = vpack.c.b16 %v3866, %v3861
        %v3992 = vpack.c.b16 %v3867, %v3862
        %v3993 = vpack.c.b16 %v3873, %v3868
        %v3994 = vpack.c.b16 %v3874, %v3869
        %v3995 = vpack.c.b16 %v3875, %v3870
        %v3996 = vpack.c.b16 %v3876, %v3871
        %v3997 = vpack.c.b16 %v3877, %v3872
        %v3998 = vpack.c.b16 %v3883, %v3878
        %v3999 = vpack.c.b16 %v3884, %v3879
        %v4000 = vpack.c.b16 %v3885, %v3880
        %v4001 = vpack.c.b16 %v3886, %v3881
        %v4002 = vpack.c.b16 %v3887, %v3882
        %v4003 = vpack.c.b16 %v3893, %v3888
        %v4004 = vpack.c.b16 %v3894, %v3889
        %v4005 = vpack.c.b16 %v3895, %v3890
        %v4006 = vpack.c.b16 %v3896, %v3891
        %v4007 = vpack.c.b16 %v3897, %v3892
        %v4008 = vpack.c.b16 %v3903, %v3898
        %v4009 = vpack.c.b16 %v3904, %v3899
        %v4010 = vpack.c.b16 %v3905, %v3900
        %v4011 = vpack.c.b16 %v3906, %v3901
        %v4012 = vpack.c.b16 %v3907, %v3902
        %v4013 = vpack.c.b16 %v3913, %v3908
        %v4014 = vpack.c.b16 %v3914, %v3909
        %v4015 = vpack.c.b16 %v3915, %v3910
        %v4016 = vpack.c.b16 %v3916, %v3911
        %v4017 = vpack.c.b16 %v3917, %v3912
        %v4018 = vpack.c.b16 %v3923, %v3918
        %v4019 = vpack.c.b16 %v3924, %v3919
        %v4020 = vpack.c.b16 %v3925, %v3920
        %v4021 = vpack.c.b16 %v3926, %v3921
        %v4022 = vpack.c.b16 %v3927, %v3922
        %v4023 = vpack.c.b16 %v3933, %v3928
        %v4024 = vpack.c.b16 %v3934, %v3929
        %v4025 = vpack.c.b16 %v3935, %v3930
        %v4026 = vpack.c.b16 %v3936, %v3931
        %v4027 = vpack.c.b16 %v3937, %v3932
        %v4028 = vpack.c.b16 %v3943, %v3938
        %v4029 = vpack.c.b16 %v3944, %v3939
        %v4030 = vpack.c.b16 %v3945, %v3940
        %v4031 = vpack.c.b16 %v3946, %v3941
        %v4032 = vpack.c.b16 %v3947, %v3942
        %v4033 = vpack.c.b16 %v3953, %v3948
        %v4034 = vpack.c.b16 %v3954, %v3949
        %v4035 = vpack.c.b16 %v3955, %v3950
        %v4036 = vpack.c.b16 %v3956, %v3951
        %v4037 = vpack.c.b16 %v3957, %v3952
        %4118 = vmatprep.subr.bf16.mxu0 %v3959
        %4119 = vmatpush1.bf16.msra.mxu0 %v3958
        %4120 = vmatprep.subr.bf16.mxu0 %v3964
        %4121 = vmatpush1.bf16.msra.mxu0 %v3963
        %4122 = vmatprep.subr.bf16.mxu0 %v3969
        %4123 = vmatpush1.bf16.msra.mxu0 %v3968
        %4124 = vmatprep.subr.bf16.mxu0 %v3974
        %4125 = vmatpush1.bf16.msra.mxu0 %v3973
        %4126 = vmatprep.subr.bf16.mxu0 %v3979
        %4127 = vmatpush1.bf16.msra.mxu0 %v3978
        %4128 = vmatprep.subr.bf16.mxu0 %v3984
        %4129 = vmatpush1.bf16.msra.mxu0 %v3983
        %4130 = vmatprep.subr.bf16.mxu0 %v3989
        %4131 = vmatpush1.bf16.msra.mxu0 %v3988
        %4132 = vmatprep.subr.bf16.mxu0 %v3994
        %4133 = vmatpush1.bf16.msra.mxu0 %v3993
        %4134 = vmatprep.subr.bf16.mxu0 %v3999
        %4135 = vmatpush1.bf16.msra.mxu0 %v3998
        %4136 = vmatprep.subr.bf16.mxu0 %v4004
        %4137 = vmatpush1.bf16.msra.mxu0 %v4003
        %4138 = vmatprep.subr.bf16.mxu0 %v4009
        %4139 = vmatpush1.bf16.msra.mxu0 %v4008
        %4140 = vmatprep.subr.bf16.mxu0 %v4014
        %4141 = vmatpush1.bf16.msra.mxu0 %v4013
        %4142 = vmatprep.subr.bf16.mxu0 %v4019
        %4143 = vmatpush1.bf16.msra.mxu0 %v4018
        %4144 = vmatprep.subr.bf16.mxu0 %v4024
        %4145 = vmatpush1.bf16.msra.mxu0 %v4023
        %4146 = vmatprep.subr.bf16.mxu0 %v4029
        %4147 = vmatpush1.bf16.msra.mxu0 %v4028
        %4148 = vmatprep.subr.bf16.mxu0 %v4034
        %4149 = vmatpush1.bf16.msra.mxu0 %v4033
        %4150 = vmatprep.mubr.bf16.mxu0 %v3564
        %4151 = vmatmul.mubr.bf16.gmra.mrb[0].mxu0 %v3563
        %v4152 = vpop.f32.mrb[0].mxu0
        %v4153 = vadd.f32 %v3680, %v4152
        %v4154 = vpop.f32.mrb[0].mxu0
        %v4155 = vadd.f32 %v3684, %v4154
        %v4156 = vpop.f32.mrb[0].mxu0
        %v4157 = vadd.f32 %v3680, %v4156
        %v4158 = vpop.f32.mrb[0].mxu0
        %v4159 = vadd.f32 %v3684, %v4158
        %4160 = vmatprep.mubr.bf16.mxu0 %v3566
        %4161 = vmatmul.mubr.bf16.gmra.mrb[0].mxu0 %v3565
        %v4162 = vpop.f32.mrb[0].mxu0
        %v4163 = vadd.f32 %v3680, %v4162
        %v4164 = vpop.f32.mrb[0].mxu0
        %v4165 = vadd.f32 %v3684, %v4164
        %v4166 = vpop.f32.mrb[0].mxu0
        %v4167 = vadd.f32 %v3680, %v4166
        %v4168 = vpop.f32.mrb[0].mxu0
        %v4169 = vadd.f32 %v3684, %v4168
        %4170 = vmatprep.mubr.bf16.mxu0 %v3568
        %4171 = vmatmul.mubr.bf16.gmra.mrb[0].mxu0 %v3567
        %v4172 = vpop.f32.mrb[0].mxu0
        %v4173 = vadd.f32 %v3680, %v4172
        %v4174 = vpop.f32.mrb[0].mxu0
        %v4175 = vadd.f32 %v3684, %v4174
        %v4176 = vpop.f32.mrb[0].mxu0
        %v4177 = vadd.f32 %v3680, %v4176
        %v4178 = vpop.f32.mrb[0].mxu0
        %v4179 = vadd.f32 %v3684, %v4178
        %4180 = vmatprep.mubr.bf16.mxu0 %v3570
        %4181 = vmatmul.mubr.bf16.gmra.mrb[0].mxu0 %v3569
        %v4182 = vpop.f32.mrb[0].mxu0
        %v4183 = vadd.f32 %v3680, %v4182
        %v4184 = vpop.f32.mrb[0].mxu0
        %v4185 = vadd.f32 %v3684, %v4184
        %v4186 = vpop.f32.mrb[0].mxu0
        %v4187 = vadd.f32 %v3680, %v4186
        %v4188 = vpop.f32.mrb[0].mxu0
        %v4189 = vadd.f32 %v3684, %v4188
        %4190 = vmatprep.mubr.bf16.mxu0 %v3572
        %4191 = vmatmul.mubr.bf16.gmra.mrb[0].mxu0 %v3571
        %v4192 = vpop.f32.mrb[0].mxu0
        %v4193 = vadd.f32 %v3680, %v4192
        %v4194 = vpop.f32.mrb[0].mxu0
        %v4195 = vadd.f32 %v3684, %v4194
        %v4196 = vpop.f32.mrb[0].mxu0
        %v4197 = vadd.f32 %v3680, %v4196
        %v4198 = vpop.f32.mrb[0].mxu0
        %v4199 = vadd.f32 %v3684, %v4198
        %4200 = vmatprep.mubr.bf16.mxu0 %v3574
        %4201 = vmatmul.mubr.bf16.gmra.mrb[0].mxu0 %v3573
        %v4202 = vpop.f32.mrb[0].mxu0
        %v4203 = vadd.f32 %v3680, %v4202
        %v4204 = vpop.f32.mrb[0].mxu0
        %v4205 = vadd.f32 %v3684, %v4204
        %v4206 = vpop.f32.mrb[0].mxu0
        %v4207 = vadd.f32 %v3680, %v4206
        %v4208 = vpop.f32.mrb[0].mxu0
        %v4209 = vadd.f32 %v3684, %v4208
        %4210 = vmatprep.mubr.bf16.mxu0 %v3576
        %4211 = vmatmul.mubr.bf16.gmra.mrb[0].mxu0 %v3575
        %v4212 = vpop.f32.mrb[0].mxu0
        %v4213 = vadd.f32 %v3680, %v4212
        %v4214 = vpop.f32.mrb[0].mxu0
        %v4215 = vadd.f32 %v3684, %v4214
        %v4216 = vpop.f32.mrb[0].mxu0
        %v4217 = vadd.f32 %v3680, %v4216
        %v4218 = vpop.f32.mrb[0].mxu0
        %v4219 = vadd.f32 %v3684, %v4218
        %4220 = vmatprep.mubr.bf16.mxu0 %v3578
        %4221 = vmatmul.mubr.bf16.gmra.mrb[0].mxu0 %v3577
        %v4222 = vpop.f32.mrb[0].mxu0
        %v4223 = vadd.f32 %v3680, %v4222
        %v4224 = vpop.f32.mrb[0].mxu0
        %v4225 = vadd.f32 %v3684, %v4224
        %v4226 = vpop.f32.mrb[0].mxu0
        %v4227 = vadd.f32 %v3680, %v4226
        %v4228 = vpop.f32.mrb[0].mxu0
        %v4229 = vadd.f32 %v3684, %v4228
        %4230 = vdwg.mxu0
        %4231 = vmatprep.subr.bf16.mxu0 %v3961
        %4232 = vmatpush1.bf16.msra.mxu0 %v3960
        %4233 = vmatprep.subr.bf16.mxu0 %v3966
        %4234 = vmatpush1.bf16.msra.mxu0 %v3965
        %4235 = vmatprep.subr.bf16.mxu0 %v3971
        %4236 = vmatpush1.bf16.msra.mxu0 %v3970
        %4237 = vmatprep.subr.bf16.mxu0 %v3976
        %4238 = vmatpush1.bf16.msra.mxu0 %v3975
        %4239 = vmatprep.subr.bf16.mxu0 %v3981
        %4240 = vmatpush1.bf16.msra.mxu0 %v3980
        %4241 = vmatprep.subr.bf16.mxu0 %v3986
        %4242 = vmatpush1.bf16.msra.mxu0 %v3985
        %4243 = vmatprep.subr.bf16.mxu0 %v3991
        %4244 = vmatpush1.bf16.msra.mxu0 %v3990
        %4245 = vmatprep.subr.bf16.mxu0 %v3996
        %4246 = vmatpush1.bf16.msra.mxu0 %v3995
        %4247 = vmatprep.subr.bf16.mxu0 %v4001
        %4248 = vmatpush1.bf16.msra.mxu0 %v4000
        %4249 = vmatprep.subr.bf16.mxu0 %v4006
        %4250 = vmatpush1.bf16.msra.mxu0 %v4005
        %4251 = vmatprep.subr.bf16.mxu0 %v4011
        %4252 = vmatpush1.bf16.msra.mxu0 %v4010
        %4253 = vmatprep.subr.bf16.mxu0 %v4016
        %4254 = vmatpush1.bf16.msra.mxu0 %v4015
        %4255 = vmatprep.subr.bf16.mxu0 %v4021
        %4256 = vmatpush1.bf16.msra.mxu0 %v4020
        %4257 = vmatprep.subr.bf16.mxu0 %v4026
        %4258 = vmatpush1.bf16.msra.mxu0 %v4025
        %4259 = vmatprep.subr.bf16.mxu0 %v4031
        %4260 = vmatpush1.bf16.msra.mxu0 %v4030
        %4261 = vmatprep.subr.bf16.mxu0 %v4036
        %4262 = vmatpush1.bf16.msra.mxu0 %v4035
        %4263 = vmatprep.mubr.bf16.mxu0 %v3564
        %4264 = vmatmul.mubr.bf16.gmra.mrb[0].mxu0 %v3563
        %v4265 = vpop.f32.mrb[0].mxu0
        %v4266 = vadd.f32 %v3688, %v4265
        %v4267 = vpop.f32.mrb[0].mxu0
        %v4268 = vadd.f32 %v3692, %v4267
        %v4269 = vpop.f32.mrb[0].mxu0
        %v4270 = vadd.f32 %v3688, %v4269
        %v4271 = vpop.f32.mrb[0].mxu0
        %v4272 = vadd.f32 %v3692, %v4271
        %4273 = vmatprep.mubr.bf16.mxu0 %v3566
        %4274 = vmatmul.mubr.bf16.gmra.mrb[0].mxu0 %v3565
        %v4275 = vpop.f32.mrb[0].mxu0
        %v4276 = vadd.f32 %v3688, %v4275
        %v4277 = vpop.f32.mrb[0].mxu0
        %v4278 = vadd.f32 %v3692, %v4277
        %v4279 = vpop.f32.mrb[0].mxu0
        %v4280 = vadd.f32 %v3688, %v4279
        %v4281 = vpop.f32.mrb[0].mxu0
        %v4282 = vadd.f32 %v3692, %v4281
        %4283 = vmatprep.mubr.bf16.mxu0 %v3568
        %4284 = vmatmul.mubr.bf16.gmra.mrb[0].mxu0 %v3567
        %v4285 = vpop.f32.mrb[0].mxu0
        %v4286 = vadd.f32 %v3688, %v4285
        %v4287 = vpop.f32.mrb[0].mxu0
        %v4288 = vadd.f32 %v3692, %v4287
        %v4289 = vpop.f32.mrb[0].mxu0
        %v4290 = vadd.f32 %v3688, %v4289
        %v4291 = vpop.f32.mrb[0].mxu0
        %v4292 = vadd.f32 %v3692, %v4291
        %4293 = vmatprep.mubr.bf16.mxu0 %v3570
        %4294 = vmatmul.mubr.bf16.gmra.mrb[0].mxu0 %v3569
        %v4295 = vpop.f32.mrb[0].mxu0
        %v4296 = vadd.f32 %v3688, %v4295
        %v4297 = vpop.f32.mrb[0].mxu0
        %v4298 = vadd.f32 %v3692, %v4297
        %v4299 = vpop.f32.mrb[0].mxu0
        %v4300 = vadd.f32 %v3688, %v4299
        %v4301 = vpop.f32.mrb[0].mxu0
        %v4302 = vadd.f32 %v3692, %v4301
        %4303 = vmatprep.mubr.bf16.mxu0 %v3572
        %4304 = vmatmul.mubr.bf16.gmra.mrb[0].mxu0 %v3571
        %v4305 = vpop.f32.mrb[0].mxu0
        %v4306 = vadd.f32 %v3688, %v4305
        %v4307 = vpop.f32.mrb[0].mxu0
        %v4308 = vadd.f32 %v3692, %v4307
        %v4309 = vpop.f32.mrb[0].mxu0
        %v4310 = vadd.f32 %v3688, %v4309
        %v4311 = vpop.f32.mrb[0].mxu0
        %v4312 = vadd.f32 %v3692, %v4311
        %4313 = vmatprep.mubr.bf16.mxu0 %v3574
        %4314 = vmatmul.mubr.bf16.gmra.mrb[0].mxu0 %v3573
        %v4315 = vpop.f32.mrb[0].mxu0
        %v4316 = vadd.f32 %v3688, %v4315
        %v4317 = vpop.f32.mrb[0].mxu0
        %v4318 = vadd.f32 %v3692, %v4317
        %v4319 = vpop.f32.mrb[0].mxu0
        %v4320 = vadd.f32 %v3688, %v4319
        %v4321 = vpop.f32.mrb[0].mxu0
        %v4322 = vadd.f32 %v3692, %v4321
        %4323 = vmatprep.mubr.bf16.mxu0 %v3576
        %4324 = vmatmul.mubr.bf16.gmra.mrb[0].mxu0 %v3575
        %v4325 = vpop.f32.mrb[0].mxu0
        %v4326 = vadd.f32 %v3688, %v4325
        %v4327 = vpop.f32.mrb[0].mxu0
        %v4328 = vadd.f32 %v3692, %v4327
        %v4329 = vpop.f32.mrb[0].mxu0
        %v4330 = vadd.f32 %v3688, %v4329
        %v4331 = vpop.f32.mrb[0].mxu0
        %v4332 = vadd.f32 %v3692, %v4331
        %4333 = vmatprep.mubr.bf16.mxu0 %v3578
        %4334 = vmatmul.mubr.bf16.gmra.mrb[0].mxu0 %v3577
        %v4335 = vpop.f32.mrb[0].mxu0
        %v4336 = vadd.f32 %v3688, %v4335
        %v4337 = vpop.f32.mrb[0].mxu0
        %v4338 = vadd.f32 %v3692, %v4337
        %v4339 = vpop.f32.mrb[0].mxu0
        %v4340 = vadd.f32 %v3688, %v4339
        %v4341 = vpop.f32.mrb[0].mxu0
        %v4342 = vadd.f32 %v3692, %v4341
        %4343 = vdwg.mxu0
        %4344 = vmatprep.subr.bf16.mxu0 0
        %4345 = vmatpush1.bf16.msra.mxu0 %v3962
        %4346 = vmatprep.subr.bf16.mxu0 0
        %4347 = vmatpush1.bf16.msra.mxu0 %v3967
        %4348 = vmatprep.subr.bf16.mxu0 0
        %4349 = vmatpush1.bf16.msra.mxu0 %v3972
        %4350 = vmatprep.subr.bf16.mxu0 0
        %4351 = vmatpush1.bf16.msra.mxu0 %v3977
        %4352 = vmatprep.subr.bf16.mxu0 0
        %4353 = vmatpush1.bf16.msra.mxu0 %v3982
        %4354 = vmatprep.subr.bf16.mxu0 0
        %4355 = vmatpush1.bf16.msra.mxu0 %v3987
        %4356 = vmatprep.subr.bf16.mxu0 0
        %4357 = vmatpush1.bf16.msra.mxu0 %v3992
        %4358 = vmatprep.subr.bf16.mxu0 0
        %4359 = vmatpush1.bf16.msra.mxu0 %v3997
        %4360 = vmatprep.subr.bf16.mxu0 0
        %4361 = vmatpush1.bf16.msra.mxu0 %v4002
        %4362 = vmatprep.subr.bf16.mxu0 0
        %4363 = vmatpush1.bf16.msra.mxu0 %v4007
        %4364 = vmatprep.subr.bf16.mxu0 0
        %4365 = vmatpush1.bf16.msra.mxu0 %v4012
        %4366 = vmatprep.subr.bf16.mxu0 0
        %4367 = vmatpush1.bf16.msra.mxu0 %v4017
        %4368 = vmatprep.subr.bf16.mxu0 0
        %4369 = vmatpush1.bf16.msra.mxu0 %v4022
        %4370 = vmatprep.subr.bf16.mxu0 0
        %4371 = vmatpush1.bf16.msra.mxu0 %v4027
        %4372 = vmatprep.subr.bf16.mxu0 0
        %4373 = vmatpush1.bf16.msra.mxu0 %v4032
        %4374 = vmatprep.subr.bf16.mxu0 0
        %4375 = vmatpush1.bf16.msra.mxu0 %v4037
        %4376 = vmatprep.mubr.bf16.mxu0 %v3564
        %4377 = vmatmul.mubr.bf16.gmra.mrb[0].mxu0 %v3563
        %v4378 = vpop.f32.mrb[0].mxu0
        %v4379 = vadd.f32 %v3696, %v4378
        %v4380 = vpop.f32.mrb[0].mxu0
        %v4381 = vpop.f32.mrb[0].mxu0
        %v4382 = vadd.f32 %v3696, %v4381
        %v4383 = vpop.f32.mrb[0].mxu0
        %4384 = vmatprep.mubr.bf16.mxu0 %v3566
        %4385 = vmatmul.mubr.bf16.gmra.mrb[0].mxu0 %v3565
        %v4386 = vpop.f32.mrb[0].mxu0
        %v4387 = vadd.f32 %v3696, %v4386
        %v4388 = vpop.f32.mrb[0].mxu0
        %v4389 = vpop.f32.mrb[0].mxu0
        %v4390 = vadd.f32 %v3696, %v4389
        %v4391 = vpop.f32.mrb[0].mxu0
        %4392 = vmatprep.mubr.bf16.mxu0 %v3568
        %4393 = vmatmul.mubr.bf16.gmra.mrb[0].mxu0 %v3567
        %v4394 = vpop.f32.mrb[0].mxu0
        %v4395 = vadd.f32 %v3696, %v4394
        %v4396 = vpop.f32.mrb[0].mxu0
        %v4397 = vpop.f32.mrb[0].mxu0
        %v4398 = vadd.f32 %v3696, %v4397
        %v4399 = vpop.f32.mrb[0].mxu0
        %4400 = vmatprep.mubr.bf16.mxu0 %v3570
        %4401 = vmatmul.mubr.bf16.gmra.mrb[0].mxu0 %v3569
        %v4402 = vpop.f32.mrb[0].mxu0
        %v4403 = vadd.f32 %v3696, %v4402
        %v4404 = vpop.f32.mrb[0].mxu0
        %v4405 = vpop.f32.mrb[0].mxu0
        %v4406 = vadd.f32 %v3696, %v4405
        %v4407 = vpop.f32.mrb[0].mxu0
        %4408 = vmatprep.mubr.bf16.mxu0 %v3572
        %4409 = vmatmul.mubr.bf16.gmra.mrb[0].mxu0 %v3571
        %v4410 = vpop.f32.mrb[0].mxu0
        %v4411 = vadd.f32 %v3696, %v4410
        %v4412 = vpop.f32.mrb[0].mxu0
        %v4413 = vpop.f32.mrb[0].mxu0
        %v4414 = vadd.f32 %v3696, %v4413
        %v4415 = vpop.f32.mrb[0].mxu0
        %4416 = vmatprep.mubr.bf16.mxu0 %v3574
        %4417 = vmatmul.mubr.bf16.gmra.mrb[0].mxu0 %v3573
        %v4418 = vpop.f32.mrb[0].mxu0
        %v4419 = vadd.f32 %v3696, %v4418
        %v4420 = vpop.f32.mrb[0].mxu0
        %v4421 = vpop.f32.mrb[0].mxu0
        %v4422 = vadd.f32 %v3696, %v4421
        %v4423 = vpop.f32.mrb[0].mxu0
        %4424 = vmatprep.mubr.bf16.mxu0 %v3576
        %4425 = vmatmul.mubr.bf16.gmra.mrb[0].mxu0 %v3575
        %v4426 = vpop.f32.mrb[0].mxu0
        %v4427 = vadd.f32 %v3696, %v4426
        %v4428 = vpop.f32.mrb[0].mxu0
        %v4429 = vpop.f32.mrb[0].mxu0
        %v4430 = vadd.f32 %v3696, %v4429
        %v4431 = vpop.f32.mrb[0].mxu0
        %4432 = vmatprep.mubr.bf16.mxu0 %v3578
        %4433 = vmatmul.mubr.bf16.gmra.mrb[0].mxu0 %v3577
        %v4434 = vpop.f32.mrb[0].mxu0
        %v4435 = vadd.f32 %v3696, %v4434
        %v4436 = vpop.f32.mrb[0].mxu0
        %v4437 = vpop.f32.mrb[0].mxu0
        %v4438 = vadd.f32 %v3696, %v4437
        %v4439 = vpop.f32.mrb[0].mxu0
        %4440 = vdwg.mxu0
        %v4441 = vtanh.pop %v4153
        %v4442 = vtanh.pop %v4155
        %v4443 = vtanh.pop %v4266
        %v4444 = vtanh.pop %v4268
        %v4445 = vtanh.pop %v4379
        %v4446 = vtanh.pop %v4157
        %v4447 = vtanh.pop %v4159
        %v4448 = vtanh.pop %v4270
        %v4449 = vtanh.pop %v4272
        %v4450 = vtanh.pop %v4382
        %v4451 = vtanh.pop %v4163
        %v4452 = vtanh.pop %v4165
        %v4453 = vtanh.pop %v4276
        %v4454 = vtanh.pop %v4278
        %v4455 = vtanh.pop %v4387
        %v4456 = vtanh.pop %v4167
        %v4457 = vtanh.pop %v4169
        %v4458 = vtanh.pop %v4280
        %v4459 = vtanh.pop %v4282
        %v4460 = vtanh.pop %v4390
        %v4461 = vtanh.pop %v4173
        %v4462 = vtanh.pop %v4175
        %v4463 = vtanh.pop %v4286
        %v4464 = vtanh.pop %v4288
        %v4465 = vtanh.pop %v4395
        %v4466 = vtanh.pop %v4177
        %v4467 = vtanh.pop %v4179
        %v4468 = vtanh.pop %v4290
        %v4469 = vtanh.pop %v4292
        %v4470 = vtanh.pop %v4398
        %v4471 = vtanh.pop %v4183
        %v4472 = vtanh.pop %v4185
        %v4473 = vtanh.pop %v4296
        %v4474 = vtanh.pop %v4298
        %v4475 = vtanh.pop %v4403
        %v4476 = vtanh.pop %v4187
        %v4477 = vtanh.pop %v4189
        %v4478 = vtanh.pop %v4300
        %v4479 = vtanh.pop %v4302
        %v4480 = vtanh.pop %v4406
        %v4481 = vtanh.pop %v4193
        %v4482 = vtanh.pop %v4195
        %v4483 = vtanh.pop %v4306
        %v4484 = vtanh.pop %v4308
        %v4485 = vtanh.pop %v4411
        %v4486 = vtanh.pop %v4197
        %v4487 = vtanh.pop %v4199
        %v4488 = vtanh.pop %v4310
        %v4489 = vtanh.pop %v4312
        %v4490 = vtanh.pop %v4414
        %v4491 = vtanh.pop %v4203
        %v4492 = vtanh.pop %v4205
        %v4493 = vtanh.pop %v4316
        %v4494 = vtanh.pop %v4318
        %v4495 = vtanh.pop %v4419
        %v4496 = vtanh.pop %v4207
        %v4497 = vtanh.pop %v4209
        %v4498 = vtanh.pop %v4320
        %v4499 = vtanh.pop %v4322
        %v4500 = vtanh.pop %v4422
        %v4501 = vtanh.pop %v4213
        %v4502 = vtanh.pop %v4215
        %v4503 = vtanh.pop %v4326
        %v4504 = vtanh.pop %v4328
        %v4505 = vtanh.pop %v4427
        %v4506 = vtanh.pop %v4217
        %v4507 = vtanh.pop %v4219
        %v4508 = vtanh.pop %v4330
        %v4509 = vtanh.pop %v4332
        %v4510 = vtanh.pop %v4430
        %v4511 = vtanh.pop %v4223
        %v4512 = vtanh.pop %v4225
        %v4513 = vtanh.pop %v4336
        %v4514 = vtanh.pop %v4338
        %v4515 = vtanh.pop %v4435
        %v4516 = vtanh.pop %v4227
        %v4517 = vtanh.pop %v4229
        %v4518 = vtanh.pop %v4340
        %v4519 = vtanh.pop %v4342
        %v4520 = vtanh.pop %v4438
        %v4521 = vpack.c.bf16 %v4446, %v4441
        %v4522 = vpack.c.bf16 %v4447, %v4442
        %v4523 = vpack.c.bf16 %v4448, %v4443
        %v4524 = vpack.c.bf16 %v4449, %v4444
        %v4525 = vpack.c.bf16 %v4450, %v4445
        %v4526 = vpack.c.bf16 %v4456, %v4451
        %v4527 = vpack.c.bf16 %v4457, %v4452
        %v4528 = vpack.c.bf16 %v4458, %v4453
        %v4529 = vpack.c.bf16 %v4459, %v4454
        %v4530 = vpack.c.bf16 %v4460, %v4455
        %v4531 = vpack.c.bf16 %v4466, %v4461
        %v4532 = vpack.c.bf16 %v4467, %v4462
        %v4533 = vpack.c.bf16 %v4468, %v4463
        %v4534 = vpack.c.bf16 %v4469, %v4464
        %v4535 = vpack.c.bf16 %v4470, %v4465
        %v4536 = vpack.c.bf16 %v4476, %v4471
        %v4537 = vpack.c.bf16 %v4477, %v4472
        %v4538 = vpack.c.bf16 %v4478, %v4473
        %v4539 = vpack.c.bf16 %v4479, %v4474
        %v4540 = vpack.c.bf16 %v4480, %v4475
        %v4541 = vpack.c.bf16 %v4486, %v4481
        %v4542 = vpack.c.bf16 %v4487, %v4482
        %v4543 = vpack.c.bf16 %v4488, %v4483
        %v4544 = vpack.c.bf16 %v4489, %v4484
        %v4545 = vpack.c.bf16 %v4490, %v4485
        %v4546 = vpack.c.bf16 %v4496, %v4491
        %v4547 = vpack.c.bf16 %v4497, %v4492
        %v4548 = vpack.c.bf16 %v4498, %v4493
        %v4549 = vpack.c.bf16 %v4499, %v4494
        %v4550 = vpack.c.bf16 %v4500, %v4495
        %v4551 = vpack.c.bf16 %v4506, %v4501
        %v4552 = vpack.c.bf16 %v4507, %v4502
        %v4553 = vpack.c.bf16 %v4508, %v4503
        %v4554 = vpack.c.bf16 %v4509, %v4504
        %v4555 = vpack.c.bf16 %v4510, %v4505
        %v4556 = vpack.c.bf16 %v4516, %v4511
        %v4557 = vpack.c.bf16 %v4517, %v4512
        %v4558 = vpack.c.bf16 %v4518, %v4513
        %v4559 = vpack.c.bf16 %v4519, %v4514
        %v4560 = vpack.c.bf16 %v4520, %v4515
        %v4561 = vld [vmem:[%s465] sm:$0xff]
        %v4562 = vld [vmem:[%s465 + $0x8] sm:$0xff]
        %v4563 = vld [vmem:[%s465 + $0x10] sm:$0xf]
        %v4564 = vld [vmem:[%s465 + $0x14] sm:$0xff]
        %v4565 = vld [vmem:[%s465 + $0x1c] sm:$0xff]
        %v4566 = vld [vmem:[%s465 + $0x24] sm:$0xf]
        %v4567 = vld [vmem:[%s465 + $0x28] sm:$0xff]
        %v4568 = vld [vmem:[%s465 + $0x30] sm:$0xff]
        %v4569 = vld [vmem:[%s465 + $0x38] sm:$0xf]
        %v4570 = vld [vmem:[%s465 + $0x3c] sm:$0xff]
        %v4571 = vld [vmem:[%s465 + $0x44] sm:$0xff]
        %v4572 = vld [vmem:[%s465 + $0x4c] sm:$0xf]
        %v4573 = vld [vmem:[%s465 + $0x50] sm:$0xff]
        %v4574 = vld [vmem:[%s465 + $0x58] sm:$0xff]
        %v4575 = vld [vmem:[%s465 + $0x60] sm:$0xf]
        %v4576 = vld [vmem:[%s465 + $0x64] sm:$0xff]
        %v4577 = vld [vmem:[%s465 + $0x6c] sm:$0xff]
        %v4578 = vld [vmem:[%s465 + $0x74] sm:$0xf]
        %v4579 = vld [vmem:[%s465 + $0x78] sm:$0xff]
        %v4580 = vld [vmem:[%s465 + $0x80] sm:$0xff]
        %v4581 = vld [vmem:[%s465 + $0x88] sm:$0xf]
        %v4582 = vld [vmem:[%s465 + $0x8c] sm:$0xff]
        %v4583 = vld [vmem:[%s465 + $0x94] sm:$0xff]
        %v4584 = vld [vmem:[%s465 + $0x9c] sm:$0xf]
        %v4585 = vld [vmem:[%s465 + $0xa0] sm:$0xff]
        %v4586 = vld [vmem:[%s465 + $0xa8] sm:$0xff]
        %v4587 = vld [vmem:[%s465 + $0xb0] sm:$0xf]
        %v4588 = vld [vmem:[%s465 + $0xb4] sm:$0xff]
        %v4589 = vld [vmem:[%s465 + $0xbc] sm:$0xff]
        %v4590 = vld [vmem:[%s465 + $0xc4] sm:$0xf]
        %v4591 = vld [vmem:[%s465 + $0xc8] sm:$0xff]
        %v4592 = vld [vmem:[%s465 + $0xd0] sm:$0xff]
        %v4593 = vld [vmem:[%s465 + $0xd8] sm:$0xf]
        %v4594 = vld [vmem:[%s465 + $0xdc] sm:$0xff]
        %v4595 = vld [vmem:[%s465 + $0xe4] sm:$0xff]
        %v4596 = vld [vmem:[%s465 + $0xec] sm:$0xf]
        %v4597 = vld [vmem:[%s465 + $0xf0] sm:$0xff]
        %v4598 = vld [vmem:[%s465 + $0xf8] sm:$0xff]
        %v4599 = vld [vmem:[%s465 + $0x100] sm:$0xf]
        %v4600 = vld [vmem:[%s465 + $0x104] sm:$0xff]
        %v4601 = vld [vmem:[%s465 + $0x10c] sm:$0xff]
        %v4602 = vld [vmem:[%s465 + $0x114] sm:$0xf]
        %v4603 = vld [vmem:[%s465 + $0x118] sm:$0xff]
        %v4604 = vld [vmem:[%s465 + $0x120] sm:$0xff]
        %v4605 = vld [vmem:[%s465 + $0x128] sm:$0xf]
        %v4606 = vld [vmem:[%s465 + $0x12c] sm:$0xff]
        %v4607 = vld [vmem:[%s465 + $0x134] sm:$0xff]
        %v4608 = vld [vmem:[%s465 + $0x13c] sm:$0xf]
        %v4657 = vunpack.c.l.b16 %v4561
        %v4658 = vunpack.c.h.b16 %v4561
        %v4659 = vunpack.c.l.b16 %v4562
        %v4660 = vunpack.c.h.b16 %v4562
        %v4661 = vunpack.c.l.b16 %v4563
        %v4662 = vunpack.c.l.b16 %v4564
        %v4663 = vunpack.c.h.b16 %v4564
        %v4664 = vunpack.c.l.b16 %v4565
        %v4665 = vunpack.c.h.b16 %v4565
        %v4666 = vunpack.c.l.b16 %v4566
        %v4667 = vunpack.c.l.b16 %v4567
        %v4668 = vunpack.c.h.b16 %v4567
        %v4669 = vunpack.c.l.b16 %v4568
        %v4670 = vunpack.c.h.b16 %v4568
        %v4671 = vunpack.c.l.b16 %v4569
        %v4672 = vunpack.c.l.b16 %v4570
        %v4673 = vunpack.c.h.b16 %v4570
        %v4674 = vunpack.c.l.b16 %v4571
        %v4675 = vunpack.c.h.b16 %v4571
        %v4676 = vunpack.c.l.b16 %v4572
        %v4677 = vunpack.c.l.b16 %v4573
        %v4678 = vunpack.c.h.b16 %v4573
        %v4679 = vunpack.c.l.b16 %v4574
        %v4680 = vunpack.c.h.b16 %v4574
        %v4681 = vunpack.c.l.b16 %v4575
        %v4682 = vunpack.c.l.b16 %v4576
        %v4683 = vunpack.c.h.b16 %v4576
        %v4684 = vunpack.c.l.b16 %v4577
        %v4685 = vunpack.c.h.b16 %v4577
        %v4686 = vunpack.c.l.b16 %v4578
        %v4687 = vunpack.c.l.b16 %v4579
        %v4688 = vunpack.c.h.b16 %v4579
        %v4689 = vunpack.c.l.b16 %v4580
        %v4690 = vunpack.c.h.b16 %v4580
        %v4691 = vunpack.c.l.b16 %v4581
        %v4692 = vunpack.c.l.b16 %v4582
        %v4693 = vunpack.c.h.b16 %v4582
        %v4694 = vunpack.c.l.b16 %v4583
        %v4695 = vunpack.c.h.b16 %v4583
        %v4696 = vunpack.c.l.b16 %v4584
        %v4697 = vunpack.c.l.b16 %v4585
        %v4698 = vunpack.c.h.b16 %v4585
        %v4699 = vunpack.c.l.b16 %v4586
        %v4700 = vunpack.c.h.b16 %v4586
        %v4701 = vunpack.c.l.b16 %v4587
        %v4702 = vunpack.c.l.b16 %v4588
        %v4703 = vunpack.c.h.b16 %v4588
        %v4704 = vunpack.c.l.b16 %v4589
        %v4705 = vunpack.c.h.b16 %v4589
        %v4706 = vunpack.c.l.b16 %v4590
        %v4707 = vunpack.c.l.b16 %v4591
        %v4708 = vunpack.c.h.b16 %v4591
        %v4709 = vunpack.c.l.b16 %v4592
        %v4710 = vunpack.c.h.b16 %v4592
        %v4711 = vunpack.c.l.b16 %v4593
        %v4712 = vunpack.c.l.b16 %v4594
        %v4713 = vunpack.c.h.b16 %v4594
        %v4714 = vunpack.c.l.b16 %v4595
        %v4715 = vunpack.c.h.b16 %v4595
        %v4716 = vunpack.c.l.b16 %v4596
        %v4717 = vunpack.c.l.b16 %v4597
        %v4718 = vunpack.c.h.b16 %v4597
        %v4719 = vunpack.c.l.b16 %v4598
        %v4720 = vunpack.c.h.b16 %v4598
        %v4721 = vunpack.c.l.b16 %v4599
        %v4722 = vunpack.c.l.b16 %v4600
        %v4723 = vunpack.c.h.b16 %v4600
        %v4724 = vunpack.c.l.b16 %v4601
        %v4725 = vunpack.c.h.b16 %v4601
        %v4726 = vunpack.c.l.b16 %v4602
        %v4727 = vunpack.c.l.b16 %v4603
        %v4728 = vunpack.c.h.b16 %v4603
        %v4729 = vunpack.c.l.b16 %v4604
        %v4730 = vunpack.c.h.b16 %v4604
        %v4731 = vunpack.c.l.b16 %v4605
        %v4732 = vunpack.c.l.b16 %v4606
        %v4733 = vunpack.c.h.b16 %v4606
        %v4734 = vunpack.c.l.b16 %v4607
        %v4735 = vunpack.c.h.b16 %v4607
        %v4736 = vunpack.c.l.b16 %v4608
        %v4737 = vpack.c.b16 %v4662, %v4657
        %v4738 = vpack.c.b16 %v4663, %v4658
        %v4739 = vpack.c.b16 %v4664, %v4659
        %v4740 = vpack.c.b16 %v4665, %v4660
        %v4741 = vpack.c.b16 %v4666, %v4661
        %v4742 = vpack.c.b16 %v4672, %v4667
        %v4743 = vpack.c.b16 %v4673, %v4668
        %v4744 = vpack.c.b16 %v4674, %v4669
        %v4745 = vpack.c.b16 %v4675, %v4670
        %v4746 = vpack.c.b16 %v4676, %v4671
        %v4747 = vpack.c.b16 %v4682, %v4677
        %v4748 = vpack.c.b16 %v4683, %v4678
        %v4749 = vpack.c.b16 %v4684, %v4679
        %v4750 = vpack.c.b16 %v4685, %v4680
        %v4751 = vpack.c.b16 %v4686, %v4681
        %v4752 = vpack.c.b16 %v4692, %v4687
        %v4753 = vpack.c.b16 %v4693, %v4688
        %v4754 = vpack.c.b16 %v4694, %v4689
        %v4755 = vpack.c.b16 %v4695, %v4690
        %v4756 = vpack.c.b16 %v4696, %v4691
        %v4757 = vpack.c.b16 %v4702, %v4697
        %v4758 = vpack.c.b16 %v4703, %v4698
        %v4759 = vpack.c.b16 %v4704, %v4699
        %v4760 = vpack.c.b16 %v4705, %v4700
        %v4761 = vpack.c.b16 %v4706, %v4701
        %v4762 = vpack.c.b16 %v4712, %v4707
        %v4763 = vpack.c.b16 %v4713, %v4708
        %v4764 = vpack.c.b16 %v4714, %v4709
        %v4765 = vpack.c.b16 %v4715, %v4710
        %v4766 = vpack.c.b16 %v4716, %v4711
        %v4767 = vpack.c.b16 %v4722, %v4717
        %v4768 = vpack.c.b16 %v4723, %v4718
        %v4769 = vpack.c.b16 %v4724, %v4719
        %v4770 = vpack.c.b16 %v4725, %v4720
        %v4771 = vpack.c.b16 %v4726, %v4721
        %v4772 = vpack.c.b16 %v4732, %v4727
        %v4773 = vpack.c.b16 %v4733, %v4728
        %v4774 = vpack.c.b16 %v4734, %v4729
        %v4775 = vpack.c.b16 %v4735, %v4730
        %v4776 = vpack.c.b16 %v4736, %v4731
        %v4817 = vmul.bf16 %v4521, %v4737
        %v4818 = vmul.bf16 %v4522, %v4738
        %v4819 = vmul.bf16 %v4523, %v4739
        %v4820 = vmul.bf16 %v4524, %v4740
        %v4821 = vmul.bf16 %v4525, %v4741
        %v4822 = vmul.bf16 %v4526, %v4742
        %v4823 = vmul.bf16 %v4527, %v4743
        %v4824 = vmul.bf16 %v4528, %v4744
        %v4825 = vmul.bf16 %v4529, %v4745
        %v4826 = vmul.bf16 %v4530, %v4746
        %v4827 = vmul.bf16 %v4531, %v4747
        %v4828 = vmul.bf16 %v4532, %v4748
        %v4829 = vmul.bf16 %v4533, %v4749
        %v4830 = vmul.bf16 %v4534, %v4750
        %v4831 = vmul.bf16 %v4535, %v4751
        %v4832 = vmul.bf16 %v4536, %v4752
        %v4833 = vmul.bf16 %v4537, %v4753
        %v4834 = vmul.bf16 %v4538, %v4754
        %v4835 = vmul.bf16 %v4539, %v4755
        %v4836 = vmul.bf16 %v4540, %v4756
        %v4837 = vmul.bf16 %v4541, %v4757
        %v4838 = vmul.bf16 %v4542, %v4758
        %v4839 = vmul.bf16 %v4543, %v4759
        %v4840 = vmul.bf16 %v4544, %v4760
        %v4841 = vmul.bf16 %v4545, %v4761
        %v4842 = vmul.bf16 %v4546, %v4762
        %v4843 = vmul.bf16 %v4547, %v4763
        %v4844 = vmul.bf16 %v4548, %v4764
        %v4845 = vmul.bf16 %v4549, %v4765
        %v4846 = vmul.bf16 %v4550, %v4766
        %v4847 = vmul.bf16 %v4551, %v4767
        %v4848 = vmul.bf16 %v4552, %v4768
        %v4849 = vmul.bf16 %v4553, %v4769
        %v4850 = vmul.bf16 %v4554, %v4770
        %v4851 = vmul.bf16 %v4555, %v4771
        %v4852 = vmul.bf16 %v4556, %v4772
        %v4853 = vmul.bf16 %v4557, %v4773
        %v4854 = vmul.bf16 %v4558, %v4774
        %v4855 = vmul.bf16 %v4559, %v4775
        %v4856 = vmul.bf16 %v4560, %v4776
        %v4857 = vunpack.c.l.bf16 %v4817
        %v4858 = vunpack.c.l.bf16 %v4818
        %v4859 = vunpack.c.l.bf16 %v4819
        %v4860 = vunpack.c.l.bf16 %v4820
        %v4861 = vunpack.c.l.bf16 %v4821
        %v4862 = vunpack.c.h.bf16 %v4817
        %v4863 = vunpack.c.h.bf16 %v4818
        %v4864 = vunpack.c.h.bf16 %v4819
        %v4865 = vunpack.c.h.bf16 %v4820
        %v4866 = vunpack.c.h.bf16 %v4821
        %v4867 = vunpack.c.l.bf16 %v4822
        %v4868 = vunpack.c.l.bf16 %v4823
        %v4869 = vunpack.c.l.bf16 %v4824
        %v4870 = vunpack.c.l.bf16 %v4825
        %v4871 = vunpack.c.l.bf16 %v4826
        %v4872 = vunpack.c.h.bf16 %v4822
        %v4873 = vunpack.c.h.bf16 %v4823
        %v4874 = vunpack.c.h.bf16 %v4824
        %v4875 = vunpack.c.h.bf16 %v4825
        %v4876 = vunpack.c.h.bf16 %v4826
        %v4877 = vunpack.c.l.bf16 %v4827
        %v4878 = vunpack.c.l.bf16 %v4828
        %v4879 = vunpack.c.l.bf16 %v4829
        %v4880 = vunpack.c.l.bf16 %v4830
        %v4881 = vunpack.c.l.bf16 %v4831
        %v4882 = vunpack.c.h.bf16 %v4827
        %v4883 = vunpack.c.h.bf16 %v4828
        %v4884 = vunpack.c.h.bf16 %v4829
        %v4885 = vunpack.c.h.bf16 %v4830
        %v4886 = vunpack.c.h.bf16 %v4831
        %v4887 = vunpack.c.l.bf16 %v4832
        %v4888 = vunpack.c.l.bf16 %v4833
        %v4889 = vunpack.c.l.bf16 %v4834
        %v4890 = vunpack.c.l.bf16 %v4835
        %v4891 = vunpack.c.l.bf16 %v4836
        %v4892 = vunpack.c.h.bf16 %v4832
        %v4893 = vunpack.c.h.bf16 %v4833
        %v4894 = vunpack.c.h.bf16 %v4834
        %v4895 = vunpack.c.h.bf16 %v4835
        %v4896 = vunpack.c.h.bf16 %v4836
        %v4897 = vunpack.c.l.bf16 %v4837
        %v4898 = vunpack.c.l.bf16 %v4838
        %v4899 = vunpack.c.l.bf16 %v4839
        %v4900 = vunpack.c.l.bf16 %v4840
        %v4901 = vunpack.c.l.bf16 %v4841
        %v4902 = vunpack.c.h.bf16 %v4837
        %v4903 = vunpack.c.h.bf16 %v4838
        %v4904 = vunpack.c.h.bf16 %v4839
        %v4905 = vunpack.c.h.bf16 %v4840
        %v4906 = vunpack.c.h.bf16 %v4841
        %v4907 = vunpack.c.l.bf16 %v4842
        %v4908 = vunpack.c.l.bf16 %v4843
        %v4909 = vunpack.c.l.bf16 %v4844
        %v4910 = vunpack.c.l.bf16 %v4845
        %v4911 = vunpack.c.l.bf16 %v4846
        %v4912 = vunpack.c.h.bf16 %v4842
        %v4913 = vunpack.c.h.bf16 %v4843
        %v4914 = vunpack.c.h.bf16 %v4844
        %v4915 = vunpack.c.h.bf16 %v4845
        %v4916 = vunpack.c.h.bf16 %v4846
        %v4917 = vunpack.c.l.bf16 %v4847
        %v4918 = vunpack.c.l.bf16 %v4848
        %v4919 = vunpack.c.l.bf16 %v4849
        %v4920 = vunpack.c.l.bf16 %v4850
        %v4921 = vunpack.c.l.bf16 %v4851
        %v4922 = vunpack.c.h.bf16 %v4847
        %v4923 = vunpack.c.h.bf16 %v4848
        %v4924 = vunpack.c.h.bf16 %v4849
        %v4925 = vunpack.c.h.bf16 %v4850
        %v4926 = vunpack.c.h.bf16 %v4851
        %v4927 = vunpack.c.l.bf16 %v4852
        %v4928 = vunpack.c.l.bf16 %v4853
        %v4929 = vunpack.c.l.bf16 %v4854
        %v4930 = vunpack.c.l.bf16 %v4855
        %v4931 = vunpack.c.l.bf16 %v4856
        %v4932 = vunpack.c.h.bf16 %v4852
        %v4933 = vunpack.c.h.bf16 %v4853
        %v4934 = vunpack.c.h.bf16 %v4854
        %v4935 = vunpack.c.h.bf16 %v4855
        %v4936 = vunpack.c.h.bf16 %v4856
        %v4937 = vadd.f32 %v4857, %v4858
        %v4938 = vadd.f32 %v4937, %v4859
        %v4939 = vadd.f32 %v4938, %v4860
        %v4940 = vadd.f32 %v4939, %v4861
        %4941 = vadd.xlane.f32.xlu0 %v4940
        %v4942 = vpop.xlane.xlu0 %4941
        %v4943 = vadd.f32 %v4862, %v4863
        %v4944 = vadd.f32 %v4943, %v4864
        %v4945 = vadd.f32 %v4944, %v4865
        %v4946 = vadd.f32 %v4945, %v4866
        %4947 = vadd.xlane.f32.xlu0 %v4946
        %v4948 = vpop.xlane.xlu0 %4947
        %v4949 = vadd.f32 %v4867, %v4868
        %v4950 = vadd.f32 %v4949, %v4869
        %v4951 = vadd.f32 %v4950, %v4870
        %v4952 = vadd.f32 %v4951, %v4871
        %4953 = vadd.xlane.f32.xlu0 %v4952
        %v4954 = vpop.xlane.xlu0 %4953
        %v4955 = vadd.f32 %v4872, %v4873
        %v4956 = vadd.f32 %v4955, %v4874
        %v4957 = vadd.f32 %v4956, %v4875
        %v4958 = vadd.f32 %v4957, %v4876
        %4959 = vadd.xlane.f32.xlu0 %v4958
        %v4960 = vpop.xlane.xlu0 %4959
        %v4961 = vadd.f32 %v4877, %v4878
        %v4962 = vadd.f32 %v4961, %v4879
        %v4963 = vadd.f32 %v4962, %v4880
        %v4964 = vadd.f32 %v4963, %v4881
        %4965 = vadd.xlane.f32.xlu0 %v4964
        %v4966 = vpop.xlane.xlu0 %4965
        %v4967 = vadd.f32 %v4882, %v4883
        %v4968 = vadd.f32 %v4967, %v4884
        %v4969 = vadd.f32 %v4968, %v4885
        %v4970 = vadd.f32 %v4969, %v4886
        %4971 = vadd.xlane.f32.xlu0 %v4970
        %v4972 = vpop.xlane.xlu0 %4971
        %v4973 = vadd.f32 %v4887, %v4888
        %v4974 = vadd.f32 %v4973, %v4889
        %v4975 = vadd.f32 %v4974, %v4890
        %v4976 = vadd.f32 %v4975, %v4891
        %4977 = vadd.xlane.f32.xlu0 %v4976
        %v4978 = vpop.xlane.xlu0 %4977
        %v4979 = vadd.f32 %v4892, %v4893
        %v4980 = vadd.f32 %v4979, %v4894
        %v4981 = vadd.f32 %v4980, %v4895
        %v4982 = vadd.f32 %v4981, %v4896
        %4983 = vadd.xlane.f32.xlu0 %v4982
        %v4984 = vpop.xlane.xlu0 %4983
        %v4985 = vadd.f32 %v4897, %v4898
        %v4986 = vadd.f32 %v4985, %v4899
        %v4987 = vadd.f32 %v4986, %v4900
        %v4988 = vadd.f32 %v4987, %v4901
        %4989 = vadd.xlane.f32.xlu0 %v4988
        %v4990 = vpop.xlane.xlu0 %4989
        %v4991 = vadd.f32 %v4902, %v4903
        %v4992 = vadd.f32 %v4991, %v4904
        %v4993 = vadd.f32 %v4992, %v4905
        %v4994 = vadd.f32 %v4993, %v4906
        %4995 = vadd.xlane.f32.xlu0 %v4994
        %v4996 = vpop.xlane.xlu0 %4995
        %v4997 = vadd.f32 %v4907, %v4908
        %v4998 = vadd.f32 %v4997, %v4909
        %v4999 = vadd.f32 %v4998, %v4910
        %v5000 = vadd.f32 %v4999, %v4911
        %5001 = vadd.xlane.f32.xlu0 %v5000
        %v5002 = vpop.xlane.xlu0 %5001
        %v5003 = vadd.f32 %v4912, %v4913
        %v5004 = vadd.f32 %v5003, %v4914
        %v5005 = vadd.f32 %v5004, %v4915
        %v5006 = vadd.f32 %v5005, %v4916
        %5007 = vadd.xlane.f32.xlu0 %v5006
        %v5008 = vpop.xlane.xlu0 %5007
        %v5009 = vadd.f32 %v4917, %v4918
        %v5010 = vadd.f32 %v5009, %v4919
        %v5011 = vadd.f32 %v5010, %v4920
        %v5012 = vadd.f32 %v5011, %v4921
        %5013 = vadd.xlane.f32.xlu0 %v5012
        %v5014 = vpop.xlane.xlu0 %5013
        %v5015 = vadd.f32 %v4922, %v4923
        %v5016 = vadd.f32 %v5015, %v4924
        %v5017 = vadd.f32 %v5016, %v4925
        %v5018 = vadd.f32 %v5017, %v4926
        %5019 = vadd.xlane.f32.xlu0 %v5018
        %v5020 = vpop.xlane.xlu0 %5019
        %v5021 = vadd.f32 %v4927, %v4928
        %v5022 = vadd.f32 %v5021, %v4929
        %v5023 = vadd.f32 %v5022, %v4930
        %v5024 = vadd.f32 %v5023, %v4931
        %5025 = vadd.xlane.f32.xlu0 %v5024
        %v5026 = vpop.xlane.xlu0 %5025
        %v5027 = vadd.f32 %v4932, %v4933
        %v5028 = vadd.f32 %v5027, %v4934
        %v5029 = vadd.f32 %v5028, %v4935
        %v5030 = vadd.f32 %v5029, %v4936
        %5031 = vadd.xlane.f32.xlu0 %v5030
        %v5032 = vpop.xlane.xlu0 %5031
        %v5033 = vld [vmem:[%s519] sm:$0x1]
        %v5035 = vlaneseq
        %v5036 = vshrl.u32 %v5035, 7
        %v5037 = vsub.s32 0, %v5036
        %v5038 = vrot.slane %v5033, %v5037
        %5040 = vbcast.lane.b32.xlu0 %v5038, 256
        %v5041 = vpop.permute.xlu0 %5040
        %s5043 = sor.u32 256, 8
        %5044 = vbcast.lane.b32.xlu0 %v5038, %s5043
        %v5045 = vpop.permute.xlu0 %5044
        %s5047 = sor.u32 256, 16
        %5048 = vbcast.lane.b32.xlu0 %v5038, %s5047
        %v5049 = vpop.permute.xlu0 %5048
        %s5051 = sor.u32 256, 24
        %5052 = vbcast.lane.b32.xlu0 %v5038, %s5051
        %v5053 = vpop.permute.xlu0 %5052
        %s5055 = sor.u32 256, 32
        %5056 = vbcast.lane.b32.xlu0 %v5038, %s5055
        %v5057 = vpop.permute.xlu0 %5056
        %s5059 = sor.u32 256, 40
        %5060 = vbcast.lane.b32.xlu0 %v5038, %s5059
        %v5061 = vpop.permute.xlu0 %5060
        %s5063 = sor.u32 256, 48
        %5064 = vbcast.lane.b32.xlu0 %v5038, %s5063
        %v5065 = vpop.permute.xlu0 %5064
        %s5067 = sor.u32 256, 56
        %5068 = vbcast.lane.b32.xlu0 %v5038, %s5067
        %v5069 = vpop.permute.xlu0 %5068
        %s5071 = sor.u32 256, 64
        %5072 = vbcast.lane.b32.xlu0 %v5038, %s5071
        %v5073 = vpop.permute.xlu0 %5072
        %s5075 = sor.u32 256, 72
        %5076 = vbcast.lane.b32.xlu0 %v5038, %s5075
        %v5077 = vpop.permute.xlu0 %5076
        %s5079 = sor.u32 256, 80
        %5080 = vbcast.lane.b32.xlu0 %v5038, %s5079
        %v5081 = vpop.permute.xlu0 %5080
        %s5083 = sor.u32 256, 88
        %5084 = vbcast.lane.b32.xlu0 %v5038, %s5083
        %v5085 = vpop.permute.xlu0 %5084
        %s5087 = sor.u32 256, 96
        %5088 = vbcast.lane.b32.xlu0 %v5038, %s5087
        %v5089 = vpop.permute.xlu0 %5088
        %s5091 = sor.u32 256, 104
        %5092 = vbcast.lane.b32.xlu0 %v5038, %s5091
        %v5093 = vpop.permute.xlu0 %5092
        %s5095 = sor.u32 256, 112
        %5096 = vbcast.lane.b32.xlu0 %v5038, %s5095
        %v5097 = vpop.permute.xlu0 %5096
        %s5099 = sor.u32 256, 120
        %5100 = vbcast.lane.b32.xlu0 %v5038, %s5099
        %v5101 = vpop.permute.xlu0 %5100
        %v5118 = vadd.f32 %v4942, %v5041
        %v5119 = vadd.f32 %v4948, %v5045
        %v5120 = vadd.f32 %v4954, %v5049
        %v5121 = vadd.f32 %v4960, %v5053
        %v5122 = vadd.f32 %v4966, %v5057
        %v5123 = vadd.f32 %v4972, %v5061
        %v5124 = vadd.f32 %v4978, %v5065
        %v5125 = vadd.f32 %v4984, %v5069
        %v5126 = vadd.f32 %v4990, %v5073
        %v5127 = vadd.f32 %v4996, %v5077
        %v5128 = vadd.f32 %v5002, %v5081
        %v5129 = vadd.f32 %v5008, %v5085
        %v5130 = vadd.f32 %v5014, %v5089
        %v5131 = vadd.f32 %v5020, %v5093
        %v5132 = vadd.f32 %v5026, %v5097
        %v5133 = vadd.f32 %v5032, %v5101
        %v5134 = vsub.f32 0.0, %v5118
        %v5135 = vsub.f32 0.0, %v5119
        %v5136 = vsub.f32 0.0, %v5120
        %v5137 = vsub.f32 0.0, %v5121
        %v5138 = vsub.f32 0.0, %v5122
        %v5139 = vsub.f32 0.0, %v5123
        %v5140 = vsub.f32 0.0, %v5124
        %v5141 = vsub.f32 0.0, %v5125
        %v5142 = vsub.f32 0.0, %v5126
        %v5143 = vsub.f32 0.0, %v5127
        %v5144 = vsub.f32 0.0, %v5128
        %v5145 = vsub.f32 0.0, %v5129
        %v5146 = vsub.f32 0.0, %v5130
        %v5147 = vsub.f32 0.0, %v5131
        %v5148 = vsub.f32 0.0, %v5132
        %v5149 = vsub.f32 0.0, %v5133
        %v5150 = vmul.f32 %v5134, 1.442695
        %v5151 = vpow.pop %v5150
        %v5152 = vmul.f32 %v5135, 1.442695
        %v5153 = vpow.pop %v5152
        %v5154 = vmul.f32 %v5136, 1.442695
        %v5155 = vpow.pop %v5154
        %v5156 = vmul.f32 %v5137, 1.442695
        %v5157 = vpow.pop %v5156
        %v5158 = vmul.f32 %v5138, 1.442695
        %v5159 = vpow.pop %v5158
        %v5160 = vmul.f32 %v5139, 1.442695
        %v5161 = vpow.pop %v5160
        %v5162 = vmul.f32 %v5140, 1.442695
        %v5163 = vpow.pop %v5162
        %v5164 = vmul.f32 %v5141, 1.442695
        %v5165 = vpow.pop %v5164
        %v5166 = vmul.f32 %v5142, 1.442695
        %v5167 = vpow.pop %v5166
        %v5168 = vmul.f32 %v5143, 1.442695
        %v5169 = vpow.pop %v5168
        %v5170 = vmul.f32 %v5144, 1.442695
        %v5171 = vpow.pop %v5170
        %v5172 = vmul.f32 %v5145, 1.442695
        %v5173 = vpow.pop %v5172
        %v5174 = vmul.f32 %v5146, 1.442695
        %v5175 = vpow.pop %v5174
        %v5176 = vmul.f32 %v5147, 1.442695
        %v5177 = vpow.pop %v5176
        %v5178 = vmul.f32 %v5148, 1.442695
        %v5179 = vpow.pop %v5178
        %v5180 = vmul.f32 %v5149, 1.442695
        %v5181 = vpow.pop %v5180
        %v5182 = vadd.f32 %v5151, 1.0
        %v5183 = vadd.f32 %v5153, 1.0
        %v5184 = vadd.f32 %v5155, 1.0
        %v5185 = vadd.f32 %v5157, 1.0
        %v5186 = vadd.f32 %v5159, 1.0
        %v5187 = vadd.f32 %v5161, 1.0
        %v5188 = vadd.f32 %v5163, 1.0
        %v5189 = vadd.f32 %v5165, 1.0
        %v5190 = vadd.f32 %v5167, 1.0
        %v5191 = vadd.f32 %v5169, 1.0
        %v5192 = vadd.f32 %v5171, 1.0
        %v5193 = vadd.f32 %v5173, 1.0
        %v5194 = vadd.f32 %v5175, 1.0
        %v5195 = vadd.f32 %v5177, 1.0
        %v5196 = vadd.f32 %v5179, 1.0
        %v5197 = vadd.f32 %v5181, 1.0
        %v5198 = vrcp.pop %v5182
        %v5199 = vrcp.pop %v5183
        %v5200 = vrcp.pop %v5184
        %v5201 = vrcp.pop %v5185
        %v5202 = vrcp.pop %v5186
        %v5203 = vrcp.pop %v5187
        %v5204 = vrcp.pop %v5188
        %v5205 = vrcp.pop %v5189
        %v5206 = vrcp.pop %v5190
        %v5207 = vrcp.pop %v5191
        %v5208 = vrcp.pop %v5192
        %v5209 = vrcp.pop %v5193
        %v5210 = vrcp.pop %v5194
        %v5211 = vrcp.pop %v5195
        %v5212 = vrcp.pop %v5196
        %v5213 = vrcp.pop %v5197
        %5230 = vset.pattern.permute.xlu0 0
        %5231 = vperm.xlu0 %5230, %v5198
        %v5232 = vpop.permute.xlu0 %5231
        %5233 = vset.pattern.permute.xlu0 0
        %5234 = vperm.xlu0 %5233, %v5199
        %v5235 = vpop.permute.xlu0 %5234
        %5236 = vset.pattern.permute.xlu0 0
        %5237 = vperm.xlu0 %5236, %v5200
        %v5238 = vpop.permute.xlu0 %5237
        %5239 = vset.pattern.permute.xlu0 0
        %5240 = vperm.xlu0 %5239, %v5201
        %v5241 = vpop.permute.xlu0 %5240
        %5242 = vset.pattern.permute.xlu0 0
        %5243 = vperm.xlu0 %5242, %v5202
        %v5244 = vpop.permute.xlu0 %5243
        %5245 = vset.pattern.permute.xlu0 0
        %5246 = vperm.xlu0 %5245, %v5203
        %v5247 = vpop.permute.xlu0 %5246
        %5248 = vset.pattern.permute.xlu0 0
        %5249 = vperm.xlu0 %5248, %v5204
        %v5250 = vpop.permute.xlu0 %5249
        %5251 = vset.pattern.permute.xlu0 0
        %5252 = vperm.xlu0 %5251, %v5205
        %v5253 = vpop.permute.xlu0 %5252
        %5254 = vset.pattern.permute.xlu0 0
        %5255 = vperm.xlu0 %5254, %v5206
        %v5256 = vpop.permute.xlu0 %5255
        %5257 = vset.pattern.permute.xlu0 0
        %5258 = vperm.xlu0 %5257, %v5207
        %v5259 = vpop.permute.xlu0 %5258
        %5260 = vset.pattern.permute.xlu0 0
        %5261 = vperm.xlu0 %5260, %v5208
        %v5262 = vpop.permute.xlu0 %5261
        %5263 = vset.pattern.permute.xlu0 0
        %5264 = vperm.xlu0 %5263, %v5209
        %v5265 = vpop.permute.xlu0 %5264
        %5266 = vset.pattern.permute.xlu0 0
        %5267 = vperm.xlu0 %5266, %v5210
        %v5268 = vpop.permute.xlu0 %5267
        %5269 = vset.pattern.permute.xlu0 0
        %5270 = vperm.xlu0 %5269, %v5211
        %v5271 = vpop.permute.xlu0 %5270
        %5272 = vset.pattern.permute.xlu0 0
        %5273 = vperm.xlu0 %5272, %v5212
        %v5274 = vpop.permute.xlu0 %5273
        %5275 = vset.pattern.permute.xlu0 0
        %5276 = vperm.xlu0 %5275, %v5213
        %v5277 = vpop.permute.xlu0 %5276
        %v5278 = vlaneseq
        %v5279 = vand.u32 %v5278, 127
        %v5280 = vlaneseq
        %v5281 = vshrl.u32 %v5280, 7
        %v5282 = vsub.s32 %v5279, %v5281
        %v5283 = vrot.slane %v5232, %v5282
        %v5284 = vadd.s32 %v5279, 4294967288
        %v5285 = vlaneseq
        %v5286 = vshrl.u32 %v5285, 7
        %v5287 = vsub.s32 %v5284, %v5286
        %v5288 = vrot.slane %v5235, %v5287
        %vm5289 = vcmask 130112
        %v5290 = vsel %vm5289, %v5288, %v5283
        %v5291 = vadd.s32 %v5279, 4294967280
        %v5292 = vlaneseq
        %v5293 = vshrl.u32 %v5292, 7
        %v5294 = vsub.s32 %v5291, %v5293
        %v5295 = vrot.slane %v5238, %v5294
        %vm5296 = vcmask 195712
        %v5297 = vsel %vm5296, %v5295, %v5290
        %v5298 = vadd.s32 %v5279, 4294967272
        %v5299 = vlaneseq
        %v5300 = vshrl.u32 %v5299, 7
        %v5301 = vsub.s32 %v5298, %v5300
        %v5302 = vrot.slane %v5241, %v5301
        %vm5303 = vcmask 261312
        %v5304 = vsel %vm5303, %v5302, %v5297
        %v5305 = vadd.s32 %v5279, 4294967264
        %v5306 = vlaneseq
        %v5307 = vshrl.u32 %v5306, 7
        %v5308 = vsub.s32 %v5305, %v5307
        %v5309 = vrot.slane %v5244, %v5308
        %vm5310 = vcmask 326912
        %v5311 = vsel %vm5310, %v5309, %v5304
        %v5312 = vadd.s32 %v5279, 4294967256
        %v5313 = vlaneseq
        %v5314 = vshrl.u32 %v5313, 7
        %v5315 = vsub.s32 %v5312, %v5314
        %v5316 = vrot.slane %v5247, %v5315
        %vm5317 = vcmask 392512
        %v5318 = vsel %vm5317, %v5316, %v5311
        %v5319 = vadd.s32 %v5279, 4294967248
        %v5320 = vlaneseq
        %v5321 = vshrl.u32 %v5320, 7
        %v5322 = vsub.s32 %v5319, %v5321
        %v5323 = vrot.slane %v5250, %v5322
        %vm5324 = vcmask 458112
        %v5325 = vsel %vm5324, %v5323, %v5318
        %v5326 = vadd.s32 %v5279, 4294967240
        %v5327 = vlaneseq
        %v5328 = vshrl.u32 %v5327, 7
        %v5329 = vsub.s32 %v5326, %v5328
        %v5330 = vrot.slane %v5253, %v5329
        %vm5331 = vcmask 523712
        %v5332 = vsel %vm5331, %v5330, %v5325
        %v5333 = vadd.s32 %v5279, 4294967232
        %v5334 = vlaneseq
        %v5335 = vshrl.u32 %v5334, 7
        %v5336 = vsub.s32 %v5333, %v5335
        %v5337 = vrot.slane %v5256, %v5336
        %vm5338 = vcmask 589312
        %v5339 = vsel %vm5338, %v5337, %v5332
        %v5340 = vadd.s32 %v5279, 4294967224
        %v5341 = vlaneseq
        %v5342 = vshrl.u32 %v5341, 7
        %v5343 = vsub.s32 %v5340, %v5342
        %v5344 = vrot.slane %v5259, %v5343
        %vm5345 = vcmask 654912
        %v5346 = vsel %vm5345, %v5344, %v5339
        %v5347 = vadd.s32 %v5279, 4294967216
        %v5348 = vlaneseq
        %v5349 = vshrl.u32 %v5348, 7
        %v5350 = vsub.s32 %v5347, %v5349
        %v5351 = vrot.slane %v5262, %v5350
        %vm5352 = vcmask 720512
        %v5353 = vsel %vm5352, %v5351, %v5346
        %v5354 = vadd.s32 %v5279, 4294967208
        %v5355 = vlaneseq
        %v5356 = vshrl.u32 %v5355, 7
        %v5357 = vsub.s32 %v5354, %v5356
        %v5358 = vrot.slane %v5265, %v5357
        %vm5359 = vcmask 786112
        %v5360 = vsel %vm5359, %v5358, %v5353
        %v5361 = vadd.s32 %v5279, 4294967200
        %v5362 = vlaneseq
        %v5363 = vshrl.u32 %v5362, 7
        %v5364 = vsub.s32 %v5361, %v5363
        %v5365 = vrot.slane %v5268, %v5364
        %vm5366 = vcmask 851712
        %v5367 = vsel %vm5366, %v5365, %v5360
        %v5368 = vadd.s32 %v5279, 4294967192
        %v5369 = vlaneseq
        %v5370 = vshrl.u32 %v5369, 7
        %v5371 = vsub.s32 %v5368, %v5370
        %v5372 = vrot.slane %v5271, %v5371
        %vm5373 = vcmask 917312
        %v5374 = vsel %vm5373, %v5372, %v5367
        %v5375 = vadd.s32 %v5279, 4294967184
        %v5376 = vlaneseq
        %v5377 = vshrl.u32 %v5376, 7
        %v5378 = vsub.s32 %v5375, %v5377
        %v5379 = vrot.slane %v5274, %v5378
        %vm5380 = vcmask 982912
        %v5381 = vsel %vm5380, %v5379, %v5374
        %v5382 = vadd.s32 %v5279, 4294967176
        %v5383 = vlaneseq
        %v5384 = vshrl.u32 %v5383, 7
        %v5385 = vsub.s32 %v5382, %v5384
        %v5386 = vrot.slane %v5277, %v5385
        %vm5387 = vcmask 1048512
        %v5388 = vsel %vm5387, %v5386, %v5381
        %5390 = vst [vmem:[%s513] sm:$0x1] %v5388
        %s5391 = sand.u32 %s272, 1
        %s5392 = scalar_lea.sflag [#allocation4], %s5391
        %s5393 = sand.u32 %s272, 1
        %s5394 = scalar_lea.vmem [#allocation13], %s5393
        // Predicated region
        $region85: #{tpu_custom_call.1} parent=59 // pred_check
          %p5395 = pneg %p282
        $region86: #{tpu_custom_call.1} parent=59 // pred_check_branch
          %5397 = sbr.rel (%p5395) target = $region88
        $region87: #{tpu_custom_call.1} parent=59 // pred_region
          %s5399 = ssub.s32 16, 16
          %5400 = vsyncadd %s5392, %s5399
          %s5401 = smul.addr %s34, 16
          %s5402 = scalar_lea.hbm %s10, %s5401
          %s5404 = sshll.u32 %s5394, 4
          %s5405 = int_to_ptr.vmem [resolvable:$true] %s5404
          %5407 = dma.vmem_to_hbm [thread:$0]  %s5405, 16, %s5402, %s5392
        $region88: #{tpu_custom_call.1} parent=59 // pred_fallthru
          _
      $region60: #{tpu_custom_call.1} parent=5 // pred_fallthru
        _
      %p5408 = scmp.le.s32.totalorder 2, %s29
      // Predicated region
      $region89: #{tpu_custom_call.1} parent=5 // pred_check
        %p5409 = pneg %p5408
      $region90: #{tpu_custom_call.1} parent=5 // pred_check_branch
        %5411 = sbr.rel (%p5409) target = $region92
      $region91: #{tpu_custom_call.1} parent=5 // pred_region
        %s5412 = ssub.s32 %s29, 2
        // Predicated region
        $region93: #{tpu_custom_call.1} parent=91 // pred_check
          %p5413 = pneg %p288
        $region94: #{tpu_custom_call.1} parent=91 // pred_check_branch
          %5415 = sbr.rel (%p5413) target = $region96
        $region95: #{tpu_custom_call.1} parent=91 // pred_region
          %s5416 = sand.u32 %s273, 1
          %s5417 = scalar_lea.sflag [#allocation4], %s5416
          %s5418 = sand.u32 %s273, 1
          %s5419 = scalar_lea.vmem [#allocation13], %s5418
          %5420 = dma.done %s5417, 16
        $region96: #{tpu_custom_call.1} parent=91 // pred_fallthru
          _
      $region92: #{tpu_custom_call.1} parent=5 // pred_fallthru
        _
    $region6: #{tpu_custom_call.1} parent=1 // loop_footer
      %s33 = sadd.s32 1, %s29
    $region7: #{tpu_custom_call.1} parent=1 // loop_footer_branch
      %28 = sbr.rel target = $region3
    $region8: #{tpu_custom_call.1} parent=1 // loop_exit
      _
    %5421 = vsyncpa [#allocation3], 1
    %s5422 = scalar_lea.sflag [#allocation3], 1
    %5423 = vsyncpa %s5422, 1
    %5424 = vsyncpa [#allocation6], 1
    %s5425 = scalar_lea.sflag [#allocation6], 1
    %5426 = vsyncpa %s5425, 1
    %5427 = vsyncpa [#allocation9], 1
    %5428 = vsyncpa [#allocation12], 1
    %s5429 = scalar_lea.sflag [#allocation12], 1
    %5430 = vsyncpa %s5429, 1
    %5431 = vsyncpa [#allocation4], 1
    %s5432 = scalar_lea.sflag [#allocation4], 1
    %5433 = vsyncpa %s5432, 1

</llo_original>
